<compile_context>
chip_gen: v7x
topology: tpu7x:2x2x1
jax: 0.10.0
libtpu: 0.0.40
codegen_flags: <defaults>
</compile_context>

<pallas_src>
import functools

import jax
import jax.numpy as jnp
from jax.experimental import pallas as pl
from jax.experimental.pallas import tpu as pltpu

_CPAD = 8  # channel rows are padded to multiples of 8 (one sublane tile)


def _log2(n):
    assert n > 0 and (n & (n - 1)) == 0, n
    return n.bit_length() - 1


# ---------------------------------------------------------------------------
# In-kernel building blocks (all operate on (C, N) f32 values, N = nb*H*W
# flattened spatial on lanes, laid out (batch, h, w)).
# ---------------------------------------------------------------------------
def _lane_shift(x, k):
    """out[:, i] = x[:, (i + k) mod N]  (static k; wrapped lanes get masked)."""
    n = x.shape[-1]
    k %= n
    if k == 0:
        return x
    return jnp.concatenate([x[:, k:], x[:, :k]], axis=1)


def _rowcat(parts):
    """Concatenate equal-shaped (C, N) blocks along the channel (sublane) axis.

    Every block has C % 8 == 0, so this is a tile-aligned stack + reshape
    (leading dim folded into sublanes) -- no unaligned sublane concatenation.
    """
    c, n = parts[0].shape
    return jnp.stack(parts, axis=0).reshape(len(parts) * c, n)


def _conv3x3_lrelu(x, w2d, bias, H, W):
    """3x3 'same' conv (stride 1) + LeakyReLU(0.2), as a single im2col matmul.

    x    : (P, N) f32, P = padded channel rows, N = nb*H*W
    w2d  : (8, 9*P) f32, columns ordered (ky, kx, padded-channel)
    bias : (8, 1) f32
    ->   : (8, N) f32  (rows beyond the real Cout are exactly zero)
    """
    p, n = x.shape
    assert w2d.shape == (_CPAD, 9 * p), (w2d.shape, p)
    hw = H * W
    lane = jax.lax.broadcasted_iota(jnp.int32, (1, n), 1)
    yy = (lane & (hw - 1)) >> _log2(W)          # row within the sample
    xx = lane & (W - 1)                         # column within the sample

    taps = []
    for ky in range(3):
        for kx in range(3):
            dy, dx = ky - 1, kx - 1
            t = _lane_shift(x, dy * W + dx)
            ok = None
            if dy == -1:
                ok = yy >= 1
            elif dy == 1:
                ok = yy <= H - 2
            if dx == -1:
                ok = (xx >= 1) if ok is None else ok & (xx >= 1)
            elif dx == 1:
                ok = (xx <= W - 2) if ok is None else ok & (xx <= W - 2)
            if ok is not None:
                t = jnp.where(ok, t, 0.0)       # zero padding at the borders
            taps.append(t)
    patches = _rowcat(taps)                                         # (9*P, N)
    y = jnp.dot(w2d, patches, preferred_element_type=jnp.float32) + bias
    return jnp.where(y >= 0.0, y, 0.2 * y)                          # LeakyReLU(0.2)


def _maxpool2x2(x, H, W):
    """nn.MaxPool2d(2) on (C, N), N = nb*H*W  ->  (C, N//4)."""
    _, n = x.shape
    m = jnp.maximum(x, _lane_shift(x, 1))       # max over (w, w+1)
    m = jnp.maximum(m, _lane_shift(m, W))       # max over (h, h+1)
    hw, hw2, half_w = H * W, (H // 2) * (W // 2), W // 2
    nm = n // 4
    row = jax.lax.broadcasted_iota(jnp.int32, (n, nm), 0)
    col = jax.lax.broadcasted_iota(jnp.int32, (n, nm), 1)
    b = col >> _log2(hw2)
    rem = col & (hw2 - 1)
    pos = b * hw + ((rem >> _log2(half_w)) * W + (rem & (half_w - 1))) * 2
    sel = jnp.where(row == pos, 1.0, 0.0)       # (N, N//4) one-hot columns
    return jnp.dot(m, sel, preferred_element_type=jnp.float32)


def _upsample2x(x, H, W):
    """nn.Upsample(scale_factor=2, mode='nearest') on (C, N) -> (C, 4N)."""
    _, n = x.shape
    hw, hw4, dbl_w = H * W, 4 * H * W, 2 * W
    n4 = 4 * n
    row = jax.lax.broadcasted_iota(jnp.int32, (n, n4), 0)
    col = jax.lax.broadcasted_iota(jnp.int32, (n, n4), 1)
    b = col >> _log2(hw4)
    rem = col & (hw4 - 1)
    src = b * hw + ((rem >> _log2(dbl_w)) >> 1) * W + ((rem & (dbl_w - 1)) >> 1)
    rep = jnp.where(row == src, 1.0, 0.0)       # (N, 4N) one-hot columns
    return jnp.dot(x, rep, preferred_element_type=jnp.float32)


# ---------------------------------------------------------------------------
# The fused kernel: whole Unet_joint_level0 forward for one batch element.
# ---------------------------------------------------------------------------
def _unet_kernel(src_ref, tgt_ref,
                 we0, be0, wc0, bc0, we1, be1, wc1, bc1,
                 wd0, bd0, wd1, bd1, wr0, br0,
                 out_ref, scg_ref, tcg_ref, *, H, W):
    n0 = H * W

    # ----- encoder level 0 (H x W); src & tgt share weights -> stack on lanes
    st = jnp.concatenate([src_ref[...], tgt_ref[...]], axis=1)        # (8, 2*n0)
    st = _conv3x3_lrelu(st, we0[...], be0[...], H, W)                 # 4 real rows
    src, tgt = st[:, :n0], st[:, n0:]
    scg_ref[...] = src[:4]
    tcg_ref[...] = tgt[:4]
    # TODO(synk): netG_A2B_level0 (networks_cyclegan.Generator_mini, loaded from an
    # external .pth checkpoint in the reference code) is applied to `source` as the
    # identity here because its architecture/weights are not part of this module.
    x1 = _conv3x3_lrelu(_rowcat([src, tgt]), wc0[...], bc0[...], H, W)  # skip @ HxW
    st = _maxpool2x2(st, H, W)                                        # (8, 2*n0//4)

    # ----- encoder level 1 (H/2 x W/2)
    h1, w1 = H // 2, W // 2
    n1 = h1 * w1
    st = _conv3x3_lrelu(st, we1[...], be1[...], h1, w1)               # (8, 2*n1)
    x2 = _conv3x3_lrelu(_rowcat([st[:, :n1], st[:, n1:]]),
                        wc1[...], bc1[...], h1, w1)                   # skip @ H/2
    # (PyTorch also pools source/target after the last encoder level; those
    #  results are never consumed, so the work is skipped here.)

    # ----- bottleneck pool + decoder
    x = _maxpool2x2(x2, h1, w1)                                       # (8, n1//4)
    h2, w2 = h1 // 2, w1 // 2

    x = _conv3x3_lrelu(x, wd0[...], bd0[...], h2, w2)                 # decoder level 0
    x = _upsample2x(x, h2, w2)
    x = _rowcat([x, x2])                                              # (16, n1)

    x = _conv3x3_lrelu(x, wd1[...], bd1[...], h1, w1)                 # decoder level 1
    x = _upsample2x(x, h1, w1)
    x = _rowcat([x, x1])                                              # (16, n0)

    x = _conv3x3_lrelu(x, wr0[...], br0[...], H, W)                   # remaining conv
    out_ref[...] = x[:4]


# ---------------------------------------------------------------------------
# Parameters (PyTorch layout) and the weight repacking for the kernel layout.
# ---------------------------------------------------------------------------
_LAYERS = (
    # name,  cin, cout, 8-row block structure of that conv's input activation
    ("enc0",  1, 4, (1,)),     # encoder level-0 conv   (source / target)
    ("cat0",  8, 4, (4, 4)),   # level-0 concat conv    cat(src, tgt)
    ("enc1",  4, 8, (4,)),     # encoder level-1 conv
    ("cat1", 16, 8, (8, 8)),   # level-1 concat conv
    ("dec0",  8, 8, (8,)),     # decoder level-0 conv
    ("dec1", 16, 4, (8, 8)),   # decoder level-1 conv   cat(x, skip@H/2)
    ("rem0",  8, 4, (4, 4)),   # remaining conv         cat(x, skip@H)
)


def init_params(key):
    """Deterministic synthetic weights in PyTorch layout: OIHW (Cout,Cin,3,3), bias."""
    params = {}
    for name, cin, cout, _ in _LAYERS:
        key, kw, kb = jax.random.split(key, 3)
        params[name] = (
            jax.random.normal(kw, (cout, cin, 3, 3), jnp.float32) * 0.1,
            jax.random.normal(kb, (cout,), jnp.float32) * 0.01,
        )
    return params


def _prep_conv_weight(w, b, in_blocks):
    """Repack a PyTorch Conv2d weight for the kernel's padded-channel layout.

    w: (Cout, Cin, 3, 3) OIHW; b: (Cout,); in_blocks: real channel count of each
    8-row block of the conv input (sums to Cin).  Returns
    (w2d (8, 9*8*len(in_blocks)) with columns ordered (ky, kx, block, chan),
     bias (8, 1)); all padding rows/columns are zero.
    """
    cout, cin = w.shape[0], w.shape[1]
    assert sum(in_blocks) == cin and cout <= _CPAD
    blocks, off = [], 0
    for real in in_blocks:
        blk = w[:, off:off + real]                                   # (Cout, real, 3, 3)
        blocks.append(jnp.pad(blk, ((0, 0), (0, _CPAD - real), (0, 0), (0, 0))))
        off += real
    wb = jnp.concatenate(blocks, axis=1)                             # (Cout, 8*nb, 3, 3)
    wb = jnp.transpose(wb, (0, 2, 3, 1)).reshape(cout, 9 * _CPAD * len(in_blocks))
    w2d = jnp.pad(wb, ((0, _CPAD - cout), (0, 0)))
    b2d = jnp.pad(b, (0, _CPAD - cout)).reshape(_CPAD, 1)
    return w2d, b2d


# ---------------------------------------------------------------------------
# Forward pass wrapper (mirrors Unet_joint_level0.forward, NCHW like PyTorch).
# ---------------------------------------------------------------------------
@jax.jit
def unet_joint_level0_forward(params, source, target):
    """source, target: NCHW (B, 1, H, W) float32.

    Returns (x, source_for_cyclegan, target_for_cyclegan), all NCHW (B, 4, H, W).
    """
    B, cin, H, W = source.shape
    assert cin == 1 and source.shape == target.shape
    assert H & (H - 1) == 0 and W & (W - 1) == 0 and H >= 4 and W >= 4
    hw = H * W

    # (B, 1, HW) -> channel-padded (B, 8, HW) slabs for the kernel.
    src = jnp.pad(source.reshape(B, 1, hw), ((0, 0), (0, _CPAD - 1), (0, 0)))
    tgt = jnp.pad(target.reshape(B, 1, hw), ((0, 0), (0, _CPAD - 1), (0, 0)))

    flat = []
    for name, _, _, blocks in _LAYERS:
        w, b = params[name]
        flat.extend(_prep_conv_weight(w, b, blocks))

    io_spec = pl.BlockSpec((None, _CPAD, hw), lambda b: (b, 0, 0))
    out_spec = pl.BlockSpec((None, 4, hw), lambda b: (b, 0, 0))
    param_specs = [pl.BlockSpec(p.shape, lambda b: (0, 0)) for p in flat]

    out, scg, tcg = pl.pallas_call(
        functools.partial(_unet_kernel, H=H, W=W),
        grid=(B,),  # one batch element per program -> both TensorCores on v7x
        in_specs=[io_spec, io_spec] + param_specs,
        out_specs=(out_spec, out_spec, out_spec),
        out_shape=(jax.ShapeDtypeStruct((B, 4, hw), jnp.float32),) * 3,
        compiler_params=pltpu.CompilerParams(
            dimension_semantics=("parallel",)),
    )(src, tgt, *flat)

    shp = (B, 4, H, W)
    return out.reshape(shp), scg.reshape(shp), tcg.reshape(shp)


# ---------------------------------------------------------------------------
if __name__ == "__main__":
    key = jax.random.PRNGKey(0)
    key, ks, kt, kp = jax.random.split(key, 4)

    B, H, W = 2, 16, 16
    source = jax.random.normal(ks, (B, 1, H, W), jnp.float32)   # NCHW, like PyTorch
    target = jax.random.normal(kt, (B, 1, H, W), jnp.float32)
    params = init_params(kp)

    out, src_cg, tgt_cg = unet_joint_level0_forward(params, source, target)
    jax.block_until_ready((out, src_cg, tgt_cg))

    assert out.shape == (B, 4, H, W), out.shape
    assert src_cg.shape == (B, 4, H, W), src_cg.shape
    assert tgt_cg.shape == (B, 4, H, W), tgt_cg.shape
    assert bool(jnp.all(jnp.isfinite(out)))
    assert bool(jnp.all(jnp.isfinite(src_cg)))
    assert bool(jnp.all(jnp.isfinite(tgt_cg)))

    print("KERNEL_OK")
</pallas_src>

<mosaic_0001>
module attributes {stable_mosaic.version = 11 : i64} {
  func.func @_unet_kernel(%arg0: i32, %arg1: memref<1x8x256xf32, #tpu.memory_space<vmem>>, %arg2: memref<1x8x256xf32, #tpu.memory_space<vmem>>, %arg3: memref<8x72xf32, #tpu.memory_space<vmem>>, %arg4: memref<8x1xf32, #tpu.memory_space<vmem>>, %arg5: memref<8x144xf32, #tpu.memory_space<vmem>>, %arg6: memref<8x1xf32, #tpu.memory_space<vmem>>, %arg7: memref<8x72xf32, #tpu.memory_space<vmem>>, %arg8: memref<8x1xf32, #tpu.memory_space<vmem>>, %arg9: memref<8x144xf32, #tpu.memory_space<vmem>>, %arg10: memref<8x1xf32, #tpu.memory_space<vmem>>, %arg11: memref<8x72xf32, #tpu.memory_space<vmem>>, %arg12: memref<8x1xf32, #tpu.memory_space<vmem>>, %arg13: memref<8x144xf32, #tpu.memory_space<vmem>>, %arg14: memref<8x1xf32, #tpu.memory_space<vmem>>, %arg15: memref<8x144xf32, #tpu.memory_space<vmem>>, %arg16: memref<8x1xf32, #tpu.memory_space<vmem>>, %arg17: memref<1x4x256xf32, #tpu.memory_space<vmem>>, %arg18: memref<1x4x256xf32, #tpu.memory_space<vmem>>, %arg19: memref<1x4x256xf32, #tpu.memory_space<vmem>>) attributes {dimension_semantics = [#tpu.dimension_semantics<parallel>], iteration_bounds = array<i64: 2>, scalar_prefetch = 0 : i64, scratch_operands = 0 : i64, tpu.core_type = #tpu.core_type<tc>, window_params = [{transform_indices = @transform_0, window_bounds = array<i64: 1, 8, 256>}, {transform_indices = @transform_1, window_bounds = array<i64: 1, 8, 256>}, {pipeline_mode = #tpu.pipeline_mode<synchronous>, transform_indices = @transform_2, window_bounds = array<i64: 8, 72>}, {pipeline_mode = #tpu.pipeline_mode<synchronous>, transform_indices = @transform_3, window_bounds = array<i64: 8, 1>}, {pipeline_mode = #tpu.pipeline_mode<synchronous>, transform_indices = @transform_4, window_bounds = array<i64: 8, 144>}, {pipeline_mode = #tpu.pipeline_mode<synchronous>, transform_indices = @transform_5, window_bounds = array<i64: 8, 1>}, {pipeline_mode = #tpu.pipeline_mode<synchronous>, transform_indices = @transform_6, window_bounds = array<i64: 8, 72>}, {pipeline_mode = #tpu.pipeline_mode<synchronous>, transform_indices = @transform_7, window_bounds = array<i64: 8, 1>}, {pipeline_mode = #tpu.pipeline_mode<synchronous>, transform_indices = @transform_8, window_bounds = array<i64: 8, 144>}, {pipeline_mode = #tpu.pipeline_mode<synchronous>, transform_indices = @transform_9, window_bounds = array<i64: 8, 1>}, {pipeline_mode = #tpu.pipeline_mode<synchronous>, transform_indices = @transform_10, window_bounds = array<i64: 8, 72>}, {pipeline_mode = #tpu.pipeline_mode<synchronous>, transform_indices = @transform_11, window_bounds = array<i64: 8, 1>}, {pipeline_mode = #tpu.pipeline_mode<synchronous>, transform_indices = @transform_12, window_bounds = array<i64: 8, 144>}, {pipeline_mode = #tpu.pipeline_mode<synchronous>, transform_indices = @transform_13, window_bounds = array<i64: 8, 1>}, {pipeline_mode = #tpu.pipeline_mode<synchronous>, transform_indices = @transform_14, window_bounds = array<i64: 8, 144>}, {pipeline_mode = #tpu.pipeline_mode<synchronous>, transform_indices = @transform_15, window_bounds = array<i64: 8, 1>}, {transform_indices = @transform_16, window_bounds = array<i64: 1, 4, 256>}, {transform_indices = @transform_17, window_bounds = array<i64: 1, 4, 256>}, {transform_indices = @transform_18, window_bounds = array<i64: 1, 4, 256>}]} {
    %c0 = arith.constant 0 : index
    %c0_0 = arith.constant 0 : index
    %c0_1 = arith.constant 0 : index
    %0 = vector.load %arg1[%c0, %c0_0, %c0_1] : memref<1x8x256xf32, #tpu.memory_space<vmem>>, vector<1x8x256xf32>
    %1 = vector.shape_cast %0 : vector<1x8x256xf32> to vector<8x256xf32>
    %c0_2 = arith.constant 0 : index
    %c0_3 = arith.constant 0 : index
    %c0_4 = arith.constant 0 : index
    %2 = vector.load %arg2[%c0_2, %c0_3, %c0_4] : memref<1x8x256xf32, #tpu.memory_space<vmem>>, vector<1x8x256xf32>
    %3 = vector.shape_cast %2 : vector<1x8x256xf32> to vector<8x256xf32>
    %4 = tpu.concatenate %1, %3 in 1 : vector<8x256xf32>, vector<8x256xf32> -> vector<8x512xf32>
    %c0_5 = arith.constant 0 : index
    %c0_6 = arith.constant 0 : index
    %5 = vector.load %arg3[%c0_5, %c0_6] : memref<8x72xf32, #tpu.memory_space<vmem>>, vector<8x72xf32>
    %c0_7 = arith.constant 0 : index
    %c0_8 = arith.constant 0 : index
    %6 = vector.load %arg4[%c0_7, %c0_8] : memref<8x1xf32, #tpu.memory_space<vmem>>, vector<8x1xf32>
    %7 = tpu.iota {dimensions = array<i32: 1>} : vector<1x512xi32>
    %c255_i32 = arith.constant 255 : i32
    %8 = vector.broadcast %c255_i32 : i32 to vector<1x512xi32>
    %9 = arith.andi %7, %8 : vector<1x512xi32>
    %c4_i32 = arith.constant 4 : i32
    %10 = vector.broadcast %c4_i32 : i32 to vector<1x512xi32>
    %11 = arith.shrsi %9, %10 : vector<1x512xi32>
    %c15_i32 = arith.constant 15 : i32
    %12 = vector.broadcast %c15_i32 : i32 to vector<1x512xi32>
    %13 = arith.andi %7, %12 : vector<1x512xi32>
    %14 = vector.extract_strided_slice %4 {offsets = [0, 495], sizes = [8, 17], strides = [1, 1]} : vector<8x512xf32> to vector<8x17xf32>
    %15 = vector.extract_strided_slice %4 {offsets = [0, 0], sizes = [8, 495], strides = [1, 1]} : vector<8x512xf32> to vector<8x495xf32>
    %16 = tpu.concatenate %14, %15 in 1 : vector<8x17xf32>, vector<8x495xf32> -> vector<8x512xf32>
    %c1_i32 = arith.constant 1 : i32
    %17 = vector.broadcast %c1_i32 : i32 to vector<1x512xi32>
    %18 = arith.cmpi sge, %11, %17 : vector<1x512xi32>
    %c1_i32_9 = arith.constant 1 : i32
    %19 = vector.broadcast %c1_i32_9 : i32 to vector<1x512xi32>
    %20 = arith.cmpi sge, %13, %19 : vector<1x512xi32>
    %21 = arith.andi %18, %20 : vector<1x512xi1>
    %cst = arith.constant 0.000000e+00 : f32
    %22 = vector.shape_cast %21 : vector<1x512xi1> to vector<1x512xi1>
    %23 = vector.broadcast %22 : vector<1x512xi1> to vector<8x512xi1>
    %24 = vector.broadcast %cst : f32 to vector<8x512xf32>
    %25 = arith.select %23, %16, %24 : vector<8x512xi1>, vector<8x512xf32>
    %26 = vector.extract_strided_slice %4 {offsets = [0, 496], sizes = [8, 16], strides = [1, 1]} : vector<8x512xf32> to vector<8x16xf32>
    %27 = vector.extract_strided_slice %4 {offsets = [0, 0], sizes = [8, 496], strides = [1, 1]} : vector<8x512xf32> to vector<8x496xf32>
    %28 = tpu.concatenate %26, %27 in 1 : vector<8x16xf32>, vector<8x496xf32> -> vector<8x512xf32>
    %c1_i32_10 = arith.constant 1 : i32
    %29 = vector.broadcast %c1_i32_10 : i32 to vector<1x512xi32>
    %30 = arith.cmpi sge, %11, %29 : vector<1x512xi32>
    %cst_11 = arith.constant 0.000000e+00 : f32
    %31 = vector.shape_cast %30 : vector<1x512xi1> to vector<1x512xi1>
    %32 = vector.broadcast %31 : vector<1x512xi1> to vector<8x512xi1>
    %33 = vector.broadcast %cst_11 : f32 to vector<8x512xf32>
    %34 = arith.select %32, %28, %33 : vector<8x512xi1>, vector<8x512xf32>
    %35 = vector.extract_strided_slice %4 {offsets = [0, 497], sizes = [8, 15], strides = [1, 1]} : vector<8x512xf32> to vector<8x15xf32>
    %36 = vector.extract_strided_slice %4 {offsets = [0, 0], sizes = [8, 497], strides = [1, 1]} : vector<8x512xf32> to vector<8x497xf32>
    %37 = tpu.concatenate %35, %36 in 1 : vector<8x15xf32>, vector<8x497xf32> -> vector<8x512xf32>
    %c1_i32_12 = arith.constant 1 : i32
    %38 = vector.broadcast %c1_i32_12 : i32 to vector<1x512xi32>
    %39 = arith.cmpi sge, %11, %38 : vector<1x512xi32>
    %c14_i32 = arith.constant 14 : i32
    %40 = vector.broadcast %c14_i32 : i32 to vector<1x512xi32>
    %41 = arith.cmpi sle, %13, %40 : vector<1x512xi32>
    %42 = arith.andi %39, %41 : vector<1x512xi1>
    %cst_13 = arith.constant 0.000000e+00 : f32
    %43 = vector.shape_cast %42 : vector<1x512xi1> to vector<1x512xi1>
    %44 = vector.broadcast %43 : vector<1x512xi1> to vector<8x512xi1>
    %45 = vector.broadcast %cst_13 : f32 to vector<8x512xf32>
    %46 = arith.select %44, %37, %45 : vector<8x512xi1>, vector<8x512xf32>
    %47 = vector.extract_strided_slice %4 {offsets = [0, 511], sizes = [8, 1], strides = [1, 1]} : vector<8x512xf32> to vector<8x1xf32>
    %48 = vector.extract_strided_slice %4 {offsets = [0, 0], sizes = [8, 511], strides = [1, 1]} : vector<8x512xf32> to vector<8x511xf32>
    %49 = tpu.concatenate %47, %48 in 1 : vector<8x1xf32>, vector<8x511xf32> -> vector<8x512xf32>
    %c1_i32_14 = arith.constant 1 : i32
    %50 = vector.broadcast %c1_i32_14 : i32 to vector<1x512xi32>
    %51 = arith.cmpi sge, %13, %50 : vector<1x512xi32>
    %cst_15 = arith.constant 0.000000e+00 : f32
    %52 = vector.shape_cast %51 : vector<1x512xi1> to vector<1x512xi1>
    %53 = vector.broadcast %52 : vector<1x512xi1> to vector<8x512xi1>
    %54 = vector.broadcast %cst_15 : f32 to vector<8x512xf32>
    %55 = arith.select %53, %49, %54 : vector<8x512xi1>, vector<8x512xf32>
    %56 = vector.extract_strided_slice %4 {offsets = [0, 1], sizes = [8, 511], strides = [1, 1]} : vector<8x512xf32> to vector<8x511xf32>
    %57 = vector.extract_strided_slice %4 {offsets = [0, 0], sizes = [8, 1], strides = [1, 1]} : vector<8x512xf32> to vector<8x1xf32>
    %58 = tpu.concatenate %56, %57 in 1 : vector<8x511xf32>, vector<8x1xf32> -> vector<8x512xf32>
    %c14_i32_16 = arith.constant 14 : i32
    %59 = vector.broadcast %c14_i32_16 : i32 to vector<1x512xi32>
    %60 = arith.cmpi sle, %13, %59 : vector<1x512xi32>
    %cst_17 = arith.constant 0.000000e+00 : f32
    %61 = vector.shape_cast %60 : vector<1x512xi1> to vector<1x512xi1>
    %62 = vector.broadcast %61 : vector<1x512xi1> to vector<8x512xi1>
    %63 = vector.broadcast %cst_17 : f32 to vector<8x512xf32>
    %64 = arith.select %62, %58, %63 : vector<8x512xi1>, vector<8x512xf32>
    %65 = vector.extract_strided_slice %4 {offsets = [0, 15], sizes = [8, 497], strides = [1, 1]} : vector<8x512xf32> to vector<8x497xf32>
    %66 = vector.extract_strided_slice %4 {offsets = [0, 0], sizes = [8, 15], strides = [1, 1]} : vector<8x512xf32> to vector<8x15xf32>
    %67 = tpu.concatenate %65, %66 in 1 : vector<8x497xf32>, vector<8x15xf32> -> vector<8x512xf32>
    %c14_i32_18 = arith.constant 14 : i32
    %68 = vector.broadcast %c14_i32_18 : i32 to vector<1x512xi32>
    %69 = arith.cmpi sle, %11, %68 : vector<1x512xi32>
    %c1_i32_19 = arith.constant 1 : i32
    %70 = vector.broadcast %c1_i32_19 : i32 to vector<1x512xi32>
    %71 = arith.cmpi sge, %13, %70 : vector<1x512xi32>
    %72 = arith.andi %69, %71 : vector<1x512xi1>
    %cst_20 = arith.constant 0.000000e+00 : f32
    %73 = vector.shape_cast %72 : vector<1x512xi1> to vector<1x512xi1>
    %74 = vector.broadcast %73 : vector<1x512xi1> to vector<8x512xi1>
    %75 = vector.broadcast %cst_20 : f32 to vector<8x512xf32>
    %76 = arith.select %74, %67, %75 : vector<8x512xi1>, vector<8x512xf32>
    %77 = vector.extract_strided_slice %4 {offsets = [0, 16], sizes = [8, 496], strides = [1, 1]} : vector<8x512xf32> to vector<8x496xf32>
    %78 = vector.extract_strided_slice %4 {offsets = [0, 0], sizes = [8, 16], strides = [1, 1]} : vector<8x512xf32> to vector<8x16xf32>
    %79 = tpu.concatenate %77, %78 in 1 : vector<8x496xf32>, vector<8x16xf32> -> vector<8x512xf32>
    %c14_i32_21 = arith.constant 14 : i32
    %80 = vector.broadcast %c14_i32_21 : i32 to vector<1x512xi32>
    %81 = arith.cmpi sle, %11, %80 : vector<1x512xi32>
    %cst_22 = arith.constant 0.000000e+00 : f32
    %82 = vector.shape_cast %81 : vector<1x512xi1> to vector<1x512xi1>
    %83 = vector.broadcast %82 : vector<1x512xi1> to vector<8x512xi1>
    %84 = vector.broadcast %cst_22 : f32 to vector<8x512xf32>
    %85 = arith.select %83, %79, %84 : vector<8x512xi1>, vector<8x512xf32>
    %86 = vector.extract_strided_slice %4 {offsets = [0, 17], sizes = [8, 495], strides = [1, 1]} : vector<8x512xf32> to vector<8x495xf32>
    %87 = vector.extract_strided_slice %4 {offsets = [0, 0], sizes = [8, 17], strides = [1, 1]} : vector<8x512xf32> to vector<8x17xf32>
    %88 = tpu.concatenate %86, %87 in 1 : vector<8x495xf32>, vector<8x17xf32> -> vector<8x512xf32>
    %c14_i32_23 = arith.constant 14 : i32
    %89 = vector.broadcast %c14_i32_23 : i32 to vector<1x512xi32>
    %90 = arith.cmpi sle, %11, %89 : vector<1x512xi32>
    %c14_i32_24 = arith.constant 14 : i32
    %91 = vector.broadcast %c14_i32_24 : i32 to vector<1x512xi32>
    %92 = arith.cmpi sle, %13, %91 : vector<1x512xi32>
    %93 = arith.andi %90, %92 : vector<1x512xi1>
    %cst_25 = arith.constant 0.000000e+00 : f32
    %94 = vector.shape_cast %93 : vector<1x512xi1> to vector<1x512xi1>
    %95 = vector.broadcast %94 : vector<1x512xi1> to vector<8x512xi1>
    %96 = vector.broadcast %cst_25 : f32 to vector<8x512xf32>
    %97 = arith.select %95, %88, %96 : vector<8x512xi1>, vector<8x512xf32>
    %98 = vector.shape_cast %25 : vector<8x512xf32> to vector<1x8x512xf32>
    %99 = vector.shape_cast %34 : vector<8x512xf32> to vector<1x8x512xf32>
    %100 = vector.shape_cast %46 : vector<8x512xf32> to vector<1x8x512xf32>
    %101 = vector.shape_cast %55 : vector<8x512xf32> to vector<1x8x512xf32>
    %102 = vector.shape_cast %4 : vector<8x512xf32> to vector<1x8x512xf32>
    %103 = vector.shape_cast %64 : vector<8x512xf32> to vector<1x8x512xf32>
    %104 = vector.shape_cast %76 : vector<8x512xf32> to vector<1x8x512xf32>
    %105 = vector.shape_cast %85 : vector<8x512xf32> to vector<1x8x512xf32>
    %106 = vector.shape_cast %97 : vector<8x512xf32> to vector<1x8x512xf32>
    %107 = tpu.concatenate %98, %99, %100, %101, %102, %103, %104, %105, %106 in 0 : vector<1x8x512xf32>, vector<1x8x512xf32>, vector<1x8x512xf32>, vector<1x8x512xf32>, vector<1x8x512xf32>, vector<1x8x512xf32>, vector<1x8x512xf32>, vector<1x8x512xf32>, vector<1x8x512xf32> -> vector<9x8x512xf32>
    %108 = vector.shape_cast %107 : vector<9x8x512xf32> to vector<72x512xf32>
    %cst_26 = arith.constant dense<0.000000e+00> : vector<8x512xf32>
    %109 = tpu.matmul %5, %108, %cst_26 {dimension_numbers = #tpu.dot_dimension_numbers<[1], [0], [0], [1], [0, 0, 1, 1], [], []>} : vector<8x72xf32>, vector<72x512xf32>, vector<8x512xf32> -> vector<8x512xf32>
    %110 = vector.broadcast %6 : vector<8x1xf32> to vector<8x512xf32>
    %111 = arith.addf %109, %110 : vector<8x512xf32>
    %cst_27 = arith.constant 0.000000e+00 : f32
    %112 = vector.broadcast %cst_27 : f32 to vector<8x512xf32>
    %113 = arith.cmpf oge, %111, %112 : vector<8x512xf32>
    %cst_28 = arith.constant 2.000000e-01 : f32
    %114 = vector.broadcast %cst_28 : f32 to vector<8x512xf32>
    %115 = arith.mulf %114, %111 : vector<8x512xf32>
    %116 = arith.select %113, %111, %115 : vector<8x512xi1>, vector<8x512xf32>
    %117 = vector.extract_strided_slice %116 {offsets = [0, 0], sizes = [8, 256], strides = [1, 1]} : vector<8x512xf32> to vector<8x256xf32>
    %118 = vector.extract_strided_slice %116 {offsets = [0, 256], sizes = [8, 256], strides = [1, 1]} : vector<8x512xf32> to vector<8x256xf32>
    %119 = vector.extract_strided_slice %117 {offsets = [0, 0], sizes = [4, 256], strides = [1, 1]} : vector<8x256xf32> to vector<4x256xf32>
    %c0_29 = arith.constant 0 : index
    %c0_30 = arith.constant 0 : index
    %c0_31 = arith.constant 0 : index
    %120 = vector.load %arg18[%c0_29, %c0_30, %c0_31] : memref<1x4x256xf32, #tpu.memory_space<vmem>>, vector<1x4x256xf32>
    %121 = vector.shape_cast %120 : vector<1x4x256xf32> to vector<4x256xf32>
    %122 = vector.shape_cast %119 : vector<4x256xf32> to vector<1x4x256xf32>
    tpu.vector_store %arg18[%c0_29, %c0_30, %c0_31], %122 {strides = array<i32>} : memref<1x4x256xf32, #tpu.memory_space<vmem>>, vector<1x4x256xf32>,
    %123 = vector.extract_strided_slice %118 {offsets = [0, 0], sizes = [4, 256], strides = [1, 1]} : vector<8x256xf32> to vector<4x256xf32>
    %c0_32 = arith.constant 0 : index
    %c0_33 = arith.constant 0 : index
    %c0_34 = arith.constant 0 : index
    %124 = vector.load %arg19[%c0_32, %c0_33, %c0_34] : memref<1x4x256xf32, #tpu.memory_space<vmem>>, vector<1x4x256xf32>
    %125 = vector.shape_cast %124 : vector<1x4x256xf32> to vector<4x256xf32>
    %126 = vector.shape_cast %123 : vector<4x256xf32> to vector<1x4x256xf32>
    tpu.vector_store %arg19[%c0_32, %c0_33, %c0_34], %126 {strides = array<i32>} : memref<1x4x256xf32, #tpu.memory_space<vmem>>, vector<1x4x256xf32>,
    %127 = vector.shape_cast %117 : vector<8x256xf32> to vector<1x8x256xf32>
    %128 = vector.shape_cast %118 : vector<8x256xf32> to vector<1x8x256xf32>
    %129 = tpu.concatenate %127, %128 in 0 : vector<1x8x256xf32>, vector<1x8x256xf32> -> vector<2x8x256xf32>
    %130 = vector.shape_cast %129 : vector<2x8x256xf32> to vector<16x256xf32>
    %c0_35 = arith.constant 0 : index
    %c0_36 = arith.constant 0 : index
    %131 = vector.load %arg5[%c0_35, %c0_36] : memref<8x144xf32, #tpu.memory_space<vmem>>, vector<8x144xf32>
    %c0_37 = arith.constant 0 : index
    %c0_38 = arith.constant 0 : index
    %132 = vector.load %arg6[%c0_37, %c0_38] : memref<8x1xf32, #tpu.memory_space<vmem>>, vector<8x1xf32>
    %133 = tpu.iota {dimensions = array<i32: 1>} : vector<1x256xi32>
    %c255_i32_39 = arith.constant 255 : i32
    %134 = vector.broadcast %c255_i32_39 : i32 to vector<1x256xi32>
    %135 = arith.andi %133, %134 : vector<1x256xi32>
    %c4_i32_40 = arith.constant 4 : i32
    %136 = vector.broadcast %c4_i32_40 : i32 to vector<1x256xi32>
    %137 = arith.shrsi %135, %136 : vector<1x256xi32>
    %c15_i32_41 = arith.constant 15 : i32
    %138 = vector.broadcast %c15_i32_41 : i32 to vector<1x256xi32>
    %139 = arith.andi %133, %138 : vector<1x256xi32>
    %140 = vector.extract_strided_slice %130 {offsets = [0, 239], sizes = [16, 17], strides = [1, 1]} : vector<16x256xf32> to vector<16x17xf32>
    %141 = vector.extract_strided_slice %130 {offsets = [0, 0], sizes = [16, 239], strides = [1, 1]} : vector<16x256xf32> to vector<16x239xf32>
    %142 = tpu.concatenate %140, %141 in 1 : vector<16x17xf32>, vector<16x239xf32> -> vector<16x256xf32>
    %c1_i32_42 = arith.constant 1 : i32
    %143 = vector.broadcast %c1_i32_42 : i32 to vector<1x256xi32>
    %144 = arith.cmpi sge, %137, %143 : vector<1x256xi32>
    %c1_i32_43 = arith.constant 1 : i32
    %145 = vector.broadcast %c1_i32_43 : i32 to vector<1x256xi32>
    %146 = arith.cmpi sge, %139, %145 : vector<1x256xi32>
    %147 = arith.andi %144, %146 : vector<1x256xi1>
    %cst_44 = arith.constant 0.000000e+00 : f32
    %148 = vector.shape_cast %147 : vector<1x256xi1> to vector<1x256xi1>
    %149 = vector.broadcast %148 : vector<1x256xi1> to vector<16x256xi1>
    %150 = vector.broadcast %cst_44 : f32 to vector<16x256xf32>
    %151 = arith.select %149, %142, %150 : vector<16x256xi1>, vector<16x256xf32>
    %152 = vector.extract_strided_slice %130 {offsets = [0, 240], sizes = [16, 16], strides = [1, 1]} : vector<16x256xf32> to vector<16x16xf32>
    %153 = vector.extract_strided_slice %130 {offsets = [0, 0], sizes = [16, 240], strides = [1, 1]} : vector<16x256xf32> to vector<16x240xf32>
    %154 = tpu.concatenate %152, %153 in 1 : vector<16x16xf32>, vector<16x240xf32> -> vector<16x256xf32>
    %c1_i32_45 = arith.constant 1 : i32
    %155 = vector.broadcast %c1_i32_45 : i32 to vector<1x256xi32>
    %156 = arith.cmpi sge, %137, %155 : vector<1x256xi32>
    %cst_46 = arith.constant 0.000000e+00 : f32
    %157 = vector.shape_cast %156 : vector<1x256xi1> to vector<1x256xi1>
    %158 = vector.broadcast %157 : vector<1x256xi1> to vector<16x256xi1>
    %159 = vector.broadcast %cst_46 : f32 to vector<16x256xf32>
    %160 = arith.select %158, %154, %159 : vector<16x256xi1>, vector<16x256xf32>
    %161 = vector.extract_strided_slice %130 {offsets = [0, 241], sizes = [16, 15], strides = [1, 1]} : vector<16x256xf32> to vector<16x15xf32>
    %162 = vector.extract_strided_slice %130 {offsets = [0, 0], sizes = [16, 241], strides = [1, 1]} : vector<16x256xf32> to vector<16x241xf32>
    %163 = tpu.concatenate %161, %162 in 1 : vector<16x15xf32>, vector<16x241xf32> -> vector<16x256xf32>
    %c1_i32_47 = arith.constant 1 : i32
    %164 = vector.broadcast %c1_i32_47 : i32 to vector<1x256xi32>
    %165 = arith.cmpi sge, %137, %164 : vector<1x256xi32>
    %c14_i32_48 = arith.constant 14 : i32
    %166 = vector.broadcast %c14_i32_48 : i32 to vector<1x256xi32>
    %167 = arith.cmpi sle, %139, %166 : vector<1x256xi32>
    %168 = arith.andi %165, %167 : vector<1x256xi1>
    %cst_49 = arith.constant 0.000000e+00 : f32
    %169 = vector.shape_cast %168 : vector<1x256xi1> to vector<1x256xi1>
    %170 = vector.broadcast %169 : vector<1x256xi1> to vector<16x256xi1>
    %171 = vector.broadcast %cst_49 : f32 to vector<16x256xf32>
    %172 = arith.select %170, %163, %171 : vector<16x256xi1>, vector<16x256xf32>
    %173 = vector.extract_strided_slice %130 {offsets = [0, 255], sizes = [16, 1], strides = [1, 1]} : vector<16x256xf32> to vector<16x1xf32>
    %174 = vector.extract_strided_slice %130 {offsets = [0, 0], sizes = [16, 255], strides = [1, 1]} : vector<16x256xf32> to vector<16x255xf32>
    %175 = tpu.concatenate %173, %174 in 1 : vector<16x1xf32>, vector<16x255xf32> -> vector<16x256xf32>
    %c1_i32_50 = arith.constant 1 : i32
    %176 = vector.broadcast %c1_i32_50 : i32 to vector<1x256xi32>
    %177 = arith.cmpi sge, %139, %176 : vector<1x256xi32>
    %cst_51 = arith.constant 0.000000e+00 : f32
    %178 = vector.shape_cast %177 : vector<1x256xi1> to vector<1x256xi1>
    %179 = vector.broadcast %178 : vector<1x256xi1> to vector<16x256xi1>
    %180 = vector.broadcast %cst_51 : f32 to vector<16x256xf32>
    %181 = arith.select %179, %175, %180 : vector<16x256xi1>, vector<16x256xf32>
    %182 = vector.extract_strided_slice %130 {offsets = [0, 1], sizes = [16, 255], strides = [1, 1]} : vector<16x256xf32> to vector<16x255xf32>
    %183 = vector.extract_strided_slice %130 {offsets = [0, 0], sizes = [16, 1], strides = [1, 1]} : vector<16x256xf32> to vector<16x1xf32>
    %184 = tpu.concatenate %182, %183 in 1 : vector<16x255xf32>, vector<16x1xf32> -> vector<16x256xf32>
    %c14_i32_52 = arith.constant 14 : i32
    %185 = vector.broadcast %c14_i32_52 : i32 to vector<1x256xi32>
    %186 = arith.cmpi sle, %139, %185 : vector<1x256xi32>
    %cst_53 = arith.constant 0.000000e+00 : f32
    %187 = vector.shape_cast %186 : vector<1x256xi1> to vector<1x256xi1>
    %188 = vector.broadcast %187 : vector<1x256xi1> to vector<16x256xi1>
    %189 = vector.broadcast %cst_53 : f32 to vector<16x256xf32>
    %190 = arith.select %188, %184, %189 : vector<16x256xi1>, vector<16x256xf32>
    %191 = vector.extract_strided_slice %130 {offsets = [0, 15], sizes = [16, 241], strides = [1, 1]} : vector<16x256xf32> to vector<16x241xf32>
    %192 = vector.extract_strided_slice %130 {offsets = [0, 0], sizes = [16, 15], strides = [1, 1]} : vector<16x256xf32> to vector<16x15xf32>
    %193 = tpu.concatenate %191, %192 in 1 : vector<16x241xf32>, vector<16x15xf32> -> vector<16x256xf32>
    %c14_i32_54 = arith.constant 14 : i32
    %194 = vector.broadcast %c14_i32_54 : i32 to vector<1x256xi32>
    %195 = arith.cmpi sle, %137, %194 : vector<1x256xi32>
    %c1_i32_55 = arith.constant 1 : i32
    %196 = vector.broadcast %c1_i32_55 : i32 to vector<1x256xi32>
    %197 = arith.cmpi sge, %139, %196 : vector<1x256xi32>
    %198 = arith.andi %195, %197 : vector<1x256xi1>
    %cst_56 = arith.constant 0.000000e+00 : f32
    %199 = vector.shape_cast %198 : vector<1x256xi1> to vector<1x256xi1>
    %200 = vector.broadcast %199 : vector<1x256xi1> to vector<16x256xi1>
    %201 = vector.broadcast %cst_56 : f32 to vector<16x256xf32>
    %202 = arith.select %200, %193, %201 : vector<16x256xi1>, vector<16x256xf32>
    %203 = vector.extract_strided_slice %130 {offsets = [0, 16], sizes = [16, 240], strides = [1, 1]} : vector<16x256xf32> to vector<16x240xf32>
    %204 = vector.extract_strided_slice %130 {offsets = [0, 0], sizes = [16, 16], strides = [1, 1]} : vector<16x256xf32> to vector<16x16xf32>
    %205 = tpu.concatenate %203, %204 in 1 : vector<16x240xf32>, vector<16x16xf32> -> vector<16x256xf32>
    %c14_i32_57 = arith.constant 14 : i32
    %206 = vector.broadcast %c14_i32_57 : i32 to vector<1x256xi32>
    %207 = arith.cmpi sle, %137, %206 : vector<1x256xi32>
    %cst_58 = arith.constant 0.000000e+00 : f32
    %208 = vector.shape_cast %207 : vector<1x256xi1> to vector<1x256xi1>
    %209 = vector.broadcast %208 : vector<1x256xi1> to vector<16x256xi1>
    %210 = vector.broadcast %cst_58 : f32 to vector<16x256xf32>
    %211 = arith.select %209, %205, %210 : vector<16x256xi1>, vector<16x256xf32>
    %212 = vector.extract_strided_slice %130 {offsets = [0, 17], sizes = [16, 239], strides = [1, 1]} : vector<16x256xf32> to vector<16x239xf32>
    %213 = vector.extract_strided_slice %130 {offsets = [0, 0], sizes = [16, 17], strides = [1, 1]} : vector<16x256xf32> to vector<16x17xf32>
    %214 = tpu.concatenate %212, %213 in 1 : vector<16x239xf32>, vector<16x17xf32> -> vector<16x256xf32>
    %c14_i32_59 = arith.constant 14 : i32
    %215 = vector.broadcast %c14_i32_59 : i32 to vector<1x256xi32>
    %216 = arith.cmpi sle, %137, %215 : vector<1x256xi32>
    %c14_i32_60 = arith.constant 14 : i32
    %217 = vector.broadcast %c14_i32_60 : i32 to vector<1x256xi32>
    %218 = arith.cmpi sle, %139, %217 : vector<1x256xi32>
    %219 = arith.andi %216, %218 : vector<1x256xi1>
    %cst_61 = arith.constant 0.000000e+00 : f32
    %220 = vector.shape_cast %219 : vector<1x256xi1> to vector<1x256xi1>
    %221 = vector.broadcast %220 : vector<1x256xi1> to vector<16x256xi1>
    %222 = vector.broadcast %cst_61 : f32 to vector<16x256xf32>
    %223 = arith.select %221, %214, %222 : vector<16x256xi1>, vector<16x256xf32>
    %224 = vector.shape_cast %151 : vector<16x256xf32> to vector<1x16x256xf32>
    %225 = vector.shape_cast %160 : vector<16x256xf32> to vector<1x16x256xf32>
    %226 = vector.shape_cast %172 : vector<16x256xf32> to vector<1x16x256xf32>
    %227 = vector.shape_cast %181 : vector<16x256xf32> to vector<1x16x256xf32>
    %228 = vector.shape_cast %130 : vector<16x256xf32> to vector<1x16x256xf32>
    %229 = vector.shape_cast %190 : vector<16x256xf32> to vector<1x16x256xf32>
    %230 = vector.shape_cast %202 : vector<16x256xf32> to vector<1x16x256xf32>
    %231 = vector.shape_cast %211 : vector<16x256xf32> to vector<1x16x256xf32>
    %232 = vector.shape_cast %223 : vector<16x256xf32> to vector<1x16x256xf32>
    %233 = tpu.concatenate %224, %225, %226, %227, %228, %229, %230, %231, %232 in 0 : vector<1x16x256xf32>, vector<1x16x256xf32>, vector<1x16x256xf32>, vector<1x16x256xf32>, vector<1x16x256xf32>, vector<1x16x256xf32>, vector<1x16x256xf32>, vector<1x16x256xf32>, vector<1x16x256xf32> -> vector<9x16x256xf32>
    %234 = vector.shape_cast %233 : vector<9x16x256xf32> to vector<144x256xf32>
    %cst_62 = arith.constant dense<0.000000e+00> : vector<8x256xf32>
    %235 = tpu.matmul %131, %234, %cst_62 {dimension_numbers = #tpu.dot_dimension_numbers<[1], [0], [0], [1], [0, 0, 1, 1], [], []>} : vector<8x144xf32>, vector<144x256xf32>, vector<8x256xf32> -> vector<8x256xf32>
    %236 = vector.broadcast %132 : vector<8x1xf32> to vector<8x256xf32>
    %237 = arith.addf %235, %236 : vector<8x256xf32>
    %cst_63 = arith.constant 0.000000e+00 : f32
    %238 = vector.broadcast %cst_63 : f32 to vector<8x256xf32>
    %239 = arith.cmpf oge, %237, %238 : vector<8x256xf32>
    %cst_64 = arith.constant 2.000000e-01 : f32
    %240 = vector.broadcast %cst_64 : f32 to vector<8x256xf32>
    %241 = arith.mulf %240, %237 : vector<8x256xf32>
    %242 = arith.select %239, %237, %241 : vector<8x256xi1>, vector<8x256xf32>
    %243 = vector.extract_strided_slice %116 {offsets = [0, 1], sizes = [8, 511], strides = [1, 1]} : vector<8x512xf32> to vector<8x511xf32>
    %244 = vector.extract_strided_slice %116 {offsets = [0, 0], sizes = [8, 1], strides = [1, 1]} : vector<8x512xf32> to vector<8x1xf32>
    %245 = tpu.concatenate %243, %244 in 1 : vector<8x511xf32>, vector<8x1xf32> -> vector<8x512xf32>
    %246 = arith.maximumf %116, %245 : vector<8x512xf32>
    %247 = vector.extract_strided_slice %246 {offsets = [0, 16], sizes = [8, 496], strides = [1, 1]} : vector<8x512xf32> to vector<8x496xf32>
    %248 = vector.extract_strided_slice %246 {offsets = [0, 0], sizes = [8, 16], strides = [1, 1]} : vector<8x512xf32> to vector<8x16xf32>
    %249 = tpu.concatenate %247, %248 in 1 : vector<8x496xf32>, vector<8x16xf32> -> vector<8x512xf32>
    %250 = arith.maximumf %246, %249 : vector<8x512xf32>
    %251 = tpu.iota {dimensions = array<i32: 0>} : vector<512x128xi32>
    %252 = tpu.iota {dimensions = array<i32: 1>} : vector<512x128xi32>
    %c6_i32 = arith.constant 6 : i32
    %253 = vector.broadcast %c6_i32 : i32 to vector<512x128xi32>
    %254 = arith.shrsi %252, %253 : vector<512x128xi32>
    %c63_i32 = arith.constant 63 : i32
    %255 = vector.broadcast %c63_i32 : i32 to vector<512x128xi32>
    %256 = arith.andi %252, %255 : vector<512x128xi32>
    %c256_i32 = arith.constant 256 : i32
    %257 = vector.broadcast %c256_i32 : i32 to vector<512x128xi32>
    %258 = arith.muli %254, %257 : vector<512x128xi32>
    %c3_i32 = arith.constant 3 : i32
    %259 = vector.broadcast %c3_i32 : i32 to vector<512x128xi32>
    %260 = arith.shrsi %256, %259 : vector<512x128xi32>
    %c16_i32 = arith.constant 16 : i32
    %261 = vector.broadcast %c16_i32 : i32 to vector<512x128xi32>
    %262 = arith.muli %260, %261 : vector<512x128xi32>
    %c7_i32 = arith.constant 7 : i32
    %263 = vector.broadcast %c7_i32 : i32 to vector<512x128xi32>
    %264 = arith.andi %256, %263 : vector<512x128xi32>
    %265 = arith.addi %262, %264 : vector<512x128xi32>
    %c2_i32 = arith.constant 2 : i32
    %266 = vector.broadcast %c2_i32 : i32 to vector<512x128xi32>
    %267 = arith.muli %265, %266 : vector<512x128xi32>
    %268 = arith.addi %258, %267 : vector<512x128xi32>
    %269 = arith.cmpi eq, %251, %268 : vector<512x128xi32>
    %cst_65 = arith.constant 1.000000e+00 : f32
    %cst_66 = arith.constant 0.000000e+00 : f32
    %270 = vector.broadcast %cst_65 : f32 to vector<512x128xf32>
    %271 = vector.broadcast %cst_66 : f32 to vector<512x128xf32>
    %272 = arith.select %269, %270, %271 : vector<512x128xi1>, vector<512x128xf32>
    %cst_67 = arith.constant dense<0.000000e+00> : vector<8x128xf32>
    %273 = tpu.matmul %250, %272, %cst_67 {dimension_numbers = #tpu.dot_dimension_numbers<[1], [0], [0], [1], [0, 0, 1, 1], [], []>} : vector<8x512xf32>, vector<512x128xf32>, vector<8x128xf32> -> vector<8x128xf32>
    %c0_68 = arith.constant 0 : index
    %c0_69 = arith.constant 0 : index
    %274 = vector.load %arg7[%c0_68, %c0_69] : memref<8x72xf32, #tpu.memory_space<vmem>>, vector<8x72xf32>
    %c0_70 = arith.constant 0 : index
    %c0_71 = arith.constant 0 : index
    %275 = vector.load %arg8[%c0_70, %c0_71] : memref<8x1xf32, #tpu.memory_space<vmem>>, vector<8x1xf32>
    %276 = tpu.iota {dimensions = array<i32: 1>} : vector<1x128xi32>
    %c63_i32_72 = arith.constant 63 : i32
    %277 = vector.broadcast %c63_i32_72 : i32 to vector<1x128xi32>
    %278 = arith.andi %276, %277 : vector<1x128xi32>
    %c3_i32_73 = arith.constant 3 : i32
    %279 = vector.broadcast %c3_i32_73 : i32 to vector<1x128xi32>
    %280 = arith.shrsi %278, %279 : vector<1x128xi32>
    %c7_i32_74 = arith.constant 7 : i32
    %281 = vector.broadcast %c7_i32_74 : i32 to vector<1x128xi32>
    %282 = arith.andi %276, %281 : vector<1x128xi32>
    %283 = vector.extract_strided_slice %273 {offsets = [0, 119], sizes = [8, 9], strides = [1, 1]} : vector<8x128xf32> to vector<8x9xf32>
    %284 = vector.extract_strided_slice %273 {offsets = [0, 0], sizes = [8, 119], strides = [1, 1]} : vector<8x128xf32> to vector<8x119xf32>
    %285 = tpu.concatenate %283, %284 in 1 : vector<8x9xf32>, vector<8x119xf32> -> vector<8x128xf32>
    %c1_i32_75 = arith.constant 1 : i32
    %286 = vector.broadcast %c1_i32_75 : i32 to vector<1x128xi32>
    %287 = arith.cmpi sge, %280, %286 : vector<1x128xi32>
    %c1_i32_76 = arith.constant 1 : i32
    %288 = vector.broadcast %c1_i32_76 : i32 to vector<1x128xi32>
    %289 = arith.cmpi sge, %282, %288 : vector<1x128xi32>
    %290 = arith.andi %287, %289 : vector<1x128xi1>
    %cst_77 = arith.constant 0.000000e+00 : f32
    %291 = vector.shape_cast %290 : vector<1x128xi1> to vector<1x128xi1>
    %292 = vector.broadcast %291 : vector<1x128xi1> to vector<8x128xi1>
    %293 = vector.broadcast %cst_77 : f32 to vector<8x128xf32>
    %294 = arith.select %292, %285, %293 : vector<8x128xi1>, vector<8x128xf32>
    %295 = vector.extract_strided_slice %273 {offsets = [0, 120], sizes = [8, 8], strides = [1, 1]} : vector<8x128xf32> to vector<8x8xf32>
    %296 = vector.extract_strided_slice %273 {offsets = [0, 0], sizes = [8, 120], strides = [1, 1]} : vector<8x128xf32> to vector<8x120xf32>
    %297 = tpu.concatenate %295, %296 in 1 : vector<8x8xf32>, vector<8x120xf32> -> vector<8x128xf32>
    %c1_i32_78 = arith.constant 1 : i32
    %298 = vector.broadcast %c1_i32_78 : i32 to vector<1x128xi32>
    %299 = arith.cmpi sge, %280, %298 : vector<1x128xi32>
    %cst_79 = arith.constant 0.000000e+00 : f32
    %300 = vector.shape_cast %299 : vector<1x128xi1> to vector<1x128xi1>
    %301 = vector.broadcast %300 : vector<1x128xi1> to vector<8x128xi1>
    %302 = vector.broadcast %cst_79 : f32 to vector<8x128xf32>
    %303 = arith.select %301, %297, %302 : vector<8x128xi1>, vector<8x128xf32>
    %304 = vector.extract_strided_slice %273 {offsets = [0, 121], sizes = [8, 7], strides = [1, 1]} : vector<8x128xf32> to vector<8x7xf32>
    %305 = vector.extract_strided_slice %273 {offsets = [0, 0], sizes = [8, 121], strides = [1, 1]} : vector<8x128xf32> to vector<8x121xf32>
    %306 = tpu.concatenate %304, %305 in 1 : vector<8x7xf32>, vector<8x121xf32> -> vector<8x128xf32>
    %c1_i32_80 = arith.constant 1 : i32
    %307 = vector.broadcast %c1_i32_80 : i32 to vector<1x128xi32>
    %308 = arith.cmpi sge, %280, %307 : vector<1x128xi32>
    %c6_i32_81 = arith.constant 6 : i32
    %309 = vector.broadcast %c6_i32_81 : i32 to vector<1x128xi32>
    %310 = arith.cmpi sle, %282, %309 : vector<1x128xi32>
    %311 = arith.andi %308, %310 : vector<1x128xi1>
    %cst_82 = arith.constant 0.000000e+00 : f32
    %312 = vector.shape_cast %311 : vector<1x128xi1> to vector<1x128xi1>
    %313 = vector.broadcast %312 : vector<1x128xi1> to vector<8x128xi1>
    %314 = vector.broadcast %cst_82 : f32 to vector<8x128xf32>
    %315 = arith.select %313, %306, %314 : vector<8x128xi1>, vector<8x128xf32>
    %316 = vector.extract_strided_slice %273 {offsets = [0, 127], sizes = [8, 1], strides = [1, 1]} : vector<8x128xf32> to vector<8x1xf32>
    %317 = vector.extract_strided_slice %273 {offsets = [0, 0], sizes = [8, 127], strides = [1, 1]} : vector<8x128xf32> to vector<8x127xf32>
    %318 = tpu.concatenate %316, %317 in 1 : vector<8x1xf32>, vector<8x127xf32> -> vector<8x128xf32>
    %c1_i32_83 = arith.constant 1 : i32
    %319 = vector.broadcast %c1_i32_83 : i32 to vector<1x128xi32>
    %320 = arith.cmpi sge, %282, %319 : vector<1x128xi32>
    %cst_84 = arith.constant 0.000000e+00 : f32
    %321 = vector.shape_cast %320 : vector<1x128xi1> to vector<1x128xi1>
    %322 = vector.broadcast %321 : vector<1x128xi1> to vector<8x128xi1>
    %323 = vector.broadcast %cst_84 : f32 to vector<8x128xf32>
    %324 = arith.select %322, %318, %323 : vector<8x128xi1>, vector<8x128xf32>
    %325 = vector.extract_strided_slice %273 {offsets = [0, 1], sizes = [8, 127], strides = [1, 1]} : vector<8x128xf32> to vector<8x127xf32>
    %326 = vector.extract_strided_slice %273 {offsets = [0, 0], sizes = [8, 1], strides = [1, 1]} : vector<8x128xf32> to vector<8x1xf32>
    %327 = tpu.concatenate %325, %326 in 1 : vector<8x127xf32>, vector<8x1xf32> -> vector<8x128xf32>
    %c6_i32_85 = arith.constant 6 : i32
    %328 = vector.broadcast %c6_i32_85 : i32 to vector<1x128xi32>
    %329 = arith.cmpi sle, %282, %328 : vector<1x128xi32>
    %cst_86 = arith.constant 0.000000e+00 : f32
    %330 = vector.shape_cast %329 : vector<1x128xi1> to vector<1x128xi1>
    %331 = vector.broadcast %330 : vector<1x128xi1> to vector<8x128xi1>
    %332 = vector.broadcast %cst_86 : f32 to vector<8x128xf32>
    %333 = arith.select %331, %327, %332 : vector<8x128xi1>, vector<8x128xf32>
    %334 = vector.extract_strided_slice %273 {offsets = [0, 7], sizes = [8, 121], strides = [1, 1]} : vector<8x128xf32> to vector<8x121xf32>
    %335 = vector.extract_strided_slice %273 {offsets = [0, 0], sizes = [8, 7], strides = [1, 1]} : vector<8x128xf32> to vector<8x7xf32>
    %336 = tpu.concatenate %334, %335 in 1 : vector<8x121xf32>, vector<8x7xf32> -> vector<8x128xf32>
    %c6_i32_87 = arith.constant 6 : i32
    %337 = vector.broadcast %c6_i32_87 : i32 to vector<1x128xi32>
    %338 = arith.cmpi sle, %280, %337 : vector<1x128xi32>
    %c1_i32_88 = arith.constant 1 : i32
    %339 = vector.broadcast %c1_i32_88 : i32 to vector<1x128xi32>
    %340 = arith.cmpi sge, %282, %339 : vector<1x128xi32>
    %341 = arith.andi %338, %340 : vector<1x128xi1>
    %cst_89 = arith.constant 0.000000e+00 : f32
    %342 = vector.shape_cast %341 : vector<1x128xi1> to vector<1x128xi1>
    %343 = vector.broadcast %342 : vector<1x128xi1> to vector<8x128xi1>
    %344 = vector.broadcast %cst_89 : f32 to vector<8x128xf32>
    %345 = arith.select %343, %336, %344 : vector<8x128xi1>, vector<8x128xf32>
    %346 = vector.extract_strided_slice %273 {offsets = [0, 8], sizes = [8, 120], strides = [1, 1]} : vector<8x128xf32> to vector<8x120xf32>
    %347 = vector.extract_strided_slice %273 {offsets = [0, 0], sizes = [8, 8], strides = [1, 1]} : vector<8x128xf32> to vector<8x8xf32>
    %348 = tpu.concatenate %346, %347 in 1 : vector<8x120xf32>, vector<8x8xf32> -> vector<8x128xf32>
    %c6_i32_90 = arith.constant 6 : i32
    %349 = vector.broadcast %c6_i32_90 : i32 to vector<1x128xi32>
    %350 = arith.cmpi sle, %280, %349 : vector<1x128xi32>
    %cst_91 = arith.constant 0.000000e+00 : f32
    %351 = vector.shape_cast %350 : vector<1x128xi1> to vector<1x128xi1>
    %352 = vector.broadcast %351 : vector<1x128xi1> to vector<8x128xi1>
    %353 = vector.broadcast %cst_91 : f32 to vector<8x128xf32>
    %354 = arith.select %352, %348, %353 : vector<8x128xi1>, vector<8x128xf32>
    %355 = vector.extract_strided_slice %273 {offsets = [0, 9], sizes = [8, 119], strides = [1, 1]} : vector<8x128xf32> to vector<8x119xf32>
    %356 = vector.extract_strided_slice %273 {offsets = [0, 0], sizes = [8, 9], strides = [1, 1]} : vector<8x128xf32> to vector<8x9xf32>
    %357 = tpu.concatenate %355, %356 in 1 : vector<8x119xf32>, vector<8x9xf32> -> vector<8x128xf32>
    %c6_i32_92 = arith.constant 6 : i32
    %358 = vector.broadcast %c6_i32_92 : i32 to vector<1x128xi32>
    %359 = arith.cmpi sle, %280, %358 : vector<1x128xi32>
    %c6_i32_93 = arith.constant 6 : i32
    %360 = vector.broadcast %c6_i32_93 : i32 to vector<1x128xi32>
    %361 = arith.cmpi sle, %282, %360 : vector<1x128xi32>
    %362 = arith.andi %359, %361 : vector<1x128xi1>
    %cst_94 = arith.constant 0.000000e+00 : f32
    %363 = vector.shape_cast %362 : vector<1x128xi1> to vector<1x128xi1>
    %364 = vector.broadcast %363 : vector<1x128xi1> to vector<8x128xi1>
    %365 = vector.broadcast %cst_94 : f32 to vector<8x128xf32>
    %366 = arith.select %364, %357, %365 : vector<8x128xi1>, vector<8x128xf32>
    %367 = vector.shape_cast %294 : vector<8x128xf32> to vector<1x8x128xf32>
    %368 = vector.shape_cast %303 : vector<8x128xf32> to vector<1x8x128xf32>
    %369 = vector.shape_cast %315 : vector<8x128xf32> to vector<1x8x128xf32>
    %370 = vector.shape_cast %324 : vector<8x128xf32> to vector<1x8x128xf32>
    %371 = vector.shape_cast %273 : vector<8x128xf32> to vector<1x8x128xf32>
    %372 = vector.shape_cast %333 : vector<8x128xf32> to vector<1x8x128xf32>
    %373 = vector.shape_cast %345 : vector<8x128xf32> to vector<1x8x128xf32>
    %374 = vector.shape_cast %354 : vector<8x128xf32> to vector<1x8x128xf32>
    %375 = vector.shape_cast %366 : vector<8x128xf32> to vector<1x8x128xf32>
    %376 = tpu.concatenate %367, %368, %369, %370, %371, %372, %373, %374, %375 in 0 : vector<1x8x128xf32>, vector<1x8x128xf32>, vector<1x8x128xf32>, vector<1x8x128xf32>, vector<1x8x128xf32>, vector<1x8x128xf32>, vector<1x8x128xf32>, vector<1x8x128xf32>, vector<1x8x128xf32> -> vector<9x8x128xf32>
    %377 = vector.shape_cast %376 : vector<9x8x128xf32> to vector<72x128xf32>
    %cst_95 = arith.constant dense<0.000000e+00> : vector<8x128xf32>
    %378 = tpu.matmul %274, %377, %cst_95 {dimension_numbers = #tpu.dot_dimension_numbers<[1], [0], [0], [1], [0, 0, 1, 1], [], []>} : vector<8x72xf32>, vector<72x128xf32>, vector<8x128xf32> -> vector<8x128xf32>
    %379 = vector.broadcast %275 : vector<8x1xf32> to vector<8x128xf32>
    %380 = arith.addf %378, %379 : vector<8x128xf32>
    %cst_96 = arith.constant 0.000000e+00 : f32
    %381 = vector.broadcast %cst_96 : f32 to vector<8x128xf32>
    %382 = arith.cmpf oge, %380, %381 : vector<8x128xf32>
    %cst_97 = arith.constant 2.000000e-01 : f32
    %383 = vector.broadcast %cst_97 : f32 to vector<8x128xf32>
    %384 = arith.mulf %383, %380 : vector<8x128xf32>
    %385 = arith.select %382, %380, %384 : vector<8x128xi1>, vector<8x128xf32>
    %386 = vector.extract_strided_slice %385 {offsets = [0, 0], sizes = [8, 64], strides = [1, 1]} : vector<8x128xf32> to vector<8x64xf32>
    %387 = vector.extract_strided_slice %385 {offsets = [0, 64], sizes = [8, 64], strides = [1, 1]} : vector<8x128xf32> to vector<8x64xf32>
    %388 = vector.shape_cast %386 : vector<8x64xf32> to vector<1x8x64xf32>
    %389 = vector.shape_cast %387 : vector<8x64xf32> to vector<1x8x64xf32>
    %390 = tpu.concatenate %388, %389 in 0 : vector<1x8x64xf32>, vector<1x8x64xf32> -> vector<2x8x64xf32>
    %391 = vector.shape_cast %390 : vector<2x8x64xf32> to vector<16x64xf32>
    %c0_98 = arith.constant 0 : index
    %c0_99 = arith.constant 0 : index
    %392 = vector.load %arg9[%c0_98, %c0_99] : memref<8x144xf32, #tpu.memory_space<vmem>>, vector<8x144xf32>
    %c0_100 = arith.constant 0 : index
    %c0_101 = arith.constant 0 : index
    %393 = vector.load %arg10[%c0_100, %c0_101] : memref<8x1xf32, #tpu.memory_space<vmem>>, vector<8x1xf32>
    %394 = tpu.iota {dimensions = array<i32: 1>} : vector<1x64xi32>
    %c63_i32_102 = arith.constant 63 : i32
    %395 = vector.broadcast %c63_i32_102 : i32 to vector<1x64xi32>
    %396 = arith.andi %394, %395 : vector<1x64xi32>
    %c3_i32_103 = arith.constant 3 : i32
    %397 = vector.broadcast %c3_i32_103 : i32 to vector<1x64xi32>
    %398 = arith.shrsi %396, %397 : vector<1x64xi32>
    %c7_i32_104 = arith.constant 7 : i32
    %399 = vector.broadcast %c7_i32_104 : i32 to vector<1x64xi32>
    %400 = arith.andi %394, %399 : vector<1x64xi32>
    %401 = vector.extract_strided_slice %391 {offsets = [0, 55], sizes = [16, 9], strides = [1, 1]} : vector<16x64xf32> to vector<16x9xf32>
    %402 = vector.extract_strided_slice %391 {offsets = [0, 0], sizes = [16, 55], strides = [1, 1]} : vector<16x64xf32> to vector<16x55xf32>
    %403 = tpu.concatenate %401, %402 in 1 : vector<16x9xf32>, vector<16x55xf32> -> vector<16x64xf32>
    %c1_i32_105 = arith.constant 1 : i32
    %404 = vector.broadcast %c1_i32_105 : i32 to vector<1x64xi32>
    %405 = arith.cmpi sge, %398, %404 : vector<1x64xi32>
    %c1_i32_106 = arith.constant 1 : i32
    %406 = vector.broadcast %c1_i32_106 : i32 to vector<1x64xi32>
    %407 = arith.cmpi sge, %400, %406 : vector<1x64xi32>
    %408 = arith.andi %405, %407 : vector<1x64xi1>
    %cst_107 = arith.constant 0.000000e+00 : f32
    %409 = vector.shape_cast %408 : vector<1x64xi1> to vector<1x64xi1>
    %410 = vector.broadcast %409 : vector<1x64xi1> to vector<16x64xi1>
    %411 = vector.broadcast %cst_107 : f32 to vector<16x64xf32>
    %412 = arith.select %410, %403, %411 : vector<16x64xi1>, vector<16x64xf32>
    %413 = vector.extract_strided_slice %391 {offsets = [0, 56], sizes = [16, 8], strides = [1, 1]} : vector<16x64xf32> to vector<16x8xf32>
    %414 = vector.extract_strided_slice %391 {offsets = [0, 0], sizes = [16, 56], strides = [1, 1]} : vector<16x64xf32> to vector<16x56xf32>
    %415 = tpu.concatenate %413, %414 in 1 : vector<16x8xf32>, vector<16x56xf32> -> vector<16x64xf32>
    %c1_i32_108 = arith.constant 1 : i32
    %416 = vector.broadcast %c1_i32_108 : i32 to vector<1x64xi32>
    %417 = arith.cmpi sge, %398, %416 : vector<1x64xi32>
    %cst_109 = arith.constant 0.000000e+00 : f32
    %418 = vector.shape_cast %417 : vector<1x64xi1> to vector<1x64xi1>
    %419 = vector.broadcast %418 : vector<1x64xi1> to vector<16x64xi1>
    %420 = vector.broadcast %cst_109 : f32 to vector<16x64xf32>
    %421 = arith.select %419, %415, %420 : vector<16x64xi1>, vector<16x64xf32>
    %422 = vector.extract_strided_slice %391 {offsets = [0, 57], sizes = [16, 7], strides = [1, 1]} : vector<16x64xf32> to vector<16x7xf32>
    %423 = vector.extract_strided_slice %391 {offsets = [0, 0], sizes = [16, 57], strides = [1, 1]} : vector<16x64xf32> to vector<16x57xf32>
    %424 = tpu.concatenate %422, %423 in 1 : vector<16x7xf32>, vector<16x57xf32> -> vector<16x64xf32>
    %c1_i32_110 = arith.constant 1 : i32
    %425 = vector.broadcast %c1_i32_110 : i32 to vector<1x64xi32>
    %426 = arith.cmpi sge, %398, %425 : vector<1x64xi32>
    %c6_i32_111 = arith.constant 6 : i32
    %427 = vector.broadcast %c6_i32_111 : i32 to vector<1x64xi32>
    %428 = arith.cmpi sle, %400, %427 : vector<1x64xi32>
    %429 = arith.andi %426, %428 : vector<1x64xi1>
    %cst_112 = arith.constant 0.000000e+00 : f32
    %430 = vector.shape_cast %429 : vector<1x64xi1> to vector<1x64xi1>
    %431 = vector.broadcast %430 : vector<1x64xi1> to vector<16x64xi1>
    %432 = vector.broadcast %cst_112 : f32 to vector<16x64xf32>
    %433 = arith.select %431, %424, %432 : vector<16x64xi1>, vector<16x64xf32>
    %434 = vector.extract_strided_slice %391 {offsets = [0, 63], sizes = [16, 1], strides = [1, 1]} : vector<16x64xf32> to vector<16x1xf32>
    %435 = vector.extract_strided_slice %391 {offsets = [0, 0], sizes = [16, 63], strides = [1, 1]} : vector<16x64xf32> to vector<16x63xf32>
    %436 = tpu.concatenate %434, %435 in 1 : vector<16x1xf32>, vector<16x63xf32> -> vector<16x64xf32>
    %c1_i32_113 = arith.constant 1 : i32
    %437 = vector.broadcast %c1_i32_113 : i32 to vector<1x64xi32>
    %438 = arith.cmpi sge, %400, %437 : vector<1x64xi32>
    %cst_114 = arith.constant 0.000000e+00 : f32
    %439 = vector.shape_cast %438 : vector<1x64xi1> to vector<1x64xi1>
    %440 = vector.broadcast %439 : vector<1x64xi1> to vector<16x64xi1>
    %441 = vector.broadcast %cst_114 : f32 to vector<16x64xf32>
    %442 = arith.select %440, %436, %441 : vector<16x64xi1>, vector<16x64xf32>
    %443 = vector.extract_strided_slice %391 {offsets = [0, 1], sizes = [16, 63], strides = [1, 1]} : vector<16x64xf32> to vector<16x63xf32>
    %444 = vector.extract_strided_slice %391 {offsets = [0, 0], sizes = [16, 1], strides = [1, 1]} : vector<16x64xf32> to vector<16x1xf32>
    %445 = tpu.concatenate %443, %444 in 1 : vector<16x63xf32>, vector<16x1xf32> -> vector<16x64xf32>
    %c6_i32_115 = arith.constant 6 : i32
    %446 = vector.broadcast %c6_i32_115 : i32 to vector<1x64xi32>
    %447 = arith.cmpi sle, %400, %446 : vector<1x64xi32>
    %cst_116 = arith.constant 0.000000e+00 : f32
    %448 = vector.shape_cast %447 : vector<1x64xi1> to vector<1x64xi1>
    %449 = vector.broadcast %448 : vector<1x64xi1> to vector<16x64xi1>
    %450 = vector.broadcast %cst_116 : f32 to vector<16x64xf32>
    %451 = arith.select %449, %445, %450 : vector<16x64xi1>, vector<16x64xf32>
    %452 = vector.extract_strided_slice %391 {offsets = [0, 7], sizes = [16, 57], strides = [1, 1]} : vector<16x64xf32> to vector<16x57xf32>
    %453 = vector.extract_strided_slice %391 {offsets = [0, 0], sizes = [16, 7], strides = [1, 1]} : vector<16x64xf32> to vector<16x7xf32>
    %454 = tpu.concatenate %452, %453 in 1 : vector<16x57xf32>, vector<16x7xf32> -> vector<16x64xf32>
    %c6_i32_117 = arith.constant 6 : i32
    %455 = vector.broadcast %c6_i32_117 : i32 to vector<1x64xi32>
    %456 = arith.cmpi sle, %398, %455 : vector<1x64xi32>
    %c1_i32_118 = arith.constant 1 : i32
    %457 = vector.broadcast %c1_i32_118 : i32 to vector<1x64xi32>
    %458 = arith.cmpi sge, %400, %457 : vector<1x64xi32>
    %459 = arith.andi %456, %458 : vector<1x64xi1>
    %cst_119 = arith.constant 0.000000e+00 : f32
    %460 = vector.shape_cast %459 : vector<1x64xi1> to vector<1x64xi1>
    %461 = vector.broadcast %460 : vector<1x64xi1> to vector<16x64xi1>
    %462 = vector.broadcast %cst_119 : f32 to vector<16x64xf32>
    %463 = arith.select %461, %454, %462 : vector<16x64xi1>, vector<16x64xf32>
    %464 = vector.extract_strided_slice %391 {offsets = [0, 8], sizes = [16, 56], strides = [1, 1]} : vector<16x64xf32> to vector<16x56xf32>
    %465 = vector.extract_strided_slice %391 {offsets = [0, 0], sizes = [16, 8], strides = [1, 1]} : vector<16x64xf32> to vector<16x8xf32>
    %466 = tpu.concatenate %464, %465 in 1 : vector<16x56xf32>, vector<16x8xf32> -> vector<16x64xf32>
    %c6_i32_120 = arith.constant 6 : i32
    %467 = vector.broadcast %c6_i32_120 : i32 to vector<1x64xi32>
    %468 = arith.cmpi sle, %398, %467 : vector<1x64xi32>
    %cst_121 = arith.constant 0.000000e+00 : f32
    %469 = vector.shape_cast %468 : vector<1x64xi1> to vector<1x64xi1>
    %470 = vector.broadcast %469 : vector<1x64xi1> to vector<16x64xi1>
    %471 = vector.broadcast %cst_121 : f32 to vector<16x64xf32>
    %472 = arith.select %470, %466, %471 : vector<16x64xi1>, vector<16x64xf32>
    %473 = vector.extract_strided_slice %391 {offsets = [0, 9], sizes = [16, 55], strides = [1, 1]} : vector<16x64xf32> to vector<16x55xf32>
    %474 = vector.extract_strided_slice %391 {offsets = [0, 0], sizes = [16, 9], strides = [1, 1]} : vector<16x64xf32> to vector<16x9xf32>
    %475 = tpu.concatenate %473, %474 in 1 : vector<16x55xf32>, vector<16x9xf32> -> vector<16x64xf32>
    %c6_i32_122 = arith.constant 6 : i32
    %476 = vector.broadcast %c6_i32_122 : i32 to vector<1x64xi32>
    %477 = arith.cmpi sle, %398, %476 : vector<1x64xi32>
    %c6_i32_123 = arith.constant 6 : i32
    %478 = vector.broadcast %c6_i32_123 : i32 to vector<1x64xi32>
    %479 = arith.cmpi sle, %400, %478 : vector<1x64xi32>
    %480 = arith.andi %477, %479 : vector<1x64xi1>
    %cst_124 = arith.constant 0.000000e+00 : f32
    %481 = vector.shape_cast %480 : vector<1x64xi1> to vector<1x64xi1>
    %482 = vector.broadcast %481 : vector<1x64xi1> to vector<16x64xi1>
    %483 = vector.broadcast %cst_124 : f32 to vector<16x64xf32>
    %484 = arith.select %482, %475, %483 : vector<16x64xi1>, vector<16x64xf32>
    %485 = vector.shape_cast %412 : vector<16x64xf32> to vector<1x16x64xf32>
    %486 = vector.shape_cast %421 : vector<16x64xf32> to vector<1x16x64xf32>
    %487 = vector.shape_cast %433 : vector<16x64xf32> to vector<1x16x64xf32>
    %488 = vector.shape_cast %442 : vector<16x64xf32> to vector<1x16x64xf32>
    %489 = vector.shape_cast %391 : vector<16x64xf32> to vector<1x16x64xf32>
    %490 = vector.shape_cast %451 : vector<16x64xf32> to vector<1x16x64xf32>
    %491 = vector.shape_cast %463 : vector<16x64xf32> to vector<1x16x64xf32>
    %492 = vector.shape_cast %472 : vector<16x64xf32> to vector<1x16x64xf32>
    %493 = vector.shape_cast %484 : vector<16x64xf32> to vector<1x16x64xf32>
    %494 = tpu.concatenate %485, %486, %487, %488, %489, %490, %491, %492, %493 in 0 : vector<1x16x64xf32>, vector<1x16x64xf32>, vector<1x16x64xf32>, vector<1x16x64xf32>, vector<1x16x64xf32>, vector<1x16x64xf32>, vector<1x16x64xf32>, vector<1x16x64xf32>, vector<1x16x64xf32> -> vector<9x16x64xf32>
    %495 = vector.shape_cast %494 : vector<9x16x64xf32> to vector<144x64xf32>
    %cst_125 = arith.constant dense<0.000000e+00> : vector<8x64xf32>
    %496 = tpu.matmul %392, %495, %cst_125 {dimension_numbers = #tpu.dot_dimension_numbers<[1], [0], [0], [1], [0, 0, 1, 1], [], []>} : vector<8x144xf32>, vector<144x64xf32>, vector<8x64xf32> -> vector<8x64xf32>
    %497 = vector.broadcast %393 : vector<8x1xf32> to vector<8x64xf32>
    %498 = arith.addf %496, %497 : vector<8x64xf32>
    %cst_126 = arith.constant 0.000000e+00 : f32
    %499 = vector.broadcast %cst_126 : f32 to vector<8x64xf32>
    %500 = arith.cmpf oge, %498, %499 : vector<8x64xf32>
    %cst_127 = arith.constant 2.000000e-01 : f32
    %501 = vector.broadcast %cst_127 : f32 to vector<8x64xf32>
    %502 = arith.mulf %501, %498 : vector<8x64xf32>
    %503 = arith.select %500, %498, %502 : vector<8x64xi1>, vector<8x64xf32>
    %504 = vector.extract_strided_slice %503 {offsets = [0, 1], sizes = [8, 63], strides = [1, 1]} : vector<8x64xf32> to vector<8x63xf32>
    %505 = vector.extract_strided_slice %503 {offsets = [0, 0], sizes = [8, 1], strides = [1, 1]} : vector<8x64xf32> to vector<8x1xf32>
    %506 = tpu.concatenate %504, %505 in 1 : vector<8x63xf32>, vector<8x1xf32> -> vector<8x64xf32>
    %507 = arith.maximumf %503, %506 : vector<8x64xf32>
    %508 = vector.extract_strided_slice %507 {offsets = [0, 8], sizes = [8, 56], strides = [1, 1]} : vector<8x64xf32> to vector<8x56xf32>
    %509 = vector.extract_strided_slice %507 {offsets = [0, 0], sizes = [8, 8], strides = [1, 1]} : vector<8x64xf32> to vector<8x8xf32>
    %510 = tpu.concatenate %508, %509 in 1 : vector<8x56xf32>, vector<8x8xf32> -> vector<8x64xf32>
    %511 = arith.maximumf %507, %510 : vector<8x64xf32>
    %512 = tpu.iota {dimensions = array<i32: 0>} : vector<64x16xi32>
    %513 = tpu.iota {dimensions = array<i32: 1>} : vector<64x16xi32>
    %c4_i32_128 = arith.constant 4 : i32
    %514 = vector.broadcast %c4_i32_128 : i32 to vector<64x16xi32>
    %515 = arith.shrsi %513, %514 : vector<64x16xi32>
    %c15_i32_129 = arith.constant 15 : i32
    %516 = vector.broadcast %c15_i32_129 : i32 to vector<64x16xi32>
    %517 = arith.andi %513, %516 : vector<64x16xi32>
    %c64_i32 = arith.constant 64 : i32
    %518 = vector.broadcast %c64_i32 : i32 to vector<64x16xi32>
    %519 = arith.muli %515, %518 : vector<64x16xi32>
    %c2_i32_130 = arith.constant 2 : i32
    %520 = vector.broadcast %c2_i32_130 : i32 to vector<64x16xi32>
    %521 = arith.shrsi %517, %520 : vector<64x16xi32>
    %c8_i32 = arith.constant 8 : i32
    %522 = vector.broadcast %c8_i32 : i32 to vector<64x16xi32>
    %523 = arith.muli %521, %522 : vector<64x16xi32>
    %c3_i32_131 = arith.constant 3 : i32
    %524 = vector.broadcast %c3_i32_131 : i32 to vector<64x16xi32>
    %525 = arith.andi %517, %524 : vector<64x16xi32>
    %526 = arith.addi %523, %525 : vector<64x16xi32>
    %c2_i32_132 = arith.constant 2 : i32
    %527 = vector.broadcast %c2_i32_132 : i32 to vector<64x16xi32>
    %528 = arith.muli %526, %527 : vector<64x16xi32>
    %529 = arith.addi %519, %528 : vector<64x16xi32>
    %530 = arith.cmpi eq, %512, %529 : vector<64x16xi32>
    %cst_133 = arith.constant 1.000000e+00 : f32
    %cst_134 = arith.constant 0.000000e+00 : f32
    %531 = vector.broadcast %cst_133 : f32 to vector<64x16xf32>
    %532 = vector.broadcast %cst_134 : f32 to vector<64x16xf32>
    %533 = arith.select %530, %531, %532 : vector<64x16xi1>, vector<64x16xf32>
    %cst_135 = arith.constant dense<0.000000e+00> : vector<8x16xf32>
    %534 = tpu.matmul %511, %533, %cst_135 {dimension_numbers = #tpu.dot_dimension_numbers<[1], [0], [0], [1], [0, 0, 1, 1], [], []>} : vector<8x64xf32>, vector<64x16xf32>, vector<8x16xf32> -> vector<8x16xf32>
    %c0_136 = arith.constant 0 : index
    %c0_137 = arith.constant 0 : index
    %535 = vector.load %arg11[%c0_136, %c0_137] : memref<8x72xf32, #tpu.memory_space<vmem>>, vector<8x72xf32>
    %c0_138 = arith.constant 0 : index
    %c0_139 = arith.constant 0 : index
    %536 = vector.load %arg12[%c0_138, %c0_139] : memref<8x1xf32, #tpu.memory_space<vmem>>, vector<8x1xf32>
    %537 = tpu.iota {dimensions = array<i32: 1>} : vector<1x16xi32>
    %c15_i32_140 = arith.constant 15 : i32
    %538 = vector.broadcast %c15_i32_140 : i32 to vector<1x16xi32>
    %539 = arith.andi %537, %538 : vector<1x16xi32>
    %c2_i32_141 = arith.constant 2 : i32
    %540 = vector.broadcast %c2_i32_141 : i32 to vector<1x16xi32>
    %541 = arith.shrsi %539, %540 : vector<1x16xi32>
    %c3_i32_142 = arith.constant 3 : i32
    %542 = vector.broadcast %c3_i32_142 : i32 to vector<1x16xi32>
    %543 = arith.andi %537, %542 : vector<1x16xi32>
    %544 = vector.extract_strided_slice %534 {offsets = [0, 11], sizes = [8, 5], strides = [1, 1]} : vector<8x16xf32> to vector<8x5xf32>
    %545 = vector.extract_strided_slice %534 {offsets = [0, 0], sizes = [8, 11], strides = [1, 1]} : vector<8x16xf32> to vector<8x11xf32>
    %546 = tpu.concatenate %544, %545 in 1 : vector<8x5xf32>, vector<8x11xf32> -> vector<8x16xf32>
    %c1_i32_143 = arith.constant 1 : i32
    %547 = vector.broadcast %c1_i32_143 : i32 to vector<1x16xi32>
    %548 = arith.cmpi sge, %541, %547 : vector<1x16xi32>
    %c1_i32_144 = arith.constant 1 : i32
    %549 = vector.broadcast %c1_i32_144 : i32 to vector<1x16xi32>
    %550 = arith.cmpi sge, %543, %549 : vector<1x16xi32>
    %551 = arith.andi %548, %550 : vector<1x16xi1>
    %cst_145 = arith.constant 0.000000e+00 : f32
    %552 = vector.shape_cast %551 : vector<1x16xi1> to vector<1x16xi1>
    %553 = vector.broadcast %552 : vector<1x16xi1> to vector<8x16xi1>
    %554 = vector.broadcast %cst_145 : f32 to vector<8x16xf32>
    %555 = arith.select %553, %546, %554 : vector<8x16xi1>, vector<8x16xf32>
    %556 = vector.extract_strided_slice %534 {offsets = [0, 12], sizes = [8, 4], strides = [1, 1]} : vector<8x16xf32> to vector<8x4xf32>
    %557 = vector.extract_strided_slice %534 {offsets = [0, 0], sizes = [8, 12], strides = [1, 1]} : vector<8x16xf32> to vector<8x12xf32>
    %558 = tpu.concatenate %556, %557 in 1 : vector<8x4xf32>, vector<8x12xf32> -> vector<8x16xf32>
    %c1_i32_146 = arith.constant 1 : i32
    %559 = vector.broadcast %c1_i32_146 : i32 to vector<1x16xi32>
    %560 = arith.cmpi sge, %541, %559 : vector<1x16xi32>
    %cst_147 = arith.constant 0.000000e+00 : f32
    %561 = vector.shape_cast %560 : vector<1x16xi1> to vector<1x16xi1>
    %562 = vector.broadcast %561 : vector<1x16xi1> to vector<8x16xi1>
    %563 = vector.broadcast %cst_147 : f32 to vector<8x16xf32>
    %564 = arith.select %562, %558, %563 : vector<8x16xi1>, vector<8x16xf32>
    %565 = vector.extract_strided_slice %534 {offsets = [0, 13], sizes = [8, 3], strides = [1, 1]} : vector<8x16xf32> to vector<8x3xf32>
    %566 = vector.extract_strided_slice %534 {offsets = [0, 0], sizes = [8, 13], strides = [1, 1]} : vector<8x16xf32> to vector<8x13xf32>
    %567 = tpu.concatenate %565, %566 in 1 : vector<8x3xf32>, vector<8x13xf32> -> vector<8x16xf32>
    %c1_i32_148 = arith.constant 1 : i32
    %568 = vector.broadcast %c1_i32_148 : i32 to vector<1x16xi32>
    %569 = arith.cmpi sge, %541, %568 : vector<1x16xi32>
    %c2_i32_149 = arith.constant 2 : i32
    %570 = vector.broadcast %c2_i32_149 : i32 to vector<1x16xi32>
    %571 = arith.cmpi sle, %543, %570 : vector<1x16xi32>
    %572 = arith.andi %569, %571 : vector<1x16xi1>
    %cst_150 = arith.constant 0.000000e+00 : f32
    %573 = vector.shape_cast %572 : vector<1x16xi1> to vector<1x16xi1>
    %574 = vector.broadcast %573 : vector<1x16xi1> to vector<8x16xi1>
    %575 = vector.broadcast %cst_150 : f32 to vector<8x16xf32>
    %576 = arith.select %574, %567, %575 : vector<8x16xi1>, vector<8x16xf32>
    %577 = vector.extract_strided_slice %534 {offsets = [0, 15], sizes = [8, 1], strides = [1, 1]} : vector<8x16xf32> to vector<8x1xf32>
    %578 = vector.extract_strided_slice %534 {offsets = [0, 0], sizes = [8, 15], strides = [1, 1]} : vector<8x16xf32> to vector<8x15xf32>
    %579 = tpu.concatenate %577, %578 in 1 : vector<8x1xf32>, vector<8x15xf32> -> vector<8x16xf32>
    %c1_i32_151 = arith.constant 1 : i32
    %580 = vector.broadcast %c1_i32_151 : i32 to vector<1x16xi32>
    %581 = arith.cmpi sge, %543, %580 : vector<1x16xi32>
    %cst_152 = arith.constant 0.000000e+00 : f32
    %582 = vector.shape_cast %581 : vector<1x16xi1> to vector<1x16xi1>
    %583 = vector.broadcast %582 : vector<1x16xi1> to vector<8x16xi1>
    %584 = vector.broadcast %cst_152 : f32 to vector<8x16xf32>
    %585 = arith.select %583, %579, %584 : vector<8x16xi1>, vector<8x16xf32>
    %586 = vector.extract_strided_slice %534 {offsets = [0, 1], sizes = [8, 15], strides = [1, 1]} : vector<8x16xf32> to vector<8x15xf32>
    %587 = vector.extract_strided_slice %534 {offsets = [0, 0], sizes = [8, 1], strides = [1, 1]} : vector<8x16xf32> to vector<8x1xf32>
    %588 = tpu.concatenate %586, %587 in 1 : vector<8x15xf32>, vector<8x1xf32> -> vector<8x16xf32>
    %c2_i32_153 = arith.constant 2 : i32
    %589 = vector.broadcast %c2_i32_153 : i32 to vector<1x16xi32>
    %590 = arith.cmpi sle, %543, %589 : vector<1x16xi32>
    %cst_154 = arith.constant 0.000000e+00 : f32
    %591 = vector.shape_cast %590 : vector<1x16xi1> to vector<1x16xi1>
    %592 = vector.broadcast %591 : vector<1x16xi1> to vector<8x16xi1>
    %593 = vector.broadcast %cst_154 : f32 to vector<8x16xf32>
    %594 = arith.select %592, %588, %593 : vector<8x16xi1>, vector<8x16xf32>
    %595 = vector.extract_strided_slice %534 {offsets = [0, 3], sizes = [8, 13], strides = [1, 1]} : vector<8x16xf32> to vector<8x13xf32>
    %596 = vector.extract_strided_slice %534 {offsets = [0, 0], sizes = [8, 3], strides = [1, 1]} : vector<8x16xf32> to vector<8x3xf32>
    %597 = tpu.concatenate %595, %596 in 1 : vector<8x13xf32>, vector<8x3xf32> -> vector<8x16xf32>
    %c2_i32_155 = arith.constant 2 : i32
    %598 = vector.broadcast %c2_i32_155 : i32 to vector<1x16xi32>
    %599 = arith.cmpi sle, %541, %598 : vector<1x16xi32>
    %c1_i32_156 = arith.constant 1 : i32
    %600 = vector.broadcast %c1_i32_156 : i32 to vector<1x16xi32>
    %601 = arith.cmpi sge, %543, %600 : vector<1x16xi32>
    %602 = arith.andi %599, %601 : vector<1x16xi1>
    %cst_157 = arith.constant 0.000000e+00 : f32
    %603 = vector.shape_cast %602 : vector<1x16xi1> to vector<1x16xi1>
    %604 = vector.broadcast %603 : vector<1x16xi1> to vector<8x16xi1>
    %605 = vector.broadcast %cst_157 : f32 to vector<8x16xf32>
    %606 = arith.select %604, %597, %605 : vector<8x16xi1>, vector<8x16xf32>
    %607 = vector.extract_strided_slice %534 {offsets = [0, 4], sizes = [8, 12], strides = [1, 1]} : vector<8x16xf32> to vector<8x12xf32>
    %608 = vector.extract_strided_slice %534 {offsets = [0, 0], sizes = [8, 4], strides = [1, 1]} : vector<8x16xf32> to vector<8x4xf32>
    %609 = tpu.concatenate %607, %608 in 1 : vector<8x12xf32>, vector<8x4xf32> -> vector<8x16xf32>
    %c2_i32_158 = arith.constant 2 : i32
    %610 = vector.broadcast %c2_i32_158 : i32 to vector<1x16xi32>
    %611 = arith.cmpi sle, %541, %610 : vector<1x16xi32>
    %cst_159 = arith.constant 0.000000e+00 : f32
    %612 = vector.shape_cast %611 : vector<1x16xi1> to vector<1x16xi1>
    %613 = vector.broadcast %612 : vector<1x16xi1> to vector<8x16xi1>
    %614 = vector.broadcast %cst_159 : f32 to vector<8x16xf32>
    %615 = arith.select %613, %609, %614 : vector<8x16xi1>, vector<8x16xf32>
    %616 = vector.extract_strided_slice %534 {offsets = [0, 5], sizes = [8, 11], strides = [1, 1]} : vector<8x16xf32> to vector<8x11xf32>
    %617 = vector.extract_strided_slice %534 {offsets = [0, 0], sizes = [8, 5], strides = [1, 1]} : vector<8x16xf32> to vector<8x5xf32>
    %618 = tpu.concatenate %616, %617 in 1 : vector<8x11xf32>, vector<8x5xf32> -> vector<8x16xf32>
    %c2_i32_160 = arith.constant 2 : i32
    %619 = vector.broadcast %c2_i32_160 : i32 to vector<1x16xi32>
    %620 = arith.cmpi sle, %541, %619 : vector<1x16xi32>
    %c2_i32_161 = arith.constant 2 : i32
    %621 = vector.broadcast %c2_i32_161 : i32 to vector<1x16xi32>
    %622 = arith.cmpi sle, %543, %621 : vector<1x16xi32>
    %623 = arith.andi %620, %622 : vector<1x16xi1>
    %cst_162 = arith.constant 0.000000e+00 : f32
    %624 = vector.shape_cast %623 : vector<1x16xi1> to vector<1x16xi1>
    %625 = vector.broadcast %624 : vector<1x16xi1> to vector<8x16xi1>
    %626 = vector.broadcast %cst_162 : f32 to vector<8x16xf32>
    %627 = arith.select %625, %618, %626 : vector<8x16xi1>, vector<8x16xf32>
    %628 = vector.shape_cast %555 : vector<8x16xf32> to vector<1x8x16xf32>
    %629 = vector.shape_cast %564 : vector<8x16xf32> to vector<1x8x16xf32>
    %630 = vector.shape_cast %576 : vector<8x16xf32> to vector<1x8x16xf32>
    %631 = vector.shape_cast %585 : vector<8x16xf32> to vector<1x8x16xf32>
    %632 = vector.shape_cast %534 : vector<8x16xf32> to vector<1x8x16xf32>
    %633 = vector.shape_cast %594 : vector<8x16xf32> to vector<1x8x16xf32>
    %634 = vector.shape_cast %606 : vector<8x16xf32> to vector<1x8x16xf32>
    %635 = vector.shape_cast %615 : vector<8x16xf32> to vector<1x8x16xf32>
    %636 = vector.shape_cast %627 : vector<8x16xf32> to vector<1x8x16xf32>
    %637 = tpu.concatenate %628, %629, %630, %631, %632, %633, %634, %635, %636 in 0 : vector<1x8x16xf32>, vector<1x8x16xf32>, vector<1x8x16xf32>, vector<1x8x16xf32>, vector<1x8x16xf32>, vector<1x8x16xf32>, vector<1x8x16xf32>, vector<1x8x16xf32>, vector<1x8x16xf32> -> vector<9x8x16xf32>
    %638 = vector.shape_cast %637 : vector<9x8x16xf32> to vector<72x16xf32>
    %cst_163 = arith.constant dense<0.000000e+00> : vector<8x16xf32>
    %639 = tpu.matmul %535, %638, %cst_163 {dimension_numbers = #tpu.dot_dimension_numbers<[1], [0], [0], [1], [0, 0, 1, 1], [], []>} : vector<8x72xf32>, vector<72x16xf32>, vector<8x16xf32> -> vector<8x16xf32>
    %640 = vector.broadcast %536 : vector<8x1xf32> to vector<8x16xf32>
    %641 = arith.addf %639, %640 : vector<8x16xf32>
    %cst_164 = arith.constant 0.000000e+00 : f32
    %642 = vector.broadcast %cst_164 : f32 to vector<8x16xf32>
    %643 = arith.cmpf oge, %641, %642 : vector<8x16xf32>
    %cst_165 = arith.constant 2.000000e-01 : f32
    %644 = vector.broadcast %cst_165 : f32 to vector<8x16xf32>
    %645 = arith.mulf %644, %641 : vector<8x16xf32>
    %646 = arith.select %643, %641, %645 : vector<8x16xi1>, vector<8x16xf32>
    %647 = tpu.iota {dimensions = array<i32: 0>} : vector<16x64xi32>
    %648 = tpu.iota {dimensions = array<i32: 1>} : vector<16x64xi32>
    %c6_i32_166 = arith.constant 6 : i32
    %649 = vector.broadcast %c6_i32_166 : i32 to vector<16x64xi32>
    %650 = arith.shrsi %648, %649 : vector<16x64xi32>
    %c63_i32_167 = arith.constant 63 : i32
    %651 = vector.broadcast %c63_i32_167 : i32 to vector<16x64xi32>
    %652 = arith.andi %648, %651 : vector<16x64xi32>
    %c16_i32_168 = arith.constant 16 : i32
    %653 = vector.broadcast %c16_i32_168 : i32 to vector<16x64xi32>
    %654 = arith.muli %650, %653 : vector<16x64xi32>
    %c3_i32_169 = arith.constant 3 : i32
    %655 = vector.broadcast %c3_i32_169 : i32 to vector<16x64xi32>
    %656 = arith.shrsi %652, %655 : vector<16x64xi32>
    %c1_i32_170 = arith.constant 1 : i32
    %657 = vector.broadcast %c1_i32_170 : i32 to vector<16x64xi32>
    %658 = arith.shrsi %656, %657 : vector<16x64xi32>
    %c4_i32_171 = arith.constant 4 : i32
    %659 = vector.broadcast %c4_i32_171 : i32 to vector<16x64xi32>
    %660 = arith.muli %658, %659 : vector<16x64xi32>
    %661 = arith.addi %654, %660 : vector<16x64xi32>
    %c7_i32_172 = arith.constant 7 : i32
    %662 = vector.broadcast %c7_i32_172 : i32 to vector<16x64xi32>
    %663 = arith.andi %652, %662 : vector<16x64xi32>
    %c1_i32_173 = arith.constant 1 : i32
    %664 = vector.broadcast %c1_i32_173 : i32 to vector<16x64xi32>
    %665 = arith.shrsi %663, %664 : vector<16x64xi32>
    %666 = arith.addi %661, %665 : vector<16x64xi32>
    %667 = arith.cmpi eq, %647, %666 : vector<16x64xi32>
    %cst_174 = arith.constant 1.000000e+00 : f32
    %cst_175 = arith.constant 0.000000e+00 : f32
    %668 = vector.broadcast %cst_174 : f32 to vector<16x64xf32>
    %669 = vector.broadcast %cst_175 : f32 to vector<16x64xf32>
    %670 = arith.select %667, %668, %669 : vector<16x64xi1>, vector<16x64xf32>
    %cst_176 = arith.constant dense<0.000000e+00> : vector<8x64xf32>
    %671 = tpu.matmul %646, %670, %cst_176 {dimension_numbers = #tpu.dot_dimension_numbers<[1], [0], [0], [1], [0, 0, 1, 1], [], []>} : vector<8x16xf32>, vector<16x64xf32>, vector<8x64xf32> -> vector<8x64xf32>
    %672 = vector.shape_cast %671 : vector<8x64xf32> to vector<1x8x64xf32>
    %673 = vector.shape_cast %503 : vector<8x64xf32> to vector<1x8x64xf32>
    %674 = tpu.concatenate %672, %673 in 0 : vector<1x8x64xf32>, vector<1x8x64xf32> -> vector<2x8x64xf32>
    %675 = vector.shape_cast %674 : vector<2x8x64xf32> to vector<16x64xf32>
    %c0_177 = arith.constant 0 : index
    %c0_178 = arith.constant 0 : index
    %676 = vector.load %arg13[%c0_177, %c0_178] : memref<8x144xf32, #tpu.memory_space<vmem>>, vector<8x144xf32>
    %c0_179 = arith.constant 0 : index
    %c0_180 = arith.constant 0 : index
    %677 = vector.load %arg14[%c0_179, %c0_180] : memref<8x1xf32, #tpu.memory_space<vmem>>, vector<8x1xf32>
    %678 = tpu.iota {dimensions = array<i32: 1>} : vector<1x64xi32>
    %c63_i32_181 = arith.constant 63 : i32
    %679 = vector.broadcast %c63_i32_181 : i32 to vector<1x64xi32>
    %680 = arith.andi %678, %679 : vector<1x64xi32>
    %c3_i32_182 = arith.constant 3 : i32
    %681 = vector.broadcast %c3_i32_182 : i32 to vector<1x64xi32>
    %682 = arith.shrsi %680, %681 : vector<1x64xi32>
    %c7_i32_183 = arith.constant 7 : i32
    %683 = vector.broadcast %c7_i32_183 : i32 to vector<1x64xi32>
    %684 = arith.andi %678, %683 : vector<1x64xi32>
    %685 = vector.extract_strided_slice %675 {offsets = [0, 55], sizes = [16, 9], strides = [1, 1]} : vector<16x64xf32> to vector<16x9xf32>
    %686 = vector.extract_strided_slice %675 {offsets = [0, 0], sizes = [16, 55], strides = [1, 1]} : vector<16x64xf32> to vector<16x55xf32>
    %687 = tpu.concatenate %685, %686 in 1 : vector<16x9xf32>, vector<16x55xf32> -> vector<16x64xf32>
    %c1_i32_184 = arith.constant 1 : i32
    %688 = vector.broadcast %c1_i32_184 : i32 to vector<1x64xi32>
    %689 = arith.cmpi sge, %682, %688 : vector<1x64xi32>
    %c1_i32_185 = arith.constant 1 : i32
    %690 = vector.broadcast %c1_i32_185 : i32 to vector<1x64xi32>
    %691 = arith.cmpi sge, %684, %690 : vector<1x64xi32>
    %692 = arith.andi %689, %691 : vector<1x64xi1>
    %cst_186 = arith.constant 0.000000e+00 : f32
    %693 = vector.shape_cast %692 : vector<1x64xi1> to vector<1x64xi1>
    %694 = vector.broadcast %693 : vector<1x64xi1> to vector<16x64xi1>
    %695 = vector.broadcast %cst_186 : f32 to vector<16x64xf32>
    %696 = arith.select %694, %687, %695 : vector<16x64xi1>, vector<16x64xf32>
    %697 = vector.extract_strided_slice %675 {offsets = [0, 56], sizes = [16, 8], strides = [1, 1]} : vector<16x64xf32> to vector<16x8xf32>
    %698 = vector.extract_strided_slice %675 {offsets = [0, 0], sizes = [16, 56], strides = [1, 1]} : vector<16x64xf32> to vector<16x56xf32>
    %699 = tpu.concatenate %697, %698 in 1 : vector<16x8xf32>, vector<16x56xf32> -> vector<16x64xf32>
    %c1_i32_187 = arith.constant 1 : i32
    %700 = vector.broadcast %c1_i32_187 : i32 to vector<1x64xi32>
    %701 = arith.cmpi sge, %682, %700 : vector<1x64xi32>
    %cst_188 = arith.constant 0.000000e+00 : f32
    %702 = vector.shape_cast %701 : vector<1x64xi1> to vector<1x64xi1>
    %703 = vector.broadcast %702 : vector<1x64xi1> to vector<16x64xi1>
    %704 = vector.broadcast %cst_188 : f32 to vector<16x64xf32>
    %705 = arith.select %703, %699, %704 : vector<16x64xi1>, vector<16x64xf32>
    %706 = vector.extract_strided_slice %675 {offsets = [0, 57], sizes = [16, 7], strides = [1, 1]} : vector<16x64xf32> to vector<16x7xf32>
    %707 = vector.extract_strided_slice %675 {offsets = [0, 0], sizes = [16, 57], strides = [1, 1]} : vector<16x64xf32> to vector<16x57xf32>
    %708 = tpu.concatenate %706, %707 in 1 : vector<16x7xf32>, vector<16x57xf32> -> vector<16x64xf32>
    %c1_i32_189 = arith.constant 1 : i32
    %709 = vector.broadcast %c1_i32_189 : i32 to vector<1x64xi32>
    %710 = arith.cmpi sge, %682, %709 : vector<1x64xi32>
    %c6_i32_190 = arith.constant 6 : i32
    %711 = vector.broadcast %c6_i32_190 : i32 to vector<1x64xi32>
    %712 = arith.cmpi sle, %684, %711 : vector<1x64xi32>
    %713 = arith.andi %710, %712 : vector<1x64xi1>
    %cst_191 = arith.constant 0.000000e+00 : f32
    %714 = vector.shape_cast %713 : vector<1x64xi1> to vector<1x64xi1>
    %715 = vector.broadcast %714 : vector<1x64xi1> to vector<16x64xi1>
    %716 = vector.broadcast %cst_191 : f32 to vector<16x64xf32>
    %717 = arith.select %715, %708, %716 : vector<16x64xi1>, vector<16x64xf32>
    %718 = vector.extract_strided_slice %675 {offsets = [0, 63], sizes = [16, 1], strides = [1, 1]} : vector<16x64xf32> to vector<16x1xf32>
    %719 = vector.extract_strided_slice %675 {offsets = [0, 0], sizes = [16, 63], strides = [1, 1]} : vector<16x64xf32> to vector<16x63xf32>
    %720 = tpu.concatenate %718, %719 in 1 : vector<16x1xf32>, vector<16x63xf32> -> vector<16x64xf32>
    %c1_i32_192 = arith.constant 1 : i32
    %721 = vector.broadcast %c1_i32_192 : i32 to vector<1x64xi32>
    %722 = arith.cmpi sge, %684, %721 : vector<1x64xi32>
    %cst_193 = arith.constant 0.000000e+00 : f32
    %723 = vector.shape_cast %722 : vector<1x64xi1> to vector<1x64xi1>
    %724 = vector.broadcast %723 : vector<1x64xi1> to vector<16x64xi1>
    %725 = vector.broadcast %cst_193 : f32 to vector<16x64xf32>
    %726 = arith.select %724, %720, %725 : vector<16x64xi1>, vector<16x64xf32>
    %727 = vector.extract_strided_slice %675 {offsets = [0, 1], sizes = [16, 63], strides = [1, 1]} : vector<16x64xf32> to vector<16x63xf32>
    %728 = vector.extract_strided_slice %675 {offsets = [0, 0], sizes = [16, 1], strides = [1, 1]} : vector<16x64xf32> to vector<16x1xf32>
    %729 = tpu.concatenate %727, %728 in 1 : vector<16x63xf32>, vector<16x1xf32> -> vector<16x64xf32>
    %c6_i32_194 = arith.constant 6 : i32
    %730 = vector.broadcast %c6_i32_194 : i32 to vector<1x64xi32>
    %731 = arith.cmpi sle, %684, %730 : vector<1x64xi32>
    %cst_195 = arith.constant 0.000000e+00 : f32
    %732 = vector.shape_cast %731 : vector<1x64xi1> to vector<1x64xi1>
    %733 = vector.broadcast %732 : vector<1x64xi1> to vector<16x64xi1>
    %734 = vector.broadcast %cst_195 : f32 to vector<16x64xf32>
    %735 = arith.select %733, %729, %734 : vector<16x64xi1>, vector<16x64xf32>
    %736 = vector.extract_strided_slice %675 {offsets = [0, 7], sizes = [16, 57], strides = [1, 1]} : vector<16x64xf32> to vector<16x57xf32>
    %737 = vector.extract_strided_slice %675 {offsets = [0, 0], sizes = [16, 7], strides = [1, 1]} : vector<16x64xf32> to vector<16x7xf32>
    %738 = tpu.concatenate %736, %737 in 1 : vector<16x57xf32>, vector<16x7xf32> -> vector<16x64xf32>
    %c6_i32_196 = arith.constant 6 : i32
    %739 = vector.broadcast %c6_i32_196 : i32 to vector<1x64xi32>
    %740 = arith.cmpi sle, %682, %739 : vector<1x64xi32>
    %c1_i32_197 = arith.constant 1 : i32
    %741 = vector.broadcast %c1_i32_197 : i32 to vector<1x64xi32>
    %742 = arith.cmpi sge, %684, %741 : vector<1x64xi32>
    %743 = arith.andi %740, %742 : vector<1x64xi1>
    %cst_198 = arith.constant 0.000000e+00 : f32
    %744 = vector.shape_cast %743 : vector<1x64xi1> to vector<1x64xi1>
    %745 = vector.broadcast %744 : vector<1x64xi1> to vector<16x64xi1>
    %746 = vector.broadcast %cst_198 : f32 to vector<16x64xf32>
    %747 = arith.select %745, %738, %746 : vector<16x64xi1>, vector<16x64xf32>
    %748 = vector.extract_strided_slice %675 {offsets = [0, 8], sizes = [16, 56], strides = [1, 1]} : vector<16x64xf32> to vector<16x56xf32>
    %749 = vector.extract_strided_slice %675 {offsets = [0, 0], sizes = [16, 8], strides = [1, 1]} : vector<16x64xf32> to vector<16x8xf32>
    %750 = tpu.concatenate %748, %749 in 1 : vector<16x56xf32>, vector<16x8xf32> -> vector<16x64xf32>
    %c6_i32_199 = arith.constant 6 : i32
    %751 = vector.broadcast %c6_i32_199 : i32 to vector<1x64xi32>
    %752 = arith.cmpi sle, %682, %751 : vector<1x64xi32>
    %cst_200 = arith.constant 0.000000e+00 : f32
    %753 = vector.shape_cast %752 : vector<1x64xi1> to vector<1x64xi1>
    %754 = vector.broadcast %753 : vector<1x64xi1> to vector<16x64xi1>
    %755 = vector.broadcast %cst_200 : f32 to vector<16x64xf32>
    %756 = arith.select %754, %750, %755 : vector<16x64xi1>, vector<16x64xf32>
    %757 = vector.extract_strided_slice %675 {offsets = [0, 9], sizes = [16, 55], strides = [1, 1]} : vector<16x64xf32> to vector<16x55xf32>
    %758 = vector.extract_strided_slice %675 {offsets = [0, 0], sizes = [16, 9], strides = [1, 1]} : vector<16x64xf32> to vector<16x9xf32>
    %759 = tpu.concatenate %757, %758 in 1 : vector<16x55xf32>, vector<16x9xf32> -> vector<16x64xf32>
    %c6_i32_201 = arith.constant 6 : i32
    %760 = vector.broadcast %c6_i32_201 : i32 to vector<1x64xi32>
    %761 = arith.cmpi sle, %682, %760 : vector<1x64xi32>
    %c6_i32_202 = arith.constant 6 : i32
    %762 = vector.broadcast %c6_i32_202 : i32 to vector<1x64xi32>
    %763 = arith.cmpi sle, %684, %762 : vector<1x64xi32>
    %764 = arith.andi %761, %763 : vector<1x64xi1>
    %cst_203 = arith.constant 0.000000e+00 : f32
    %765 = vector.shape_cast %764 : vector<1x64xi1> to vector<1x64xi1>
    %766 = vector.broadcast %765 : vector<1x64xi1> to vector<16x64xi1>
    %767 = vector.broadcast %cst_203 : f32 to vector<16x64xf32>
    %768 = arith.select %766, %759, %767 : vector<16x64xi1>, vector<16x64xf32>
    %769 = vector.shape_cast %696 : vector<16x64xf32> to vector<1x16x64xf32>
    %770 = vector.shape_cast %705 : vector<16x64xf32> to vector<1x16x64xf32>
    %771 = vector.shape_cast %717 : vector<16x64xf32> to vector<1x16x64xf32>
    %772 = vector.shape_cast %726 : vector<16x64xf32> to vector<1x16x64xf32>
    %773 = vector.shape_cast %675 : vector<16x64xf32> to vector<1x16x64xf32>
    %774 = vector.shape_cast %735 : vector<16x64xf32> to vector<1x16x64xf32>
    %775 = vector.shape_cast %747 : vector<16x64xf32> to vector<1x16x64xf32>
    %776 = vector.shape_cast %756 : vector<16x64xf32> to vector<1x16x64xf32>
    %777 = vector.shape_cast %768 : vector<16x64xf32> to vector<1x16x64xf32>
    %778 = tpu.concatenate %769, %770, %771, %772, %773, %774, %775, %776, %777 in 0 : vector<1x16x64xf32>, vector<1x16x64xf32>, vector<1x16x64xf32>, vector<1x16x64xf32>, vector<1x16x64xf32>, vector<1x16x64xf32>, vector<1x16x64xf32>, vector<1x16x64xf32>, vector<1x16x64xf32> -> vector<9x16x64xf32>
    %779 = vector.shape_cast %778 : vector<9x16x64xf32> to vector<144x64xf32>
    %cst_204 = arith.constant dense<0.000000e+00> : vector<8x64xf32>
    %780 = tpu.matmul %676, %779, %cst_204 {dimension_numbers = #tpu.dot_dimension_numbers<[1], [0], [0], [1], [0, 0, 1, 1], [], []>} : vector<8x144xf32>, vector<144x64xf32>, vector<8x64xf32> -> vector<8x64xf32>
    %781 = vector.broadcast %677 : vector<8x1xf32> to vector<8x64xf32>
    %782 = arith.addf %780, %781 : vector<8x64xf32>
    %cst_205 = arith.constant 0.000000e+00 : f32
    %783 = vector.broadcast %cst_205 : f32 to vector<8x64xf32>
    %784 = arith.cmpf oge, %782, %783 : vector<8x64xf32>
    %cst_206 = arith.constant 2.000000e-01 : f32
    %785 = vector.broadcast %cst_206 : f32 to vector<8x64xf32>
    %786 = arith.mulf %785, %782 : vector<8x64xf32>
    %787 = arith.select %784, %782, %786 : vector<8x64xi1>, vector<8x64xf32>
    %788 = tpu.iota {dimensions = array<i32: 0>} : vector<64x256xi32>
    %789 = tpu.iota {dimensions = array<i32: 1>} : vector<64x256xi32>
    %c8_i32_207 = arith.constant 8 : i32
    %790 = vector.broadcast %c8_i32_207 : i32 to vector<64x256xi32>
    %791 = arith.shrsi %789, %790 : vector<64x256xi32>
    %c255_i32_208 = arith.constant 255 : i32
    %792 = vector.broadcast %c255_i32_208 : i32 to vector<64x256xi32>
    %793 = arith.andi %789, %792 : vector<64x256xi32>
    %c64_i32_209 = arith.constant 64 : i32
    %794 = vector.broadcast %c64_i32_209 : i32 to vector<64x256xi32>
    %795 = arith.muli %791, %794 : vector<64x256xi32>
    %c4_i32_210 = arith.constant 4 : i32
    %796 = vector.broadcast %c4_i32_210 : i32 to vector<64x256xi32>
    %797 = arith.shrsi %793, %796 : vector<64x256xi32>
    %c1_i32_211 = arith.constant 1 : i32
    %798 = vector.broadcast %c1_i32_211 : i32 to vector<64x256xi32>
    %799 = arith.shrsi %797, %798 : vector<64x256xi32>
    %c8_i32_212 = arith.constant 8 : i32
    %800 = vector.broadcast %c8_i32_212 : i32 to vector<64x256xi32>
    %801 = arith.muli %799, %800 : vector<64x256xi32>
    %802 = arith.addi %795, %801 : vector<64x256xi32>
    %c15_i32_213 = arith.constant 15 : i32
    %803 = vector.broadcast %c15_i32_213 : i32 to vector<64x256xi32>
    %804 = arith.andi %793, %803 : vector<64x256xi32>
    %c1_i32_214 = arith.constant 1 : i32
    %805 = vector.broadcast %c1_i32_214 : i32 to vector<64x256xi32>
    %806 = arith.shrsi %804, %805 : vector<64x256xi32>
    %807 = arith.addi %802, %806 : vector<64x256xi32>
    %808 = arith.cmpi eq, %788, %807 : vector<64x256xi32>
    %cst_215 = arith.constant 1.000000e+00 : f32
    %cst_216 = arith.constant 0.000000e+00 : f32
    %809 = vector.broadcast %cst_215 : f32 to vector<64x256xf32>
    %810 = vector.broadcast %cst_216 : f32 to vector<64x256xf32>
    %811 = arith.select %808, %809, %810 : vector<64x256xi1>, vector<64x256xf32>
    %cst_217 = arith.constant dense<0.000000e+00> : vector<8x256xf32>
    %812 = tpu.matmul %787, %811, %cst_217 {dimension_numbers = #tpu.dot_dimension_numbers<[1], [0], [0], [1], [0, 0, 1, 1], [], []>} : vector<8x64xf32>, vector<64x256xf32>, vector<8x256xf32> -> vector<8x256xf32>
    %813 = vector.shape_cast %812 : vector<8x256xf32> to vector<1x8x256xf32>
    %814 = vector.shape_cast %242 : vector<8x256xf32> to vector<1x8x256xf32>
    %815 = tpu.concatenate %813, %814 in 0 : vector<1x8x256xf32>, vector<1x8x256xf32> -> vector<2x8x256xf32>
    %816 = vector.shape_cast %815 : vector<2x8x256xf32> to vector<16x256xf32>
    %c0_218 = arith.constant 0 : index
    %c0_219 = arith.constant 0 : index
    %817 = vector.load %arg15[%c0_218, %c0_219] : memref<8x144xf32, #tpu.memory_space<vmem>>, vector<8x144xf32>
    %c0_220 = arith.constant 0 : index
    %c0_221 = arith.constant 0 : index
    %818 = vector.load %arg16[%c0_220, %c0_221] : memref<8x1xf32, #tpu.memory_space<vmem>>, vector<8x1xf32>
    %819 = tpu.iota {dimensions = array<i32: 1>} : vector<1x256xi32>
    %c255_i32_222 = arith.constant 255 : i32
    %820 = vector.broadcast %c255_i32_222 : i32 to vector<1x256xi32>
    %821 = arith.andi %819, %820 : vector<1x256xi32>
    %c4_i32_223 = arith.constant 4 : i32
    %822 = vector.broadcast %c4_i32_223 : i32 to vector<1x256xi32>
    %823 = arith.shrsi %821, %822 : vector<1x256xi32>
    %c15_i32_224 = arith.constant 15 : i32
    %824 = vector.broadcast %c15_i32_224 : i32 to vector<1x256xi32>
    %825 = arith.andi %819, %824 : vector<1x256xi32>
    %826 = vector.extract_strided_slice %816 {offsets = [0, 239], sizes = [16, 17], strides = [1, 1]} : vector<16x256xf32> to vector<16x17xf32>
    %827 = vector.extract_strided_slice %816 {offsets = [0, 0], sizes = [16, 239], strides = [1, 1]} : vector<16x256xf32> to vector<16x239xf32>
    %828 = tpu.concatenate %826, %827 in 1 : vector<16x17xf32>, vector<16x239xf32> -> vector<16x256xf32>
    %c1_i32_225 = arith.constant 1 : i32
    %829 = vector.broadcast %c1_i32_225 : i32 to vector<1x256xi32>
    %830 = arith.cmpi sge, %823, %829 : vector<1x256xi32>
    %c1_i32_226 = arith.constant 1 : i32
    %831 = vector.broadcast %c1_i32_226 : i32 to vector<1x256xi32>
    %832 = arith.cmpi sge, %825, %831 : vector<1x256xi32>
    %833 = arith.andi %830, %832 : vector<1x256xi1>
    %cst_227 = arith.constant 0.000000e+00 : f32
    %834 = vector.shape_cast %833 : vector<1x256xi1> to vector<1x256xi1>
    %835 = vector.broadcast %834 : vector<1x256xi1> to vector<16x256xi1>
    %836 = vector.broadcast %cst_227 : f32 to vector<16x256xf32>
    %837 = arith.select %835, %828, %836 : vector<16x256xi1>, vector<16x256xf32>
    %838 = vector.extract_strided_slice %816 {offsets = [0, 240], sizes = [16, 16], strides = [1, 1]} : vector<16x256xf32> to vector<16x16xf32>
    %839 = vector.extract_strided_slice %816 {offsets = [0, 0], sizes = [16, 240], strides = [1, 1]} : vector<16x256xf32> to vector<16x240xf32>
    %840 = tpu.concatenate %838, %839 in 1 : vector<16x16xf32>, vector<16x240xf32> -> vector<16x256xf32>
    %c1_i32_228 = arith.constant 1 : i32
    %841 = vector.broadcast %c1_i32_228 : i32 to vector<1x256xi32>
    %842 = arith.cmpi sge, %823, %841 : vector<1x256xi32>
    %cst_229 = arith.constant 0.000000e+00 : f32
    %843 = vector.shape_cast %842 : vector<1x256xi1> to vector<1x256xi1>
    %844 = vector.broadcast %843 : vector<1x256xi1> to vector<16x256xi1>
    %845 = vector.broadcast %cst_229 : f32 to vector<16x256xf32>
    %846 = arith.select %844, %840, %845 : vector<16x256xi1>, vector<16x256xf32>
    %847 = vector.extract_strided_slice %816 {offsets = [0, 241], sizes = [16, 15], strides = [1, 1]} : vector<16x256xf32> to vector<16x15xf32>
    %848 = vector.extract_strided_slice %816 {offsets = [0, 0], sizes = [16, 241], strides = [1, 1]} : vector<16x256xf32> to vector<16x241xf32>
    %849 = tpu.concatenate %847, %848 in 1 : vector<16x15xf32>, vector<16x241xf32> -> vector<16x256xf32>
    %c1_i32_230 = arith.constant 1 : i32
    %850 = vector.broadcast %c1_i32_230 : i32 to vector<1x256xi32>
    %851 = arith.cmpi sge, %823, %850 : vector<1x256xi32>
    %c14_i32_231 = arith.constant 14 : i32
    %852 = vector.broadcast %c14_i32_231 : i32 to vector<1x256xi32>
    %853 = arith.cmpi sle, %825, %852 : vector<1x256xi32>
    %854 = arith.andi %851, %853 : vector<1x256xi1>
    %cst_232 = arith.constant 0.000000e+00 : f32
    %855 = vector.shape_cast %854 : vector<1x256xi1> to vector<1x256xi1>
    %856 = vector.broadcast %855 : vector<1x256xi1> to vector<16x256xi1>
    %857 = vector.broadcast %cst_232 : f32 to vector<16x256xf32>
    %858 = arith.select %856, %849, %857 : vector<16x256xi1>, vector<16x256xf32>
    %859 = vector.extract_strided_slice %816 {offsets = [0, 255], sizes = [16, 1], strides = [1, 1]} : vector<16x256xf32> to vector<16x1xf32>
    %860 = vector.extract_strided_slice %816 {offsets = [0, 0], sizes = [16, 255], strides = [1, 1]} : vector<16x256xf32> to vector<16x255xf32>
    %861 = tpu.concatenate %859, %860 in 1 : vector<16x1xf32>, vector<16x255xf32> -> vector<16x256xf32>
    %c1_i32_233 = arith.constant 1 : i32
    %862 = vector.broadcast %c1_i32_233 : i32 to vector<1x256xi32>
    %863 = arith.cmpi sge, %825, %862 : vector<1x256xi32>
    %cst_234 = arith.constant 0.000000e+00 : f32
    %864 = vector.shape_cast %863 : vector<1x256xi1> to vector<1x256xi1>
    %865 = vector.broadcast %864 : vector<1x256xi1> to vector<16x256xi1>
    %866 = vector.broadcast %cst_234 : f32 to vector<16x256xf32>
    %867 = arith.select %865, %861, %866 : vector<16x256xi1>, vector<16x256xf32>
    %868 = vector.extract_strided_slice %816 {offsets = [0, 1], sizes = [16, 255], strides = [1, 1]} : vector<16x256xf32> to vector<16x255xf32>
    %869 = vector.extract_strided_slice %816 {offsets = [0, 0], sizes = [16, 1], strides = [1, 1]} : vector<16x256xf32> to vector<16x1xf32>
    %870 = tpu.concatenate %868, %869 in 1 : vector<16x255xf32>, vector<16x1xf32> -> vector<16x256xf32>
    %c14_i32_235 = arith.constant 14 : i32
    %871 = vector.broadcast %c14_i32_235 : i32 to vector<1x256xi32>
    %872 = arith.cmpi sle, %825, %871 : vector<1x256xi32>
    %cst_236 = arith.constant 0.000000e+00 : f32
    %873 = vector.shape_cast %872 : vector<1x256xi1> to vector<1x256xi1>
    %874 = vector.broadcast %873 : vector<1x256xi1> to vector<16x256xi1>
    %875 = vector.broadcast %cst_236 : f32 to vector<16x256xf32>
    %876 = arith.select %874, %870, %875 : vector<16x256xi1>, vector<16x256xf32>
    %877 = vector.extract_strided_slice %816 {offsets = [0, 15], sizes = [16, 241], strides = [1, 1]} : vector<16x256xf32> to vector<16x241xf32>
    %878 = vector.extract_strided_slice %816 {offsets = [0, 0], sizes = [16, 15], strides = [1, 1]} : vector<16x256xf32> to vector<16x15xf32>
    %879 = tpu.concatenate %877, %878 in 1 : vector<16x241xf32>, vector<16x15xf32> -> vector<16x256xf32>
    %c14_i32_237 = arith.constant 14 : i32
    %880 = vector.broadcast %c14_i32_237 : i32 to vector<1x256xi32>
    %881 = arith.cmpi sle, %823, %880 : vector<1x256xi32>
    %c1_i32_238 = arith.constant 1 : i32
    %882 = vector.broadcast %c1_i32_238 : i32 to vector<1x256xi32>
    %883 = arith.cmpi sge, %825, %882 : vector<1x256xi32>
    %884 = arith.andi %881, %883 : vector<1x256xi1>
    %cst_239 = arith.constant 0.000000e+00 : f32
    %885 = vector.shape_cast %884 : vector<1x256xi1> to vector<1x256xi1>
    %886 = vector.broadcast %885 : vector<1x256xi1> to vector<16x256xi1>
    %887 = vector.broadcast %cst_239 : f32 to vector<16x256xf32>
    %888 = arith.select %886, %879, %887 : vector<16x256xi1>, vector<16x256xf32>
    %889 = vector.extract_strided_slice %816 {offsets = [0, 16], sizes = [16, 240], strides = [1, 1]} : vector<16x256xf32> to vector<16x240xf32>
    %890 = vector.extract_strided_slice %816 {offsets = [0, 0], sizes = [16, 16], strides = [1, 1]} : vector<16x256xf32> to vector<16x16xf32>
    %891 = tpu.concatenate %889, %890 in 1 : vector<16x240xf32>, vector<16x16xf32> -> vector<16x256xf32>
    %c14_i32_240 = arith.constant 14 : i32
    %892 = vector.broadcast %c14_i32_240 : i32 to vector<1x256xi32>
    %893 = arith.cmpi sle, %823, %892 : vector<1x256xi32>
    %cst_241 = arith.constant 0.000000e+00 : f32
    %894 = vector.shape_cast %893 : vector<1x256xi1> to vector<1x256xi1>
    %895 = vector.broadcast %894 : vector<1x256xi1> to vector<16x256xi1>
    %896 = vector.broadcast %cst_241 : f32 to vector<16x256xf32>
    %897 = arith.select %895, %891, %896 : vector<16x256xi1>, vector<16x256xf32>
    %898 = vector.extract_strided_slice %816 {offsets = [0, 17], sizes = [16, 239], strides = [1, 1]} : vector<16x256xf32> to vector<16x239xf32>
    %899 = vector.extract_strided_slice %816 {offsets = [0, 0], sizes = [16, 17], strides = [1, 1]} : vector<16x256xf32> to vector<16x17xf32>
    %900 = tpu.concatenate %898, %899 in 1 : vector<16x239xf32>, vector<16x17xf32> -> vector<16x256xf32>
    %c14_i32_242 = arith.constant 14 : i32
    %901 = vector.broadcast %c14_i32_242 : i32 to vector<1x256xi32>
    %902 = arith.cmpi sle, %823, %901 : vector<1x256xi32>
    %c14_i32_243 = arith.constant 14 : i32
    %903 = vector.broadcast %c14_i32_243 : i32 to vector<1x256xi32>
    %904 = arith.cmpi sle, %825, %903 : vector<1x256xi32>
    %905 = arith.andi %902, %904 : vector<1x256xi1>
    %cst_244 = arith.constant 0.000000e+00 : f32
    %906 = vector.shape_cast %905 : vector<1x256xi1> to vector<1x256xi1>
    %907 = vector.broadcast %906 : vector<1x256xi1> to vector<16x256xi1>
    %908 = vector.broadcast %cst_244 : f32 to vector<16x256xf32>
    %909 = arith.select %907, %900, %908 : vector<16x256xi1>, vector<16x256xf32>
    %910 = vector.shape_cast %837 : vector<16x256xf32> to vector<1x16x256xf32>
    %911 = vector.shape_cast %846 : vector<16x256xf32> to vector<1x16x256xf32>
    %912 = vector.shape_cast %858 : vector<16x256xf32> to vector<1x16x256xf32>
    %913 = vector.shape_cast %867 : vector<16x256xf32> to vector<1x16x256xf32>
    %914 = vector.shape_cast %816 : vector<16x256xf32> to vector<1x16x256xf32>
    %915 = vector.shape_cast %876 : vector<16x256xf32> to vector<1x16x256xf32>
    %916 = vector.shape_cast %888 : vector<16x256xf32> to vector<1x16x256xf32>
    %917 = vector.shape_cast %897 : vector<16x256xf32> to vector<1x16x256xf32>
    %918 = vector.shape_cast %909 : vector<16x256xf32> to vector<1x16x256xf32>
    %919 = tpu.concatenate %910, %911, %912, %913, %914, %915, %916, %917, %918 in 0 : vector<1x16x256xf32>, vector<1x16x256xf32>, vector<1x16x256xf32>, vector<1x16x256xf32>, vector<1x16x256xf32>, vector<1x16x256xf32>, vector<1x16x256xf32>, vector<1x16x256xf32>, vector<1x16x256xf32> -> vector<9x16x256xf32>
    %920 = vector.shape_cast %919 : vector<9x16x256xf32> to vector<144x256xf32>
    %cst_245 = arith.constant dense<0.000000e+00> : vector<8x256xf32>
    %921 = tpu.matmul %817, %920, %cst_245 {dimension_numbers = #tpu.dot_dimension_numbers<[1], [0], [0], [1], [0, 0, 1, 1], [], []>} : vector<8x144xf32>, vector<144x256xf32>, vector<8x256xf32> -> vector<8x256xf32>
    %922 = vector.broadcast %818 : vector<8x1xf32> to vector<8x256xf32>
    %923 = arith.addf %921, %922 : vector<8x256xf32>
    %cst_246 = arith.constant 0.000000e+00 : f32
    %924 = vector.broadcast %cst_246 : f32 to vector<8x256xf32>
    %925 = arith.cmpf oge, %923, %924 : vector<8x256xf32>
    %cst_247 = arith.constant 2.000000e-01 : f32
    %926 = vector.broadcast %cst_247 : f32 to vector<8x256xf32>
    %927 = arith.mulf %926, %923 : vector<8x256xf32>
    %928 = arith.select %925, %923, %927 : vector<8x256xi1>, vector<8x256xf32>
    %929 = vector.extract_strided_slice %928 {offsets = [0, 0], sizes = [4, 256], strides = [1, 1]} : vector<8x256xf32> to vector<4x256xf32>
    %c0_248 = arith.constant 0 : index
    %c0_249 = arith.constant 0 : index
    %c0_250 = arith.constant 0 : index
    %930 = vector.load %arg17[%c0_248, %c0_249, %c0_250] : memref<1x4x256xf32, #tpu.memory_space<vmem>>, vector<1x4x256xf32>
    %931 = vector.shape_cast %930 : vector<1x4x256xf32> to vector<4x256xf32>
    %932 = vector.shape_cast %929 : vector<4x256xf32> to vector<1x4x256xf32>
    tpu.vector_store %arg17[%c0_248, %c0_249, %c0_250], %932 {strides = array<i32>} : memref<1x4x256xf32, #tpu.memory_space<vmem>>, vector<1x4x256xf32>,
    return
  }
  func.func @transform_0(%arg0: i32) -> (i32, i32, i32) {
    %c0_i32 = arith.constant 0 : i32
    %c0_i32_0 = arith.constant 0 : i32
    %c0_i32_1 = arith.constant 0 : i32
    return %arg0, %c0_i32, %c0_i32_0 : i32, i32, i32
  }
  func.func @transform_1(%arg0: i32) -> (i32, i32, i32) {
    %c0_i32 = arith.constant 0 : i32
    %c0_i32_0 = arith.constant 0 : i32
    %c0_i32_1 = arith.constant 0 : i32
    return %arg0, %c0_i32, %c0_i32_0 : i32, i32, i32
  }
  func.func @transform_2(%arg0: i32) -> (i32, i32) {
    %c0_i32 = arith.constant 0 : i32
    %c0_i32_0 = arith.constant 0 : i32
    %c0_i32_1 = arith.constant 0 : i32
    return %c0_i32, %c0_i32_0 : i32, i32
  }
  func.func @transform_3(%arg0: i32) -> (i32, i32) {
    %c0_i32 = arith.constant 0 : i32
    %c0_i32_0 = arith.constant 0 : i32
    %c0_i32_1 = arith.constant 0 : i32
    return %c0_i32, %c0_i32_0 : i32, i32
  }
  func.func @transform_4(%arg0: i32) -> (i32, i32) {
    %c0_i32 = arith.constant 0 : i32
    %c0_i32_0 = arith.constant 0 : i32
    %c0_i32_1 = arith.constant 0 : i32
    return %c0_i32, %c0_i32_0 : i32, i32
  }
  func.func @transform_5(%arg0: i32) -> (i32, i32) {
    %c0_i32 = arith.constant 0 : i32
    %c0_i32_0 = arith.constant 0 : i32
    %c0_i32_1 = arith.constant 0 : i32
    return %c0_i32, %c0_i32_0 : i32, i32
  }
  func.func @transform_6(%arg0: i32) -> (i32, i32) {
    %c0_i32 = arith.constant 0 : i32
    %c0_i32_0 = arith.constant 0 : i32
    %c0_i32_1 = arith.constant 0 : i32
    return %c0_i32, %c0_i32_0 : i32, i32
  }
  func.func @transform_7(%arg0: i32) -> (i32, i32) {
    %c0_i32 = arith.constant 0 : i32
    %c0_i32_0 = arith.constant 0 : i32
    %c0_i32_1 = arith.constant 0 : i32
    return %c0_i32, %c0_i32_0 : i32, i32
  }
  func.func @transform_8(%arg0: i32) -> (i32, i32) {
    %c0_i32 = arith.constant 0 : i32
    %c0_i32_0 = arith.constant 0 : i32
    %c0_i32_1 = arith.constant 0 : i32
    return %c0_i32, %c0_i32_0 : i32, i32
  }
  func.func @transform_9(%arg0: i32) -> (i32, i32) {
    %c0_i32 = arith.constant 0 : i32
    %c0_i32_0 = arith.constant 0 : i32
    %c0_i32_1 = arith.constant 0 : i32
    return %c0_i32, %c0_i32_0 : i32, i32
  }
  func.func @transform_10(%arg0: i32) -> (i32, i32) {
    %c0_i32 = arith.constant 0 : i32
    %c0_i32_0 = arith.constant 0 : i32
    %c0_i32_1 = arith.constant 0 : i32
    return %c0_i32, %c0_i32_0 : i32, i32
  }
  func.func @transform_11(%arg0: i32) -> (i32, i32) {
    %c0_i32 = arith.constant 0 : i32
    %c0_i32_0 = arith.constant 0 : i32
    %c0_i32_1 = arith.constant 0 : i32
    return %c0_i32, %c0_i32_0 : i32, i32
  }
  func.func @transform_12(%arg0: i32) -> (i32, i32) {
    %c0_i32 = arith.constant 0 : i32
    %c0_i32_0 = arith.constant 0 : i32
    %c0_i32_1 = arith.constant 0 : i32
    return %c0_i32, %c0_i32_0 : i32, i32
  }
  func.func @transform_13(%arg0: i32) -> (i32, i32) {
    %c0_i32 = arith.constant 0 : i32
    %c0_i32_0 = arith.constant 0 : i32
    %c0_i32_1 = arith.constant 0 : i32
    return %c0_i32, %c0_i32_0 : i32, i32
  }
  func.func @transform_14(%arg0: i32) -> (i32, i32) {
    %c0_i32 = arith.constant 0 : i32
    %c0_i32_0 = arith.constant 0 : i32
    %c0_i32_1 = arith.constant 0 : i32
    return %c0_i32, %c0_i32_0 : i32, i32
  }
  func.func @transform_15(%arg0: i32) -> (i32, i32) {
    %c0_i32 = arith.constant 0 : i32
    %c0_i32_0 = arith.constant 0 : i32
    %c0_i32_1 = arith.constant 0 : i32
    return %c0_i32, %c0_i32_0 : i32, i32
  }
  func.func @transform_16(%arg0: i32) -> (i32, i32, i32) {
    %c0_i32 = arith.constant 0 : i32
    %c0_i32_0 = arith.constant 0 : i32
    %c0_i32_1 = arith.constant 0 : i32
    return %arg0, %c0_i32, %c0_i32_0 : i32, i32, i32
  }
  func.func @transform_17(%arg0: i32) -> (i32, i32, i32) {
    %c0_i32 = arith.constant 0 : i32
    %c0_i32_0 = arith.constant 0 : i32
    %c0_i32_1 = arith.constant 0 : i32
    return %arg0, %c0_i32, %c0_i32_0 : i32, i32, i32
  }
  func.func @transform_18(%arg0: i32) -> (i32, i32, i32) {
    %c0_i32 = arith.constant 0 : i32
    %c0_i32_0 = arith.constant 0 : i32
    %c0_i32_1 = arith.constant 0 : i32
    return %arg0, %c0_i32, %c0_i32_0 : i32, i32, i32
  }
}

</mosaic_0001>

<llo_original>
// kernel: unet_joint_level0_forward.1
$region0: #{unet_joint_level0_forward.1}
  #allocation0 [shape = 'u32[]', space=smem, size = 0x4, offset = 0x4, fixed_abs, tag = 'smem constant byte address 0x4 - core index']
  #allocation1 [shape = 'u32[144,128]{1,0:T(1,128)}', space=vmem, size = 0x12000, scoped, tag = 'internal scratch']
  %s0 = inlined_call_operand.vmem [shape: f32[2,8,256], index: 0, kind: input, shape index: {}]
  %s1 = inlined_call_operand.vmem [shape: f32[2,8,256], index: 1, kind: input, shape index: {}]
  %s2 = inlined_call_operand.vmem [shape: f32[8,72], index: 2, kind: input, shape index: {}]
  %s3 = inlined_call_operand.vmem [shape: f32[8,1], index: 3, kind: input, shape index: {}]
  %s4 = inlined_call_operand.vmem [shape: f32[8,144], index: 4, kind: input, shape index: {}]
  %s5 = inlined_call_operand.vmem [shape: f32[8,1], index: 5, kind: input, shape index: {}]
  %s6 = inlined_call_operand.vmem [shape: f32[8,72], index: 6, kind: input, shape index: {}]
  %s7 = inlined_call_operand.vmem [shape: f32[8,1], index: 7, kind: input, shape index: {}]
  %s8 = inlined_call_operand.vmem [shape: f32[8,144], index: 8, kind: input, shape index: {}]
  %s9 = inlined_call_operand.vmem [shape: f32[8,1], index: 9, kind: input, shape index: {}]
  %s10 = inlined_call_operand.vmem [shape: f32[8,72], index: 10, kind: input, shape index: {}]
  %s11 = inlined_call_operand.vmem [shape: f32[8,1], index: 11, kind: input, shape index: {}]
  %s12 = inlined_call_operand.vmem [shape: f32[8,144], index: 12, kind: input, shape index: {}]
  %s13 = inlined_call_operand.vmem [shape: f32[8,1], index: 13, kind: input, shape index: {}]
  %s14 = inlined_call_operand.vmem [shape: f32[8,144], index: 14, kind: input, shape index: {}]
  %s15 = inlined_call_operand.vmem [shape: f32[8,1], index: 15, kind: input, shape index: {}]
  %s16 = inlined_call_operand.vmem [shape: f32[2,4,256], index: 16, kind: output, shape index: {0}]
  %s17 = inlined_call_operand.vmem [shape: f32[2,4,256], index: 17, kind: output, shape index: {1}]
  %s18 = inlined_call_operand.vmem [shape: f32[2,4,256], index: 18, kind: output, shape index: {2}]
  %19 = xla_tuple %s16, %s17, %s18
  %s20 = sld [smem:[#allocation0]]
  $region113: #{unet_joint_level0_forward.1} parent=0
    _
  %s22 = ssub.s32 1, %s20
  %s23 = scalar_select 0, %s22, %s20
  loop: start=0, step=1, limit=4
  $region2: #{unet_joint_level0_forward.1} parent=0 // loop_pre_header
    _
  $region3: #{unet_joint_level0_forward.1} parent=0 // loop_header
    %s25 = sphi 0, %s29
    %p26 = scmp.ge.s32.totalorder %s25, 4
    %s35 = sphi 0, %s37
    %s38 = sphi 0, %s35
    %s39 = sphi 0, %s38
    %s55 = sphi 0, %s39
    %s61 = sphi 0, %s63
    %s64 = sphi 0, %s61
    %s65 = sphi 0, %s64
    %s81 = sphi 0, %s65
    %s85 = sphi 0, %s85
    %s87 = sphi 0, %s85
    %s88 = sphi 0, %s87
    %s102 = sphi 0, %s88
    %s106 = sphi 0, %s106
    %s108 = sphi 0, %s106
    %s109 = sphi 0, %s108
    %s123 = sphi 0, %s109
    %s127 = sphi 0, %s127
    %s129 = sphi 0, %s127
    %s130 = sphi 0, %s129
    %s144 = sphi 0, %s130
    %s148 = sphi 0, %s148
    %s150 = sphi 0, %s148
    %s151 = sphi 0, %s150
    %s165 = sphi 0, %s151
    %s169 = sphi 0, %s169
    %s171 = sphi 0, %s169
    %s172 = sphi 0, %s171
    %s186 = sphi 0, %s172
    %s190 = sphi 0, %s190
    %s192 = sphi 0, %s190
    %s193 = sphi 0, %s192
    %s207 = sphi 0, %s193
    %s211 = sphi 0, %s211
    %s213 = sphi 0, %s211
    %s214 = sphi 0, %s213
    %s228 = sphi 0, %s214
    %s232 = sphi 0, %s232
    %s234 = sphi 0, %s232
    %s235 = sphi 0, %s234
    %s249 = sphi 0, %s235
    %s253 = sphi 0, %s253
    %s255 = sphi 0, %s253
    %s256 = sphi 0, %s255
    %s270 = sphi 0, %s256
    %s274 = sphi 0, %s274
    %s276 = sphi 0, %s274
    %s277 = sphi 0, %s276
    %s291 = sphi 0, %s277
    %s295 = sphi 0, %s295
    %s297 = sphi 0, %s295
    %s298 = sphi 0, %s297
    %s312 = sphi 0, %s298
    %s316 = sphi 0, %s316
    %s318 = sphi 0, %s316
    %s319 = sphi 0, %s318
    %s333 = sphi 0, %s319
    %s337 = sphi 0, %s337
    %s339 = sphi 0, %s337
    %s340 = sphi 0, %s339
    %s354 = sphi 0, %s340
    %s358 = sphi 0, %s358
    %s360 = sphi 0, %s358
    %s361 = sphi 0, %s360
    %s375 = sphi 0, %s361
    %s381 = sphi 0, %s383
    %s384 = sphi 0, %s381
    %s385 = sphi 0, %s384
    %s401 = sphi 0, %s385
    %s407 = sphi 0, %s409
    %s410 = sphi 0, %s407
    %s411 = sphi 0, %s410
    %s427 = sphi 0, %s411
    %s433 = sphi 0, %s435
    %s436 = sphi 0, %s433
    %s437 = sphi 0, %s436
    %s453 = sphi 0, %s437
  $region4: #{unet_joint_level0_forward.1} parent=0 // loop_header_branch
    %28 = sbr.rel (%p26) target = $region8
  $region5: #{unet_joint_level0_forward.1} parent=0 // loop_body
    %s30 = ssub.s32 %s25, 1
    %s31 = ssub.s32 %s25, 2
    %s32 = sadd.s32 %s25, 1
    %s33 = ssub.s32 %s25, %s32
    %p34 = scmp.eq.s32.totalorder %s33, 0
    %s36 = sadd.s32 %s35, 1
    %s37 = scalar_select %p34, %s35, %s36
    %p40 = pneg %p34
    %p41 = scmp.eq.s32.totalorder %s25, 1
    %p42 = por %p40, %p41
    %p43 = scmp.ne.s32.totalorder %s35, %s38
    %p44 = scmp.eq.s32.totalorder %s25, 0
    %p45 = por %p43, %p44
    %p46 = scmp.ne.s32.totalorder %s35, %s38
    %p47 = scmp.eq.s32.totalorder %s30, 1
    %p48 = por %p46, %p47
    %p49 = scmp.ne.s32.totalorder %s38, %s39
    %p50 = scmp.eq.s32.totalorder %s30, 0
    %p51 = por %p49, %p50
    %p52 = scmp.ne.s32.totalorder %s38, %s39
    %p53 = scmp.eq.s32.totalorder %s31, 1
    %p54 = por %p52, %p53
    %p56 = scmp.ne.s32.totalorder %s39, %s55
    %p57 = scmp.eq.s32.totalorder %s31, 0
    %p58 = por %p56, %p57
    %s59 = ssub.s32 %s25, %s32
    %p60 = scmp.eq.s32.totalorder %s59, 0
    %s62 = sadd.s32 %s61, 1
    %s63 = scalar_select %p60, %s61, %s62
    %p66 = pneg %p60
    %p67 = scmp.eq.s32.totalorder %s25, 1
    %p68 = por %p66, %p67
    %p69 = scmp.ne.s32.totalorder %s61, %s64
    %p70 = scmp.eq.s32.totalorder %s25, 0
    %p71 = por %p69, %p70
    %p72 = scmp.ne.s32.totalorder %s61, %s64
    %p73 = scmp.eq.s32.totalorder %s30, 1
    %p74 = por %p72, %p73
    %p75 = scmp.ne.s32.totalorder %s64, %s65
    %p76 = scmp.eq.s32.totalorder %s30, 0
    %p77 = por %p75, %p76
    %p78 = scmp.ne.s32.totalorder %s64, %s65
    %p79 = scmp.eq.s32.totalorder %s31, 1
    %p80 = por %p78, %p79
    %p82 = scmp.ne.s32.totalorder %s65, %s81
    %p83 = scmp.eq.s32.totalorder %s31, 0
    %p84 = por %p82, %p83
    %s86 = sadd.s32 %s85, 1
    %p89 = scmp.eq.s32.totalorder %s25, 1
    %p90 = scmp.ne.s32.totalorder %s85, %s87
    %p91 = scmp.eq.s32.totalorder %s25, 0
    %p92 = por %p90, %p91
    %p93 = scmp.ne.s32.totalorder %s85, %s87
    %p94 = scmp.eq.s32.totalorder %s30, 1
    %p95 = por %p93, %p94
    %p96 = scmp.ne.s32.totalorder %s87, %s88
    %p97 = scmp.eq.s32.totalorder %s30, 0
    %p98 = por %p96, %p97
    %p99 = scmp.ne.s32.totalorder %s87, %s88
    %p100 = scmp.eq.s32.totalorder %s31, 1
    %p101 = por %p99, %p100
    %p103 = scmp.ne.s32.totalorder %s88, %s102
    %p104 = scmp.eq.s32.totalorder %s31, 0
    %p105 = por %p103, %p104
    %s107 = sadd.s32 %s106, 1
    %p110 = scmp.eq.s32.totalorder %s25, 1
    %p111 = scmp.ne.s32.totalorder %s106, %s108
    %p112 = scmp.eq.s32.totalorder %s25, 0
    %p113 = por %p111, %p112
    %p114 = scmp.ne.s32.totalorder %s106, %s108
    %p115 = scmp.eq.s32.totalorder %s30, 1
    %p116 = por %p114, %p115
    %p117 = scmp.ne.s32.totalorder %s108, %s109
    %p118 = scmp.eq.s32.totalorder %s30, 0
    %p119 = por %p117, %p118
    %p120 = scmp.ne.s32.totalorder %s108, %s109
    %p121 = scmp.eq.s32.totalorder %s31, 1
    %p122 = por %p120, %p121
    %p124 = scmp.ne.s32.totalorder %s109, %s123
    %p125 = scmp.eq.s32.totalorder %s31, 0
    %p126 = por %p124, %p125
    %s128 = sadd.s32 %s127, 1
    %p131 = scmp.eq.s32.totalorder %s25, 1
    %p132 = scmp.ne.s32.totalorder %s127, %s129
    %p133 = scmp.eq.s32.totalorder %s25, 0
    %p134 = por %p132, %p133
    %p135 = scmp.ne.s32.totalorder %s127, %s129
    %p136 = scmp.eq.s32.totalorder %s30, 1
    %p137 = por %p135, %p136
    %p138 = scmp.ne.s32.totalorder %s129, %s130
    %p139 = scmp.eq.s32.totalorder %s30, 0
    %p140 = por %p138, %p139
    %p141 = scmp.ne.s32.totalorder %s129, %s130
    %p142 = scmp.eq.s32.totalorder %s31, 1
    %p143 = por %p141, %p142
    %p145 = scmp.ne.s32.totalorder %s130, %s144
    %p146 = scmp.eq.s32.totalorder %s31, 0
    %p147 = por %p145, %p146
    %s149 = sadd.s32 %s148, 1
    %p152 = scmp.eq.s32.totalorder %s25, 1
    %p153 = scmp.ne.s32.totalorder %s148, %s150
    %p154 = scmp.eq.s32.totalorder %s25, 0
    %p155 = por %p153, %p154
    %p156 = scmp.ne.s32.totalorder %s148, %s150
    %p157 = scmp.eq.s32.totalorder %s30, 1
    %p158 = por %p156, %p157
    %p159 = scmp.ne.s32.totalorder %s150, %s151
    %p160 = scmp.eq.s32.totalorder %s30, 0
    %p161 = por %p159, %p160
    %p162 = scmp.ne.s32.totalorder %s150, %s151
    %p163 = scmp.eq.s32.totalorder %s31, 1
    %p164 = por %p162, %p163
    %p166 = scmp.ne.s32.totalorder %s151, %s165
    %p167 = scmp.eq.s32.totalorder %s31, 0
    %p168 = por %p166, %p167
    %s170 = sadd.s32 %s169, 1
    %p173 = scmp.eq.s32.totalorder %s25, 1
    %p174 = scmp.ne.s32.totalorder %s169, %s171
    %p175 = scmp.eq.s32.totalorder %s25, 0
    %p176 = por %p174, %p175
    %p177 = scmp.ne.s32.totalorder %s169, %s171
    %p178 = scmp.eq.s32.totalorder %s30, 1
    %p179 = por %p177, %p178
    %p180 = scmp.ne.s32.totalorder %s171, %s172
    %p181 = scmp.eq.s32.totalorder %s30, 0
    %p182 = por %p180, %p181
    %p183 = scmp.ne.s32.totalorder %s171, %s172
    %p184 = scmp.eq.s32.totalorder %s31, 1
    %p185 = por %p183, %p184
    %p187 = scmp.ne.s32.totalorder %s172, %s186
    %p188 = scmp.eq.s32.totalorder %s31, 0
    %p189 = por %p187, %p188
    %s191 = sadd.s32 %s190, 1
    %p194 = scmp.eq.s32.totalorder %s25, 1
    %p195 = scmp.ne.s32.totalorder %s190, %s192
    %p196 = scmp.eq.s32.totalorder %s25, 0
    %p197 = por %p195, %p196
    %p198 = scmp.ne.s32.totalorder %s190, %s192
    %p199 = scmp.eq.s32.totalorder %s30, 1
    %p200 = por %p198, %p199
    %p201 = scmp.ne.s32.totalorder %s192, %s193
    %p202 = scmp.eq.s32.totalorder %s30, 0
    %p203 = por %p201, %p202
    %p204 = scmp.ne.s32.totalorder %s192, %s193
    %p205 = scmp.eq.s32.totalorder %s31, 1
    %p206 = por %p204, %p205
    %p208 = scmp.ne.s32.totalorder %s193, %s207
    %p209 = scmp.eq.s32.totalorder %s31, 0
    %p210 = por %p208, %p209
    %s212 = sadd.s32 %s211, 1
    %p215 = scmp.eq.s32.totalorder %s25, 1
    %p216 = scmp.ne.s32.totalorder %s211, %s213
    %p217 = scmp.eq.s32.totalorder %s25, 0
    %p218 = por %p216, %p217
    %p219 = scmp.ne.s32.totalorder %s211, %s213
    %p220 = scmp.eq.s32.totalorder %s30, 1
    %p221 = por %p219, %p220
    %p222 = scmp.ne.s32.totalorder %s213, %s214
    %p223 = scmp.eq.s32.totalorder %s30, 0
    %p224 = por %p222, %p223
    %p225 = scmp.ne.s32.totalorder %s213, %s214
    %p226 = scmp.eq.s32.totalorder %s31, 1
    %p227 = por %p225, %p226
    %p229 = scmp.ne.s32.totalorder %s214, %s228
    %p230 = scmp.eq.s32.totalorder %s31, 0
    %p231 = por %p229, %p230
    %s233 = sadd.s32 %s232, 1
    %p236 = scmp.eq.s32.totalorder %s25, 1
    %p237 = scmp.ne.s32.totalorder %s232, %s234
    %p238 = scmp.eq.s32.totalorder %s25, 0
    %p239 = por %p237, %p238
    %p240 = scmp.ne.s32.totalorder %s232, %s234
    %p241 = scmp.eq.s32.totalorder %s30, 1
    %p242 = por %p240, %p241
    %p243 = scmp.ne.s32.totalorder %s234, %s235
    %p244 = scmp.eq.s32.totalorder %s30, 0
    %p245 = por %p243, %p244
    %p246 = scmp.ne.s32.totalorder %s234, %s235
    %p247 = scmp.eq.s32.totalorder %s31, 1
    %p248 = por %p246, %p247
    %p250 = scmp.ne.s32.totalorder %s235, %s249
    %p251 = scmp.eq.s32.totalorder %s31, 0
    %p252 = por %p250, %p251
    %s254 = sadd.s32 %s253, 1
    %p257 = scmp.eq.s32.totalorder %s25, 1
    %p258 = scmp.ne.s32.totalorder %s253, %s255
    %p259 = scmp.eq.s32.totalorder %s25, 0
    %p260 = por %p258, %p259
    %p261 = scmp.ne.s32.totalorder %s253, %s255
    %p262 = scmp.eq.s32.totalorder %s30, 1
    %p263 = por %p261, %p262
    %p264 = scmp.ne.s32.totalorder %s255, %s256
    %p265 = scmp.eq.s32.totalorder %s30, 0
    %p266 = por %p264, %p265
    %p267 = scmp.ne.s32.totalorder %s255, %s256
    %p268 = scmp.eq.s32.totalorder %s31, 1
    %p269 = por %p267, %p268
    %p271 = scmp.ne.s32.totalorder %s256, %s270
    %p272 = scmp.eq.s32.totalorder %s31, 0
    %p273 = por %p271, %p272
    %s275 = sadd.s32 %s274, 1
    %p278 = scmp.eq.s32.totalorder %s25, 1
    %p279 = scmp.ne.s32.totalorder %s274, %s276
    %p280 = scmp.eq.s32.totalorder %s25, 0
    %p281 = por %p279, %p280
    %p282 = scmp.ne.s32.totalorder %s274, %s276
    %p283 = scmp.eq.s32.totalorder %s30, 1
    %p284 = por %p282, %p283
    %p285 = scmp.ne.s32.totalorder %s276, %s277
    %p286 = scmp.eq.s32.totalorder %s30, 0
    %p287 = por %p285, %p286
    %p288 = scmp.ne.s32.totalorder %s276, %s277
    %p289 = scmp.eq.s32.totalorder %s31, 1
    %p290 = por %p288, %p289
    %p292 = scmp.ne.s32.totalorder %s277, %s291
    %p293 = scmp.eq.s32.totalorder %s31, 0
    %p294 = por %p292, %p293
    %s296 = sadd.s32 %s295, 1
    %p299 = scmp.eq.s32.totalorder %s25, 1
    %p300 = scmp.ne.s32.totalorder %s295, %s297
    %p301 = scmp.eq.s32.totalorder %s25, 0
    %p302 = por %p300, %p301
    %p303 = scmp.ne.s32.totalorder %s295, %s297
    %p304 = scmp.eq.s32.totalorder %s30, 1
    %p305 = por %p303, %p304
    %p306 = scmp.ne.s32.totalorder %s297, %s298
    %p307 = scmp.eq.s32.totalorder %s30, 0
    %p308 = por %p306, %p307
    %p309 = scmp.ne.s32.totalorder %s297, %s298
    %p310 = scmp.eq.s32.totalorder %s31, 1
    %p311 = por %p309, %p310
    %p313 = scmp.ne.s32.totalorder %s298, %s312
    %p314 = scmp.eq.s32.totalorder %s31, 0
    %p315 = por %p313, %p314
    %s317 = sadd.s32 %s316, 1
    %p320 = scmp.eq.s32.totalorder %s25, 1
    %p321 = scmp.ne.s32.totalorder %s316, %s318
    %p322 = scmp.eq.s32.totalorder %s25, 0
    %p323 = por %p321, %p322
    %p324 = scmp.ne.s32.totalorder %s316, %s318
    %p325 = scmp.eq.s32.totalorder %s30, 1
    %p326 = por %p324, %p325
    %p327 = scmp.ne.s32.totalorder %s318, %s319
    %p328 = scmp.eq.s32.totalorder %s30, 0
    %p329 = por %p327, %p328
    %p330 = scmp.ne.s32.totalorder %s318, %s319
    %p331 = scmp.eq.s32.totalorder %s31, 1
    %p332 = por %p330, %p331
    %p334 = scmp.ne.s32.totalorder %s319, %s333
    %p335 = scmp.eq.s32.totalorder %s31, 0
    %p336 = por %p334, %p335
    %s338 = sadd.s32 %s337, 1
    %p341 = scmp.eq.s32.totalorder %s25, 1
    %p342 = scmp.ne.s32.totalorder %s337, %s339
    %p343 = scmp.eq.s32.totalorder %s25, 0
    %p344 = por %p342, %p343
    %p345 = scmp.ne.s32.totalorder %s337, %s339
    %p346 = scmp.eq.s32.totalorder %s30, 1
    %p347 = por %p345, %p346
    %p348 = scmp.ne.s32.totalorder %s339, %s340
    %p349 = scmp.eq.s32.totalorder %s30, 0
    %p350 = por %p348, %p349
    %p351 = scmp.ne.s32.totalorder %s339, %s340
    %p352 = scmp.eq.s32.totalorder %s31, 1
    %p353 = por %p351, %p352
    %p355 = scmp.ne.s32.totalorder %s340, %s354
    %p356 = scmp.eq.s32.totalorder %s31, 0
    %p357 = por %p355, %p356
    %s359 = sadd.s32 %s358, 1
    %p362 = scmp.eq.s32.totalorder %s25, 1
    %p363 = scmp.ne.s32.totalorder %s358, %s360
    %p364 = scmp.eq.s32.totalorder %s25, 0
    %p365 = por %p363, %p364
    %p366 = scmp.ne.s32.totalorder %s358, %s360
    %p367 = scmp.eq.s32.totalorder %s30, 1
    %p368 = por %p366, %p367
    %p369 = scmp.ne.s32.totalorder %s360, %s361
    %p370 = scmp.eq.s32.totalorder %s30, 0
    %p371 = por %p369, %p370
    %p372 = scmp.ne.s32.totalorder %s360, %s361
    %p373 = scmp.eq.s32.totalorder %s31, 1
    %p374 = por %p372, %p373
    %p376 = scmp.ne.s32.totalorder %s361, %s375
    %p377 = scmp.eq.s32.totalorder %s31, 0
    %p378 = por %p376, %p377
    %s379 = ssub.s32 %s25, %s32
    %p380 = scmp.eq.s32.totalorder %s379, 0
    %s382 = sadd.s32 %s381, 1
    %s383 = scalar_select %p380, %s381, %s382
    %p386 = pneg %p380
    %p387 = scmp.eq.s32.totalorder %s25, 1
    %p388 = por %p386, %p387
    %p389 = scmp.ne.s32.totalorder %s381, %s384
    %p390 = scmp.eq.s32.totalorder %s25, 0
    %p391 = por %p389, %p390
    %p392 = scmp.ne.s32.totalorder %s381, %s384
    %p393 = scmp.eq.s32.totalorder %s30, 1
    %p394 = por %p392, %p393
    %p395 = scmp.ne.s32.totalorder %s384, %s385
    %p396 = scmp.eq.s32.totalorder %s30, 0
    %p397 = por %p395, %p396
    %p398 = scmp.ne.s32.totalorder %s384, %s385
    %p399 = scmp.eq.s32.totalorder %s31, 1
    %p400 = por %p398, %p399
    %p402 = scmp.ne.s32.totalorder %s385, %s401
    %p403 = scmp.eq.s32.totalorder %s31, 0
    %p404 = por %p402, %p403
    %s405 = ssub.s32 %s25, %s32
    %p406 = scmp.eq.s32.totalorder %s405, 0
    %s408 = sadd.s32 %s407, 1
    %s409 = scalar_select %p406, %s407, %s408
    %p412 = pneg %p406
    %p413 = scmp.eq.s32.totalorder %s25, 1
    %p414 = por %p412, %p413
    %p415 = scmp.ne.s32.totalorder %s407, %s410
    %p416 = scmp.eq.s32.totalorder %s25, 0
    %p417 = por %p415, %p416
    %p418 = scmp.ne.s32.totalorder %s407, %s410
    %p419 = scmp.eq.s32.totalorder %s30, 1
    %p420 = por %p418, %p419
    %p421 = scmp.ne.s32.totalorder %s410, %s411
    %p422 = scmp.eq.s32.totalorder %s30, 0
    %p423 = por %p421, %p422
    %p424 = scmp.ne.s32.totalorder %s410, %s411
    %p425 = scmp.eq.s32.totalorder %s31, 1
    %p426 = por %p424, %p425
    %p428 = scmp.ne.s32.totalorder %s411, %s427
    %p429 = scmp.eq.s32.totalorder %s31, 0
    %p430 = por %p428, %p429
    %s431 = ssub.s32 %s25, %s32
    %p432 = scmp.eq.s32.totalorder %s431, 0
    %s434 = sadd.s32 %s433, 1
    %s435 = scalar_select %p432, %s433, %s434
    %p438 = pneg %p432
    %p439 = scmp.eq.s32.totalorder %s25, 1
    %p440 = por %p438, %p439
    %p441 = scmp.ne.s32.totalorder %s433, %s436
    %p442 = scmp.eq.s32.totalorder %s25, 0
    %p443 = por %p441, %p442
    %p444 = scmp.ne.s32.totalorder %s433, %s436
    %p445 = scmp.eq.s32.totalorder %s30, 1
    %p446 = por %p444, %p445
    %p447 = scmp.ne.s32.totalorder %s436, %s437
    %p448 = scmp.eq.s32.totalorder %s30, 0
    %p449 = por %p447, %p448
    %p450 = scmp.ne.s32.totalorder %s436, %s437
    %p451 = scmp.eq.s32.totalorder %s31, 1
    %p452 = por %p450, %p451
    %p454 = scmp.ne.s32.totalorder %s437, %s453
    %p455 = scmp.eq.s32.totalorder %s31, 0
    %p456 = por %p454, %p455
    %p457 = scmp.le.s32.totalorder 1, %s25
    %p458 = scmp.lt.s32.totalorder %s25, 3
    %p459 = pnand %p457, %p458
    %p460 = pneg %p459
    // Predicated region
    $region9: #{unet_joint_level0_forward.1} parent=5 // pred_check
      _
    $region10: #{unet_joint_level0_forward.1} parent=5 // pred_check_branch
      %462 = sbr.rel (%p459) target = $region12
    $region11: #{unet_joint_level0_forward.1} parent=5 // pred_region
      %s463 = ssub.s32 %s25, 1
      // Predicated region
      $region13: #{unet_joint_level0_forward.1} parent=11 // pred_check
        %p464 = pneg %p98
      $region14: #{unet_joint_level0_forward.1} parent=11 // pred_check_branch
        %466 = sbr.rel (%p464) target = $region16
      $region15: #{unet_joint_level0_forward.1} parent=11 // pred_region
        _
      $region16: #{unet_joint_level0_forward.1} parent=11 // pred_fallthru
        _
      // Predicated region
      $region17: #{unet_joint_level0_forward.1} parent=11 // pred_check
        %p467 = pneg %p119
      $region18: #{unet_joint_level0_forward.1} parent=11 // pred_check_branch
        %469 = sbr.rel (%p467) target = $region20
      $region19: #{unet_joint_level0_forward.1} parent=11 // pred_region
        _
      $region20: #{unet_joint_level0_forward.1} parent=11 // pred_fallthru
        _
      // Predicated region
      $region21: #{unet_joint_level0_forward.1} parent=11 // pred_check
        %p470 = pneg %p140
      $region22: #{unet_joint_level0_forward.1} parent=11 // pred_check_branch
        %472 = sbr.rel (%p470) target = $region24
      $region23: #{unet_joint_level0_forward.1} parent=11 // pred_region
        _
      $region24: #{unet_joint_level0_forward.1} parent=11 // pred_fallthru
        _
      // Predicated region
      $region25: #{unet_joint_level0_forward.1} parent=11 // pred_check
        %p473 = pneg %p161
      $region26: #{unet_joint_level0_forward.1} parent=11 // pred_check_branch
        %475 = sbr.rel (%p473) target = $region28
      $region27: #{unet_joint_level0_forward.1} parent=11 // pred_region
        _
      $region28: #{unet_joint_level0_forward.1} parent=11 // pred_fallthru
        _
      // Predicated region
      $region29: #{unet_joint_level0_forward.1} parent=11 // pred_check
        %p476 = pneg %p182
      $region30: #{unet_joint_level0_forward.1} parent=11 // pred_check_branch
        %478 = sbr.rel (%p476) target = $region32
      $region31: #{unet_joint_level0_forward.1} parent=11 // pred_region
        _
      $region32: #{unet_joint_level0_forward.1} parent=11 // pred_fallthru
        _
      // Predicated region
      $region33: #{unet_joint_level0_forward.1} parent=11 // pred_check
        %p479 = pneg %p203
      $region34: #{unet_joint_level0_forward.1} parent=11 // pred_check_branch
        %481 = sbr.rel (%p479) target = $region36
      $region35: #{unet_joint_level0_forward.1} parent=11 // pred_region
        _
      $region36: #{unet_joint_level0_forward.1} parent=11 // pred_fallthru
        _
      // Predicated region
      $region37: #{unet_joint_level0_forward.1} parent=11 // pred_check
        %p482 = pneg %p224
      $region38: #{unet_joint_level0_forward.1} parent=11 // pred_check_branch
        %484 = sbr.rel (%p482) target = $region40
      $region39: #{unet_joint_level0_forward.1} parent=11 // pred_region
        _
      $region40: #{unet_joint_level0_forward.1} parent=11 // pred_fallthru
        _
      // Predicated region
      $region41: #{unet_joint_level0_forward.1} parent=11 // pred_check
        %p485 = pneg %p245
      $region42: #{unet_joint_level0_forward.1} parent=11 // pred_check_branch
        %487 = sbr.rel (%p485) target = $region44
      $region43: #{unet_joint_level0_forward.1} parent=11 // pred_region
        _
      $region44: #{unet_joint_level0_forward.1} parent=11 // pred_fallthru
        _
      // Predicated region
      $region45: #{unet_joint_level0_forward.1} parent=11 // pred_check
        %p488 = pneg %p266
      $region46: #{unet_joint_level0_forward.1} parent=11 // pred_check_branch
        %490 = sbr.rel (%p488) target = $region48
      $region47: #{unet_joint_level0_forward.1} parent=11 // pred_region
        _
      $region48: #{unet_joint_level0_forward.1} parent=11 // pred_fallthru
        _
      // Predicated region
      $region49: #{unet_joint_level0_forward.1} parent=11 // pred_check
        %p491 = pneg %p287
      $region50: #{unet_joint_level0_forward.1} parent=11 // pred_check_branch
        %493 = sbr.rel (%p491) target = $region52
      $region51: #{unet_joint_level0_forward.1} parent=11 // pred_region
        _
      $region52: #{unet_joint_level0_forward.1} parent=11 // pred_fallthru
        _
      // Predicated region
      $region53: #{unet_joint_level0_forward.1} parent=11 // pred_check
        %p494 = pneg %p308
      $region54: #{unet_joint_level0_forward.1} parent=11 // pred_check_branch
        %496 = sbr.rel (%p494) target = $region56
      $region55: #{unet_joint_level0_forward.1} parent=11 // pred_region
        _
      $region56: #{unet_joint_level0_forward.1} parent=11 // pred_fallthru
        _
      // Predicated region
      $region57: #{unet_joint_level0_forward.1} parent=11 // pred_check
        %p497 = pneg %p329
      $region58: #{unet_joint_level0_forward.1} parent=11 // pred_check_branch
        %499 = sbr.rel (%p497) target = $region60
      $region59: #{unet_joint_level0_forward.1} parent=11 // pred_region
        _
      $region60: #{unet_joint_level0_forward.1} parent=11 // pred_fallthru
        _
      // Predicated region
      $region61: #{unet_joint_level0_forward.1} parent=11 // pred_check
        %p500 = pneg %p350
      $region62: #{unet_joint_level0_forward.1} parent=11 // pred_check_branch
        %502 = sbr.rel (%p500) target = $region64
      $region63: #{unet_joint_level0_forward.1} parent=11 // pred_region
        _
      $region64: #{unet_joint_level0_forward.1} parent=11 // pred_fallthru
        _
      // Predicated region
      $region65: #{unet_joint_level0_forward.1} parent=11 // pred_check
        %p503 = pneg %p371
      $region66: #{unet_joint_level0_forward.1} parent=11 // pred_check_branch
        %505 = sbr.rel (%p503) target = $region68
      $region67: #{unet_joint_level0_forward.1} parent=11 // pred_region
        _
      $region68: #{unet_joint_level0_forward.1} parent=11 // pred_fallthru
        _
    $region12: #{unet_joint_level0_forward.1} parent=5 // pred_fallthru
      _
    %p506 = scmp.lt.s32.totalorder %s25, 2
    // Predicated region
    $region69: #{unet_joint_level0_forward.1} parent=5 // pred_check
      %p507 = pneg %p506
    $region70: #{unet_joint_level0_forward.1} parent=5 // pred_check_branch
      %509 = sbr.rel (%p507) target = $region72
    $region71: #{unet_joint_level0_forward.1} parent=5 // pred_region
      // Predicated region
      $region73: #{unet_joint_level0_forward.1} parent=71 // pred_check
        %p510 = pneg %p45
      $region74: #{unet_joint_level0_forward.1} parent=71 // pred_check_branch
        %512 = sbr.rel (%p510) target = $region76
      $region75: #{unet_joint_level0_forward.1} parent=71 // pred_region
        %p513 = scmp.lt.s32.totalorder %s25, 1
        %s514 = scalar_select %p513, %s25, 1
        %s515 = smul.addr %s514, 2
        %s516 = smul.addr %s515, 8
        %s517 = scalar_lea.vmem %s0, %s516
      $region76: #{unet_joint_level0_forward.1} parent=71 // pred_fallthru
        _
      // Predicated region
      $region77: #{unet_joint_level0_forward.1} parent=71 // pred_check
        %p518 = pneg %p71
      $region78: #{unet_joint_level0_forward.1} parent=71 // pred_check_branch
        %520 = sbr.rel (%p518) target = $region80
      $region79: #{unet_joint_level0_forward.1} parent=71 // pred_region
        %p521 = scmp.lt.s32.totalorder %s25, 1
        %s522 = scalar_select %p521, %s25, 1
        %s523 = smul.addr %s522, 2
        %s524 = smul.addr %s523, 8
        %s525 = scalar_lea.vmem %s1, %s524
      $region80: #{unet_joint_level0_forward.1} parent=71 // pred_fallthru
        _
    $region72: #{unet_joint_level0_forward.1} parent=5 // pred_fallthru
      _
    %p526 = scmp.le.s32.totalorder 1, %s25
    %p527 = scmp.lt.s32.totalorder %s25, 3
    %p528 = pnand %p526, %p527
    %p529 = pneg %p528
    // Predicated region
    $region81: #{unet_joint_level0_forward.1} parent=5 // pred_check
      _
    $region82: #{unet_joint_level0_forward.1} parent=5 // pred_check_branch
      %531 = sbr.rel (%p528) target = $region84
    $region83: #{unet_joint_level0_forward.1} parent=5 // pred_region
      %s532 = ssub.s32 %s25, 1
      %p533 = scmp.lt.s32.totalorder %s30, 1
      %s534 = scalar_select %p533, %s30, 1
      %s535 = smul.addr %s534, 2
      %s536 = smul.addr %s535, 8
      %s537 = scalar_lea.vmem %s0, %s536
      %p538 = pneg %p51
      %p539 = pneg %p48
      %p540 = scmp.lt.s32.totalorder %s30, 1
      %s541 = scalar_select %p540, %s30, 1
      %s542 = smul.addr %s541, 2
      %s543 = smul.addr %s542, 8
      %s544 = scalar_lea.vmem %s1, %s543
      %p545 = pneg %p77
      %p546 = pneg %p74
      %p547 = pneg %p98
      %p548 = pneg %p95
      %p549 = pneg %p119
      %p550 = pneg %p116
      %p551 = pneg %p140
      %p552 = pneg %p137
      %p553 = pneg %p161
      %p554 = pneg %p158
      %p555 = pneg %p182
      %p556 = pneg %p179
      %p557 = pneg %p203
      %p558 = pneg %p200
      %p559 = pneg %p224
      %p560 = pneg %p221
      %p561 = pneg %p245
      %p562 = pneg %p242
      %p563 = pneg %p266
      %p564 = pneg %p263
      %p565 = pneg %p287
      %p566 = pneg %p284
      %p567 = pneg %p308
      %p568 = pneg %p305
      %p569 = pneg %p329
      %p570 = pneg %p326
      %p571 = pneg %p350
      %p572 = pneg %p347
      %p573 = pneg %p371
      %p574 = pneg %p368
      %p575 = pneg %p397
      %p576 = pneg %p394
      %p577 = scmp.lt.s32.totalorder %s30, 1
      %s578 = scalar_select %p577, %s30, 1
      %s579 = smul.addr %s578, 2
      %s580 = smul.addr %s579, 4
      %s581 = scalar_lea.vmem %s16, %s580
      %p582 = pneg %p423
      %p583 = pneg %p420
      %p584 = scmp.lt.s32.totalorder %s30, 1
      %s585 = scalar_select %p584, %s30, 1
      %s586 = smul.addr %s585, 2
      %s587 = smul.addr %s586, 4
      %s588 = scalar_lea.vmem %s17, %s587
      %p589 = pneg %p449
      %p590 = pneg %p446
      %p591 = scmp.lt.s32.totalorder %s30, 1
      %s592 = scalar_select %p591, %s30, 1
      %s593 = smul.addr %s592, 2
      %s594 = smul.addr %s593, 4
      %s595 = scalar_lea.vmem %s18, %s594
      %p596 = scmp.lt.s32.totalorder %s30, 1
      %s597 = scalar_select %p596, %s30, 1
      %s598 = smul.addr %s597, 2
      %s599 = smul.addr %s598, 8
      %s600 = scalar_lea.vmem %s0, %s599
      %p601 = scmp.lt.s32.totalorder %s30, 1
      %s602 = scalar_select %p601, %s30, 1
      %s603 = smul.addr %s602, 2
      %s604 = smul.addr %s603, 8
      %s605 = scalar_lea.vmem %s1, %s604
      %p606 = scmp.lt.s32.totalorder %s30, 1
      %s607 = scalar_select %p606, %s30, 1
      %s608 = smul.addr %s607, 2
      %s609 = smul.addr %s608, 4
      %s610 = scalar_lea.vmem %s16, %s609
      %p611 = scmp.lt.s32.totalorder %s30, 1
      %s612 = scalar_select %p611, %s30, 1
      %s613 = smul.addr %s612, 2
      %s614 = smul.addr %s613, 4
      %s615 = scalar_lea.vmem %s17, %s614
      %p616 = scmp.lt.s32.totalorder %s30, 1
      %s617 = scalar_select %p616, %s30, 1
      %s618 = smul.addr %s617, 2
      %s619 = smul.addr %s618, 4
      %s620 = scalar_lea.vmem %s18, %s619
      %v621 = vld [vmem:[%s600] sm:$0xff]
      %v622 = vld [vmem:[%s600 + $0x8] sm:$0xff]
      %v623 = vld [vmem:[%s605] sm:$0xff]
      %v624 = vld [vmem:[%s605 + $0x8] sm:$0xff]
      %v625 = vld [vmem:[%s2] sm:$0xff]
      %v626 = vld [vmem:[%s3] sm:$0xff]
      %v627 = vlaneseq
      %v628 = vand.u32 %v627, 127
      %v629 = vadd.s32 %v628, 128
      %v630 = vadd.s32 %v628, 256
      %v631 = vadd.s32 %v628, 384
      %v632 = vand.u32 %v628, 255
      %v633 = vand.u32 %v629, 255
      %v634 = vand.u32 %v630, 255
      %v635 = vand.u32 %v631, 255
      %v636 = vshra.s32 %v632, 4
      %v637 = vshra.s32 %v633, 4
      %v638 = vshra.s32 %v634, 4
      %v639 = vshra.s32 %v635, 4
      %v640 = vand.u32 %v628, 15
      %v641 = vand.u32 %v629, 15
      %v642 = vand.u32 %v630, 15
      %v643 = vand.u32 %v631, 15
      %645 = vrot.lane.b32.xlu0 %v624, 17
      %v646 = vpop.permute.xlu0 %645
      %651 = vrot.lane.b32.xlu0 %v621, 17
      %v652 = vpop.permute.xlu0 %651
      %653 = vrot.lane.b32.xlu0 %v622, 17
      %v654 = vpop.permute.xlu0 %653
      %655 = vrot.lane.b32.xlu0 %v623, 17
      %v656 = vpop.permute.xlu0 %655
      %vm657 = vcmask 138240
      %v658 = vsel %vm657, %v652, %v654
      %v659 = vsel %vm657, %v654, %v656
      %v660 = vsel %vm657, %v656, %v646
      %v665 = vsel %vm657, %v646, %v652
      %vm666 = vcmp.ge.s32.totalorder %v636, 1
      %vm667 = vcmp.ge.s32.totalorder %v637, 1
      %vm668 = vcmp.ge.s32.totalorder %v638, 1
      %vm669 = vcmp.ge.s32.totalorder %v639, 1
      %vm670 = vcmp.ge.s32.totalorder %v640, 1
      %vm671 = vcmp.ge.s32.totalorder %v641, 1
      %vm672 = vcmp.ge.s32.totalorder %v642, 1
      %vm673 = vcmp.ge.s32.totalorder %v643, 1
      %vm674 = vmand %vm666, %vm670
      %vm675 = vmand %vm667, %vm671
      %vm676 = vmand %vm668, %vm672
      %vm677 = vmand %vm669, %vm673
      %v678 = vsel %vm674, 1, 0
      %v679 = vsel %vm675, 1, 0
      %v680 = vsel %vm676, 1, 0
      %v681 = vsel %vm677, 1, 0
      %vm682 = vcmp.eq.s32.totalorder %v678, 1
      %vm683 = vcmp.eq.s32.totalorder %v679, 1
      %vm684 = vcmp.eq.s32.totalorder %v680, 1
      %vm685 = vcmp.eq.s32.totalorder %v681, 1
      %v686 = vsel %vm682, %v665, 0.0
      %v687 = vsel %vm683, %v658, 0.0
      %v688 = vsel %vm684, %v659, 0.0
      %v689 = vsel %vm685, %v660, 0.0
      %690 = vrot.lane.b32.xlu0 %v624, 16
      %v691 = vpop.permute.xlu0 %690
      %693 = vrot.lane.b32.xlu0 %v621, 16
      %v694 = vpop.permute.xlu0 %693
      %695 = vrot.lane.b32.xlu0 %v622, 16
      %v696 = vpop.permute.xlu0 %695
      %697 = vrot.lane.b32.xlu0 %v623, 16
      %v698 = vpop.permute.xlu0 %697
      %vm699 = vcmask 130048
      %v700 = vsel %vm699, %v694, %v696
      %v701 = vsel %vm699, %v696, %v698
      %v702 = vsel %vm699, %v698, %v691
      %v707 = vsel %vm699, %v691, %v694
      %v708 = vsel %vm666, 1, 0
      %v709 = vsel %vm667, 1, 0
      %v710 = vsel %vm668, 1, 0
      %v711 = vsel %vm669, 1, 0
      %vm712 = vcmp.eq.s32.totalorder %v708, 1
      %vm713 = vcmp.eq.s32.totalorder %v709, 1
      %vm714 = vcmp.eq.s32.totalorder %v710, 1
      %vm715 = vcmp.eq.s32.totalorder %v711, 1
      %v716 = vsel %vm712, %v707, 0.0
      %v717 = vsel %vm713, %v700, 0.0
      %v718 = vsel %vm714, %v701, 0.0
      %v719 = vsel %vm715, %v702, 0.0
      %720 = vrot.lane.b32.xlu0 %v624, 15
      %v721 = vpop.permute.xlu0 %720
      %723 = vrot.lane.b32.xlu0 %v621, 15
      %v724 = vpop.permute.xlu0 %723
      %725 = vrot.lane.b32.xlu0 %v622, 15
      %v726 = vpop.permute.xlu0 %725
      %727 = vrot.lane.b32.xlu0 %v623, 15
      %v728 = vpop.permute.xlu0 %727
      %vm729 = vcmask 121856
      %v730 = vsel %vm729, %v724, %v726
      %v731 = vsel %vm729, %v726, %v728
      %v732 = vsel %vm729, %v728, %v721
      %v737 = vsel %vm729, %v721, %v724
      %vm738 = vcmp.le.s32.totalorder %v640, 14
      %vm739 = vcmp.le.s32.totalorder %v641, 14
      %vm740 = vcmp.le.s32.totalorder %v642, 14
      %vm741 = vcmp.le.s32.totalorder %v643, 14
      %vm742 = vmand %vm666, %vm738
      %vm743 = vmand %vm667, %vm739
      %vm744 = vmand %vm668, %vm740
      %vm745 = vmand %vm669, %vm741
      %v746 = vsel %vm742, 1, 0
      %v747 = vsel %vm743, 1, 0
      %v748 = vsel %vm744, 1, 0
      %v749 = vsel %vm745, 1, 0
      %vm750 = vcmp.eq.s32.totalorder %v746, 1
      %vm751 = vcmp.eq.s32.totalorder %v747, 1
      %vm752 = vcmp.eq.s32.totalorder %v748, 1
      %vm753 = vcmp.eq.s32.totalorder %v749, 1
      %v754 = vsel %vm750, %v737, 0.0
      %v755 = vsel %vm751, %v730, 0.0
      %v756 = vsel %vm752, %v731, 0.0
      %v757 = vsel %vm753, %v732, 0.0
      %758 = vrot.lane.b32.xlu0 %v624, 1
      %v759 = vpop.permute.xlu0 %758
      %761 = vrot.lane.b32.xlu0 %v621, 1
      %v762 = vpop.permute.xlu0 %761
      %763 = vrot.lane.b32.xlu0 %v622, 1
      %v764 = vpop.permute.xlu0 %763
      %765 = vrot.lane.b32.xlu0 %v623, 1
      %v766 = vpop.permute.xlu0 %765
      %vm767 = vcmask 7168
      %v768 = vsel %vm767, %v762, %v764
      %v769 = vsel %vm767, %v764, %v766
      %v770 = vsel %vm767, %v766, %v759
      %v775 = vsel %vm767, %v759, %v762
      %v776 = vsel %vm670, 1, 0
      %v777 = vsel %vm671, 1, 0
      %v778 = vsel %vm672, 1, 0
      %v779 = vsel %vm673, 1, 0
      %vm780 = vcmp.eq.s32.totalorder %v776, 1
      %vm781 = vcmp.eq.s32.totalorder %v777, 1
      %vm782 = vcmp.eq.s32.totalorder %v778, 1
      %vm783 = vcmp.eq.s32.totalorder %v779, 1
      %v784 = vsel %vm780, %v775, 0.0
      %v785 = vsel %vm781, %v768, 0.0
      %v786 = vsel %vm782, %v769, 0.0
      %v787 = vsel %vm783, %v770, 0.0
      %788 = vrot.lane.b32.xlu0 %v621, 127
      %v789 = vpop.permute.xlu0 %788
      %790 = vrot.lane.b32.xlu0 %v622, 127
      %v791 = vpop.permute.xlu0 %790
      %792 = vrot.lane.b32.xlu0 %v623, 127
      %v793 = vpop.permute.xlu0 %792
      %794 = vrot.lane.b32.xlu0 %v624, 127
      %v795 = vpop.permute.xlu0 %794
      %vm796 = vcmask 1039360
      %v797 = vsel %vm796, %v789, %v791
      %v798 = vsel %vm796, %v791, %v793
      %v799 = vsel %vm796, %v793, %v795
      %v805 = vsel %vm796, %v795, %v789
      %v806 = vsel %vm738, 1, 0
      %v807 = vsel %vm739, 1, 0
      %v808 = vsel %vm740, 1, 0
      %v809 = vsel %vm741, 1, 0
      %vm810 = vcmp.eq.s32.totalorder %v806, 1
      %vm811 = vcmp.eq.s32.totalorder %v807, 1
      %vm812 = vcmp.eq.s32.totalorder %v808, 1
      %vm813 = vcmp.eq.s32.totalorder %v809, 1
      %v814 = vsel %vm810, %v797, 0.0
      %v815 = vsel %vm811, %v798, 0.0
      %v816 = vsel %vm812, %v799, 0.0
      %v817 = vsel %vm813, %v805, 0.0
      %818 = vrot.lane.b32.xlu0 %v621, 113
      %v819 = vpop.permute.xlu0 %818
      %820 = vrot.lane.b32.xlu0 %v622, 113
      %v821 = vpop.permute.xlu0 %820
      %822 = vrot.lane.b32.xlu0 %v623, 113
      %v823 = vpop.permute.xlu0 %822
      %824 = vrot.lane.b32.xlu0 %v624, 113
      %v825 = vpop.permute.xlu0 %824
      %vm826 = vcmask 924672
      %v827 = vsel %vm826, %v819, %v821
      %v828 = vsel %vm826, %v821, %v823
      %v829 = vsel %vm826, %v823, %v825
      %v835 = vsel %vm826, %v825, %v819
      %vm836 = vcmp.le.s32.totalorder %v636, 14
      %vm837 = vcmp.le.s32.totalorder %v637, 14
      %vm838 = vcmp.le.s32.totalorder %v638, 14
      %vm839 = vcmp.le.s32.totalorder %v639, 14
      %vm840 = vmand %vm836, %vm670
      %vm841 = vmand %vm837, %vm671
      %vm842 = vmand %vm838, %vm672
      %vm843 = vmand %vm839, %vm673
      %v844 = vsel %vm840, 1, 0
      %v845 = vsel %vm841, 1, 0
      %v846 = vsel %vm842, 1, 0
      %v847 = vsel %vm843, 1, 0
      %vm848 = vcmp.eq.s32.totalorder %v844, 1
      %vm849 = vcmp.eq.s32.totalorder %v845, 1
      %vm850 = vcmp.eq.s32.totalorder %v846, 1
      %vm851 = vcmp.eq.s32.totalorder %v847, 1
      %v852 = vsel %vm848, %v827, 0.0
      %v853 = vsel %vm849, %v828, 0.0
      %v854 = vsel %vm850, %v829, 0.0
      %v855 = vsel %vm851, %v835, 0.0
      %856 = vrot.lane.b32.xlu0 %v621, 112
      %v857 = vpop.permute.xlu0 %856
      %858 = vrot.lane.b32.xlu0 %v622, 112
      %v859 = vpop.permute.xlu0 %858
      %860 = vrot.lane.b32.xlu0 %v623, 112
      %v861 = vpop.permute.xlu0 %860
      %862 = vrot.lane.b32.xlu0 %v624, 112
      %v863 = vpop.permute.xlu0 %862
      %vm864 = vcmask 916480
      %v865 = vsel %vm864, %v857, %v859
      %v866 = vsel %vm864, %v859, %v861
      %v867 = vsel %vm864, %v861, %v863
      %v873 = vsel %vm864, %v863, %v857
      %v874 = vsel %vm836, 1, 0
      %v875 = vsel %vm837, 1, 0
      %v876 = vsel %vm838, 1, 0
      %v877 = vsel %vm839, 1, 0
      %vm878 = vcmp.eq.s32.totalorder %v874, 1
      %vm879 = vcmp.eq.s32.totalorder %v875, 1
      %vm880 = vcmp.eq.s32.totalorder %v876, 1
      %vm881 = vcmp.eq.s32.totalorder %v877, 1
      %v882 = vsel %vm878, %v865, 0.0
      %v883 = vsel %vm879, %v866, 0.0
      %v884 = vsel %vm880, %v867, 0.0
      %v885 = vsel %vm881, %v873, 0.0
      %886 = vrot.lane.b32.xlu0 %v621, 111
      %v887 = vpop.permute.xlu0 %886
      %888 = vrot.lane.b32.xlu0 %v622, 111
      %v889 = vpop.permute.xlu0 %888
      %890 = vrot.lane.b32.xlu0 %v623, 111
      %v891 = vpop.permute.xlu0 %890
      %892 = vrot.lane.b32.xlu0 %v624, 111
      %v893 = vpop.permute.xlu0 %892
      %vm894 = vcmask 908288
      %v895 = vsel %vm894, %v887, %v889
      %v896 = vsel %vm894, %v889, %v891
      %v897 = vsel %vm894, %v891, %v893
      %v903 = vsel %vm894, %v893, %v887
      %vm904 = vmand %vm836, %vm738
      %vm905 = vmand %vm837, %vm739
      %vm906 = vmand %vm838, %vm740
      %vm907 = vmand %vm839, %vm741
      %v908 = vsel %vm904, 1, 0
      %v909 = vsel %vm905, 1, 0
      %v910 = vsel %vm906, 1, 0
      %v911 = vsel %vm907, 1, 0
      %vm912 = vcmp.eq.s32.totalorder %v908, 1
      %vm913 = vcmp.eq.s32.totalorder %v909, 1
      %vm914 = vcmp.eq.s32.totalorder %v910, 1
      %vm915 = vcmp.eq.s32.totalorder %v911, 1
      %v916 = vsel %vm912, %v895, 0.0
      %v917 = vsel %vm913, %v896, 0.0
      %v918 = vsel %vm914, %v897, 0.0
      %v919 = vsel %vm915, %v903, 0.0
      %921 = vset.pattern.permute.xlu0 0
      %922 = vperm.xlu0 %921, %v626
      %v923 = vpop.permute.xlu0 %922
      %vm925 = vcmask 588800
      %v927 = vsel %vm925, %v625, 0
      %929 = vmatprep.subr.mxu0 %v687
      %930 = vmatpush1.msra.mxu0 %v686
      %931 = vmatprep.subr.mxu0 %v717
      %932 = vmatpush1.msra.mxu0 %v716
      %933 = vmatprep.subr.mxu0 %v755
      %934 = vmatpush1.msra.mxu0 %v754
      %935 = vmatprep.subr.mxu0 %v785
      %936 = vmatpush1.msra.mxu0 %v784
      %937 = vmatprep.subr.mxu0 %v622
      %938 = vmatpush1.msra.mxu0 %v621
      %939 = vmatprep.subr.mxu0 %v815
      %940 = vmatpush1.msra.mxu0 %v814
      %941 = vmatprep.subr.mxu0 %v853
      %942 = vmatpush1.msra.mxu0 %v852
      %943 = vmatprep.subr.mxu0 %v883
      %944 = vmatpush1.msra.mxu0 %v882
      %945 = vmatprep.subr.mxu0 %v917
      %946 = vmatpush1.msra.mxu0 %v916
      %947 = vmatprep.subr.mxu0 0.0
      %948 = vmatpush1.msra.mxu0 0.0
      %949 = vmatprep.subr.mxu0 0.0
      %950 = vmatpush1.msra.mxu0 0.0
      %951 = vmatprep.subr.mxu0 0.0
      %952 = vmatpush1.msra.mxu0 0.0
      %953 = vmatprep.subr.mxu0 0.0
      %954 = vmatpush1.msra.mxu0 0.0
      %955 = vmatprep.subr.mxu0 0.0
      %956 = vmatpush1.msra.mxu0 0.0
      %957 = vmatprep.subr.mxu0 0.0
      %958 = vmatpush1.msra.mxu0 0.0
      %959 = vmatprep.subr.mxu0 0.0
      %960 = vmatpush1.msra.mxu0 0.0
      %961 = vmatprep.subr.mxu0 0.0
      %962 = vmatpush1.msra.mxu0 0.0
      %963 = vmatprep.subr.mxu0 0.0
      %964 = vmatpush1.msra.mxu0 0.0
      %965 = vmatprep.subr.mxu0 0.0
      %966 = vmatpush1.msra.mxu0 0.0
      %967 = vmatprep.subr.mxu0 0.0
      %968 = vmatpush1.msra.mxu0 0.0
      %969 = vmatprep.subr.mxu0 0.0
      %970 = vmatpush1.msra.mxu0 0.0
      %971 = vmatprep.subr.mxu0 0.0
      %972 = vmatpush1.msra.mxu0 0.0
      %973 = vmatprep.subr.mxu0 0.0
      %974 = vmatpush1.msra.mxu0 0.0
      %975 = vmatprep.subr.mxu0 0.0
      %976 = vmatpush1.msra.mxu0 0.0
      %977 = vmatprep.subr.mxu0 0.0
      %978 = vmatpush1.msra.mxu0 0.0
      %979 = vmatprep.subr.mxu0 0.0
      %980 = vmatpush1.msra.mxu0 0.0
      %981 = vmatprep.subr.mxu0 0.0
      %982 = vmatpush1.msra.mxu0 0.0
      %983 = vmatprep.subr.mxu0 0.0
      %984 = vmatpush1.msra.mxu0 0.0
      %985 = vmatprep.subr.mxu0 0.0
      %986 = vmatpush1.msra.mxu0 0.0
      %987 = vmatprep.subr.mxu0 0.0
      %988 = vmatpush1.msra.mxu0 0.0
      %989 = vmatprep.subr.mxu0 0.0
      %990 = vmatpush1.msra.mxu0 0.0
      %991 = vmatprep.subr.mxu0 0.0
      %992 = vmatpush1.msra.mxu0 0.0
      %993 = vmatprep.mubr.f32.mxu0 0.0
      %994 = vmatmul.mubr.f32.gmra.mrb[0].mxu0 %v927
      %v995 = vpop.f32.mrb[0].mxu0
      %v996 = vadd.f32 %v923, %v995
      %v997 = vpop.f32.mrb[0].mxu0
      %v998 = vadd.f32 %v923, %v997
      %999 = vdwg.mxu0
      %1000 = vmatprep.subr.mxu0 %v689
      %1001 = vmatpush1.msra.mxu0 %v688
      %1002 = vmatprep.subr.mxu0 %v719
      %1003 = vmatpush1.msra.mxu0 %v718
      %1004 = vmatprep.subr.mxu0 %v757
      %1005 = vmatpush1.msra.mxu0 %v756
      %1006 = vmatprep.subr.mxu0 %v787
      %1007 = vmatpush1.msra.mxu0 %v786
      %1008 = vmatprep.subr.mxu0 %v624
      %1009 = vmatpush1.msra.mxu0 %v623
      %1010 = vmatprep.subr.mxu0 %v817
      %1011 = vmatpush1.msra.mxu0 %v816
      %1012 = vmatprep.subr.mxu0 %v855
      %1013 = vmatpush1.msra.mxu0 %v854
      %1014 = vmatprep.subr.mxu0 %v885
      %1015 = vmatpush1.msra.mxu0 %v884
      %1016 = vmatprep.subr.mxu0 %v919
      %1017 = vmatpush1.msra.mxu0 %v918
      %1018 = vmatprep.subr.mxu0 0.0
      %1019 = vmatpush1.msra.mxu0 0.0
      %1020 = vmatprep.subr.mxu0 0.0
      %1021 = vmatpush1.msra.mxu0 0.0
      %1022 = vmatprep.subr.mxu0 0.0
      %1023 = vmatpush1.msra.mxu0 0.0
      %1024 = vmatprep.subr.mxu0 0.0
      %1025 = vmatpush1.msra.mxu0 0.0
      %1026 = vmatprep.subr.mxu0 0.0
      %1027 = vmatpush1.msra.mxu0 0.0
      %1028 = vmatprep.subr.mxu0 0.0
      %1029 = vmatpush1.msra.mxu0 0.0
      %1030 = vmatprep.subr.mxu0 0.0
      %1031 = vmatpush1.msra.mxu0 0.0
      %1032 = vmatprep.subr.mxu0 0.0
      %1033 = vmatpush1.msra.mxu0 0.0
      %1034 = vmatprep.subr.mxu0 0.0
      %1035 = vmatpush1.msra.mxu0 0.0
      %1036 = vmatprep.subr.mxu0 0.0
      %1037 = vmatpush1.msra.mxu0 0.0
      %1038 = vmatprep.subr.mxu0 0.0
      %1039 = vmatpush1.msra.mxu0 0.0
      %1040 = vmatprep.subr.mxu0 0.0
      %1041 = vmatpush1.msra.mxu0 0.0
      %1042 = vmatprep.subr.mxu0 0.0
      %1043 = vmatpush1.msra.mxu0 0.0
      %1044 = vmatprep.subr.mxu0 0.0
      %1045 = vmatpush1.msra.mxu0 0.0
      %1046 = vmatprep.subr.mxu0 0.0
      %1047 = vmatpush1.msra.mxu0 0.0
      %1048 = vmatprep.subr.mxu0 0.0
      %1049 = vmatpush1.msra.mxu0 0.0
      %1050 = vmatprep.subr.mxu0 0.0
      %1051 = vmatpush1.msra.mxu0 0.0
      %1052 = vmatprep.subr.mxu0 0.0
      %1053 = vmatpush1.msra.mxu0 0.0
      %1054 = vmatprep.subr.mxu0 0.0
      %1055 = vmatpush1.msra.mxu0 0.0
      %1056 = vmatprep.subr.mxu0 0.0
      %1057 = vmatpush1.msra.mxu0 0.0
      %1058 = vmatprep.subr.mxu0 0.0
      %1059 = vmatpush1.msra.mxu0 0.0
      %1060 = vmatprep.subr.mxu0 0.0
      %1061 = vmatpush1.msra.mxu0 0.0
      %1062 = vmatprep.subr.mxu0 0.0
      %1063 = vmatpush1.msra.mxu0 0.0
      %1064 = vmatprep.mubr.f32.mxu0 0.0
      %1065 = vmatmul.mubr.f32.gmra.mrb[0].mxu0 %v927
      %v1066 = vpop.f32.mrb[0].mxu0
      %v1067 = vadd.f32 %v923, %v1066
      %v1068 = vpop.f32.mrb[0].mxu0
      %v1069 = vadd.f32 %v923, %v1068
      %1070 = vdwg.mxu0
      %vm1071 = vcmp.ge.f32.partialorder %v996, 0.0
      %vm1072 = vcmp.ge.f32.partialorder %v998, 0.0
      %vm1073 = vcmp.ge.f32.partialorder %v1067, 0.0
      %vm1074 = vcmp.ge.f32.partialorder %v1069, 0.0
      %v1075 = vmul.f32 %v996, 0.2
      %v1076 = vmul.f32 %v998, 0.2
      %v1077 = vmul.f32 %v1067, 0.2
      %v1078 = vmul.f32 %v1069, 0.2
      %v1079 = vsel %vm1071, %v996, %v1075
      %v1080 = vsel %vm1072, %v998, %v1076
      %v1081 = vsel %vm1073, %v1067, %v1077
      %v1082 = vsel %vm1074, %v1069, %v1078
      %v1085 = vcombine.low %v1079, %v1080
      %1087 = vst [vmem:[%s615] sm:$0xff] %v1085
      %v1090 = vcombine.low %v1081, %v1082
      %1092 = vst [vmem:[%s620] sm:$0xff] %v1090
      %v1093 = vld [vmem:[%s4] sm:$0xff]
      %v1094 = vld [vmem:[%s4 + $0x8] sm:$0xff]
      %v1095 = vld [vmem:[%s5] sm:$0xff]
      %1096 = vrot.lane.b32.xlu0 %v1080, 17
      %v1097 = vpop.permute.xlu0 %1096
      %1098 = vrot.lane.b32.xlu0 %v1082, 17
      %v1099 = vpop.permute.xlu0 %1098
      %1102 = vrot.lane.b32.xlu0 %v1079, 17
      %v1103 = vpop.permute.xlu0 %1102
      %1104 = vrot.lane.b32.xlu0 %v1081, 17
      %v1105 = vpop.permute.xlu0 %1104
      %v1106 = vsel %vm657, %v1103, %v1097
      %v1107 = vsel %vm657, %v1105, %v1099
      %v1112 = vsel %vm657, %v1097, %v1103
      %v1113 = vsel %vm657, %v1099, %v1105
      %v1114 = vsel %vm682, %v1112, 0.0
      %v1115 = vsel %vm683, %v1106, 0.0
      %v1116 = vsel %vm682, %v1113, 0.0
      %v1117 = vsel %vm683, %v1107, 0.0
      %1118 = vrot.lane.b32.xlu0 %v1080, 16
      %v1119 = vpop.permute.xlu0 %1118
      %1120 = vrot.lane.b32.xlu0 %v1082, 16
      %v1121 = vpop.permute.xlu0 %1120
      %1124 = vrot.lane.b32.xlu0 %v1079, 16
      %v1125 = vpop.permute.xlu0 %1124
      %1126 = vrot.lane.b32.xlu0 %v1081, 16
      %v1127 = vpop.permute.xlu0 %1126
      %v1128 = vsel %vm699, %v1125, %v1119
      %v1129 = vsel %vm699, %v1127, %v1121
      %v1134 = vsel %vm699, %v1119, %v1125
      %v1135 = vsel %vm699, %v1121, %v1127
      %v1136 = vsel %vm712, %v1134, 0.0
      %v1137 = vsel %vm713, %v1128, 0.0
      %v1138 = vsel %vm712, %v1135, 0.0
      %v1139 = vsel %vm713, %v1129, 0.0
      %1140 = vrot.lane.b32.xlu0 %v1080, 15
      %v1141 = vpop.permute.xlu0 %1140
      %1142 = vrot.lane.b32.xlu0 %v1082, 15
      %v1143 = vpop.permute.xlu0 %1142
      %1146 = vrot.lane.b32.xlu0 %v1079, 15
      %v1147 = vpop.permute.xlu0 %1146
      %1148 = vrot.lane.b32.xlu0 %v1081, 15
      %v1149 = vpop.permute.xlu0 %1148
      %v1150 = vsel %vm729, %v1147, %v1141
      %v1151 = vsel %vm729, %v1149, %v1143
      %v1156 = vsel %vm729, %v1141, %v1147
      %v1157 = vsel %vm729, %v1143, %v1149
      %v1158 = vsel %vm750, %v1156, 0.0
      %v1159 = vsel %vm751, %v1150, 0.0
      %v1160 = vsel %vm750, %v1157, 0.0
      %v1161 = vsel %vm751, %v1151, 0.0
      %1162 = vrot.lane.b32.xlu0 %v1080, 1
      %v1163 = vpop.permute.xlu0 %1162
      %1164 = vrot.lane.b32.xlu0 %v1082, 1
      %v1165 = vpop.permute.xlu0 %1164
      %1168 = vrot.lane.b32.xlu0 %v1079, 1
      %v1169 = vpop.permute.xlu0 %1168
      %1170 = vrot.lane.b32.xlu0 %v1081, 1
      %v1171 = vpop.permute.xlu0 %1170
      %v1172 = vsel %vm767, %v1169, %v1163
      %v1173 = vsel %vm767, %v1171, %v1165
      %v1178 = vsel %vm767, %v1163, %v1169
      %v1179 = vsel %vm767, %v1165, %v1171
      %v1180 = vsel %vm780, %v1178, 0.0
      %v1181 = vsel %vm781, %v1172, 0.0
      %v1182 = vsel %vm780, %v1179, 0.0
      %v1183 = vsel %vm781, %v1173, 0.0
      %1184 = vrot.lane.b32.xlu0 %v1079, 127
      %v1185 = vpop.permute.xlu0 %1184
      %1186 = vrot.lane.b32.xlu0 %v1080, 127
      %v1187 = vpop.permute.xlu0 %1186
      %1188 = vrot.lane.b32.xlu0 %v1081, 127
      %v1189 = vpop.permute.xlu0 %1188
      %1190 = vrot.lane.b32.xlu0 %v1082, 127
      %v1191 = vpop.permute.xlu0 %1190
      %v1192 = vsel %vm796, %v1185, %v1187
      %v1193 = vsel %vm796, %v1189, %v1191
      %v1200 = vsel %vm796, %v1187, %v1185
      %v1201 = vsel %vm796, %v1191, %v1189
      %v1202 = vsel %vm810, %v1192, 0.0
      %v1203 = vsel %vm811, %v1200, 0.0
      %v1204 = vsel %vm810, %v1193, 0.0
      %v1205 = vsel %vm811, %v1201, 0.0
      %1206 = vrot.lane.b32.xlu0 %v1079, 113
      %v1207 = vpop.permute.xlu0 %1206
      %1208 = vrot.lane.b32.xlu0 %v1080, 113
      %v1209 = vpop.permute.xlu0 %1208
      %1210 = vrot.lane.b32.xlu0 %v1081, 113
      %v1211 = vpop.permute.xlu0 %1210
      %1212 = vrot.lane.b32.xlu0 %v1082, 113
      %v1213 = vpop.permute.xlu0 %1212
      %v1214 = vsel %vm826, %v1207, %v1209
      %v1215 = vsel %vm826, %v1211, %v1213
      %v1222 = vsel %vm826, %v1209, %v1207
      %v1223 = vsel %vm826, %v1213, %v1211
      %v1224 = vsel %vm848, %v1214, 0.0
      %v1225 = vsel %vm849, %v1222, 0.0
      %v1226 = vsel %vm848, %v1215, 0.0
      %v1227 = vsel %vm849, %v1223, 0.0
      %1228 = vrot.lane.b32.xlu0 %v1079, 112
      %v1229 = vpop.permute.xlu0 %1228
      %1230 = vrot.lane.b32.xlu0 %v1080, 112
      %v1231 = vpop.permute.xlu0 %1230
      %1232 = vrot.lane.b32.xlu0 %v1081, 112
      %v1233 = vpop.permute.xlu0 %1232
      %1234 = vrot.lane.b32.xlu0 %v1082, 112
      %v1235 = vpop.permute.xlu0 %1234
      %v1236 = vsel %vm864, %v1229, %v1231
      %v1237 = vsel %vm864, %v1233, %v1235
      %v1244 = vsel %vm864, %v1231, %v1229
      %v1245 = vsel %vm864, %v1235, %v1233
      %v1246 = vsel %vm878, %v1236, 0.0
      %v1247 = vsel %vm879, %v1244, 0.0
      %v1248 = vsel %vm878, %v1237, 0.0
      %v1249 = vsel %vm879, %v1245, 0.0
      %1250 = vrot.lane.b32.xlu0 %v1079, 111
      %v1251 = vpop.permute.xlu0 %1250
      %1252 = vrot.lane.b32.xlu0 %v1080, 111
      %v1253 = vpop.permute.xlu0 %1252
      %1254 = vrot.lane.b32.xlu0 %v1081, 111
      %v1255 = vpop.permute.xlu0 %1254
      %1256 = vrot.lane.b32.xlu0 %v1082, 111
      %v1257 = vpop.permute.xlu0 %1256
      %v1258 = vsel %vm894, %v1251, %v1253
      %v1259 = vsel %vm894, %v1255, %v1257
      %v1266 = vsel %vm894, %v1253, %v1251
      %v1267 = vsel %vm894, %v1257, %v1255
      %v1268 = vsel %vm912, %v1258, 0.0
      %v1269 = vsel %vm913, %v1266, 0.0
      %v1270 = vsel %vm912, %v1259, 0.0
      %v1271 = vsel %vm913, %v1267, 0.0
      %1273 = vset.pattern.permute.xlu0 0
      %1274 = vperm.xlu0 %1273, %v1095
      %v1275 = vpop.permute.xlu0 %1274
      %v1278 = vsel %vm699, %v1094, 0
      %1280 = vmatprep.subr.mxu0 %v1115
      %1281 = vmatpush1.msra.mxu0 %v1114
      %1282 = vmatprep.subr.mxu0 %v1117
      %1283 = vmatpush1.msra.mxu0 %v1116
      %1284 = vmatprep.subr.mxu0 %v1137
      %1285 = vmatpush1.msra.mxu0 %v1136
      %1286 = vmatprep.subr.mxu0 %v1139
      %1287 = vmatpush1.msra.mxu0 %v1138
      %1288 = vmatprep.subr.mxu0 %v1159
      %1289 = vmatpush1.msra.mxu0 %v1158
      %1290 = vmatprep.subr.mxu0 %v1161
      %1291 = vmatpush1.msra.mxu0 %v1160
      %1292 = vmatprep.subr.mxu0 %v1181
      %1293 = vmatpush1.msra.mxu0 %v1180
      %1294 = vmatprep.subr.mxu0 %v1183
      %1295 = vmatpush1.msra.mxu0 %v1182
      %1296 = vmatprep.subr.mxu0 %v1080
      %1297 = vmatpush1.msra.mxu0 %v1079
      %1298 = vmatprep.subr.mxu0 %v1082
      %1299 = vmatpush1.msra.mxu0 %v1081
      %1300 = vmatprep.subr.mxu0 %v1203
      %1301 = vmatpush1.msra.mxu0 %v1202
      %1302 = vmatprep.subr.mxu0 %v1205
      %1303 = vmatpush1.msra.mxu0 %v1204
      %1304 = vmatprep.subr.mxu0 %v1225
      %1305 = vmatpush1.msra.mxu0 %v1224
      %1306 = vmatprep.subr.mxu0 %v1227
      %1307 = vmatpush1.msra.mxu0 %v1226
      %1308 = vmatprep.subr.mxu0 %v1247
      %1309 = vmatpush1.msra.mxu0 %v1246
      %1310 = vmatprep.subr.mxu0 %v1249
      %1311 = vmatpush1.msra.mxu0 %v1248
      %1312 = vmatprep.subr.mxu0 %v1269
      %1313 = vmatpush1.msra.mxu0 %v1268
      %1314 = vmatprep.subr.mxu0 %v1271
      %1315 = vmatpush1.msra.mxu0 %v1270
      %1316 = vmatprep.subr.mxu0 0.0
      %1317 = vmatpush1.msra.mxu0 0.0
      %1318 = vmatprep.subr.mxu0 0.0
      %1319 = vmatpush1.msra.mxu0 0.0
      %1320 = vmatprep.subr.mxu0 0.0
      %1321 = vmatpush1.msra.mxu0 0.0
      %1322 = vmatprep.subr.mxu0 0.0
      %1323 = vmatpush1.msra.mxu0 0.0
      %1324 = vmatprep.subr.mxu0 0.0
      %1325 = vmatpush1.msra.mxu0 0.0
      %1326 = vmatprep.subr.mxu0 0.0
      %1327 = vmatpush1.msra.mxu0 0.0
      %1328 = vmatprep.subr.mxu0 0.0
      %1329 = vmatpush1.msra.mxu0 0.0
      %1330 = vmatprep.subr.mxu0 0.0
      %1331 = vmatpush1.msra.mxu0 0.0
      %1332 = vmatprep.subr.mxu0 0.0
      %1333 = vmatpush1.msra.mxu0 0.0
      %1334 = vmatprep.subr.mxu0 0.0
      %1335 = vmatpush1.msra.mxu0 0.0
      %1336 = vmatprep.subr.mxu0 0.0
      %1337 = vmatpush1.msra.mxu0 0.0
      %1338 = vmatprep.subr.mxu0 0.0
      %1339 = vmatpush1.msra.mxu0 0.0
      %1340 = vmatprep.subr.mxu0 0.0
      %1341 = vmatpush1.msra.mxu0 0.0
      %1342 = vmatprep.subr.mxu0 0.0
      %1343 = vmatpush1.msra.mxu0 0.0
      %1344 = vmatprep.mubr.f32.mxu0 %v1278
      %1345 = vmatmul.mubr.f32.gmra.mrb[0].mxu0 %v1093
      %v1346 = vpop.f32.mrb[0].mxu0
      %v1347 = vadd.f32 %v1275, %v1346
      %v1348 = vpop.f32.mrb[0].mxu0
      %v1349 = vadd.f32 %v1275, %v1348
      %1350 = vdwg.mxu0
      %vm1351 = vcmp.ge.f32.partialorder %v1347, 0.0
      %vm1352 = vcmp.ge.f32.partialorder %v1349, 0.0
      %v1353 = vmul.f32 %v1347, 0.2
      %v1354 = vmul.f32 %v1349, 0.2
      %v1355 = vsel %vm1351, %v1347, %v1353
      %v1356 = vsel %vm1352, %v1349, %v1354
      %v1357 = vsel %vm796, %v1187, %v1189
      %v1359 = vsel %vm796, %v1191, %v1185
      %v1360 = vmax.f32 %v1079, %v1192
      %v1361 = vmax.f32 %v1080, %v1357
      %v1362 = vmax.f32 %v1081, %v1193
      %v1363 = vmax.f32 %v1082, %v1359
      %1368 = vrot.lane.b32.xlu0 %v1360, 112
      %v1369 = vpop.permute.xlu0 %1368
      %1370 = vrot.lane.b32.xlu0 %v1361, 112
      %v1371 = vpop.permute.xlu0 %1370
      %1372 = vrot.lane.b32.xlu0 %v1362, 112
      %v1373 = vpop.permute.xlu0 %1372
      %1374 = vrot.lane.b32.xlu0 %v1363, 112
      %v1375 = vpop.permute.xlu0 %1374
      %v1376 = vsel %vm864, %v1369, %v1371
      %v1377 = vsel %vm864, %v1371, %v1373
      %v1378 = vsel %vm864, %v1373, %v1375
      %v1384 = vsel %vm864, %v1375, %v1369
      %v1385 = vmax.f32 %v1360, %v1376
      %v1386 = vmax.f32 %v1361, %v1377
      %v1387 = vmax.f32 %v1362, %v1378
      %v1388 = vmax.f32 %v1363, %v1384
      %v1389 = vlaneseq
      %v1390 = vshrl.u32 %v1389, 7
      %v1391 = vadd.s32 %v1390, 8
      %v1392 = vadd.s32 %v1390, 16
      %v1393 = vadd.s32 %v1390, 24
      %v1394 = vadd.s32 %v1390, 32
      %v1395 = vadd.s32 %v1390, 40
      %v1396 = vadd.s32 %v1390, 48
      %v1397 = vadd.s32 %v1390, 56
      %v1398 = vadd.s32 %v1390, 64
      %v1399 = vadd.s32 %v1390, 72
      %v1400 = vadd.s32 %v1390, 80
      %v1401 = vadd.s32 %v1390, 88
      %v1402 = vadd.s32 %v1390, 96
      %v1403 = vadd.s32 %v1390, 104
      %v1404 = vadd.s32 %v1390, 112
      %v1405 = vadd.s32 %v1390, 120
      %v1406 = vadd.s32 %v1390, 128
      %v1407 = vadd.s32 %v1390, 136
      %v1408 = vadd.s32 %v1390, 144
      %v1409 = vadd.s32 %v1390, 152
      %v1410 = vadd.s32 %v1390, 160
      %v1411 = vadd.s32 %v1390, 168
      %v1412 = vadd.s32 %v1390, 176
      %v1413 = vadd.s32 %v1390, 184
      %v1414 = vadd.s32 %v1390, 192
      %v1415 = vadd.s32 %v1390, 200
      %v1416 = vadd.s32 %v1390, 208
      %v1417 = vadd.s32 %v1390, 216
      %v1418 = vadd.s32 %v1390, 224
      %v1419 = vadd.s32 %v1390, 232
      %v1420 = vadd.s32 %v1390, 240
      %v1421 = vadd.s32 %v1390, 248
      %v1422 = vadd.s32 %v1390, 256
      %v1423 = vadd.s32 %v1390, 264
      %v1424 = vadd.s32 %v1390, 272
      %v1425 = vadd.s32 %v1390, 280
      %v1426 = vadd.s32 %v1390, 288
      %v1427 = vadd.s32 %v1390, 296
      %v1428 = vadd.s32 %v1390, 304
      %v1429 = vadd.s32 %v1390, 312
      %v1430 = vadd.s32 %v1390, 320
      %v1431 = vadd.s32 %v1390, 328
      %v1432 = vadd.s32 %v1390, 336
      %v1433 = vadd.s32 %v1390, 344
      %v1434 = vadd.s32 %v1390, 352
      %v1435 = vadd.s32 %v1390, 360
      %v1436 = vadd.s32 %v1390, 368
      %v1437 = vadd.s32 %v1390, 376
      %v1438 = vadd.s32 %v1390, 384
      %v1439 = vadd.s32 %v1390, 392
      %v1440 = vadd.s32 %v1390, 400
      %v1441 = vadd.s32 %v1390, 408
      %v1442 = vadd.s32 %v1390, 416
      %v1443 = vadd.s32 %v1390, 424
      %v1444 = vadd.s32 %v1390, 432
      %v1445 = vadd.s32 %v1390, 440
      %v1446 = vadd.s32 %v1390, 448
      %v1447 = vadd.s32 %v1390, 456
      %v1448 = vadd.s32 %v1390, 464
      %v1449 = vadd.s32 %v1390, 472
      %v1450 = vadd.s32 %v1390, 480
      %v1451 = vadd.s32 %v1390, 488
      %v1452 = vadd.s32 %v1390, 496
      %v1453 = vadd.s32 %v1390, 504
      %v1454 = vshra.s32 %v628, 6
      %v1455 = vand.u32 %v628, 63
      %v1456 = vmul.u32 %v1454, 256
      %v1457 = vshra.s32 %v1455, 3
      %v1458 = vmul.u32 %v1457, 16
      %v1459 = vand.u32 %v1455, 7
      %v1460 = vadd.s32 %v1458, %v1459
      %v1461 = vmul.u32 %v1460, 2
      %v1462 = vadd.s32 %v1456, %v1461
      %vm1463 = vcmp.eq.s32.totalorder %v1390, %v1462
      %vm1464 = vcmp.eq.s32.totalorder %v1391, %v1462
      %vm1465 = vcmp.eq.s32.totalorder %v1392, %v1462
      %vm1466 = vcmp.eq.s32.totalorder %v1393, %v1462
      %vm1467 = vcmp.eq.s32.totalorder %v1394, %v1462
      %vm1468 = vcmp.eq.s32.totalorder %v1395, %v1462
      %vm1469 = vcmp.eq.s32.totalorder %v1396, %v1462
      %vm1470 = vcmp.eq.s32.totalorder %v1397, %v1462
      %vm1471 = vcmp.eq.s32.totalorder %v1398, %v1462
      %vm1472 = vcmp.eq.s32.totalorder %v1399, %v1462
      %vm1473 = vcmp.eq.s32.totalorder %v1400, %v1462
      %vm1474 = vcmp.eq.s32.totalorder %v1401, %v1462
      %vm1475 = vcmp.eq.s32.totalorder %v1402, %v1462
      %vm1476 = vcmp.eq.s32.totalorder %v1403, %v1462
      %vm1477 = vcmp.eq.s32.totalorder %v1404, %v1462
      %vm1478 = vcmp.eq.s32.totalorder %v1405, %v1462
      %vm1479 = vcmp.eq.s32.totalorder %v1406, %v1462
      %vm1480 = vcmp.eq.s32.totalorder %v1407, %v1462
      %vm1481 = vcmp.eq.s32.totalorder %v1408, %v1462
      %vm1482 = vcmp.eq.s32.totalorder %v1409, %v1462
      %vm1483 = vcmp.eq.s32.totalorder %v1410, %v1462
      %vm1484 = vcmp.eq.s32.totalorder %v1411, %v1462
      %vm1485 = vcmp.eq.s32.totalorder %v1412, %v1462
      %vm1486 = vcmp.eq.s32.totalorder %v1413, %v1462
      %vm1487 = vcmp.eq.s32.totalorder %v1414, %v1462
      %vm1488 = vcmp.eq.s32.totalorder %v1415, %v1462
      %vm1489 = vcmp.eq.s32.totalorder %v1416, %v1462
      %vm1490 = vcmp.eq.s32.totalorder %v1417, %v1462
      %vm1491 = vcmp.eq.s32.totalorder %v1418, %v1462
      %vm1492 = vcmp.eq.s32.totalorder %v1419, %v1462
      %vm1493 = vcmp.eq.s32.totalorder %v1420, %v1462
      %vm1494 = vcmp.eq.s32.totalorder %v1421, %v1462
      %vm1495 = vcmp.eq.s32.totalorder %v1422, %v1462
      %vm1496 = vcmp.eq.s32.totalorder %v1423, %v1462
      %vm1497 = vcmp.eq.s32.totalorder %v1424, %v1462
      %vm1498 = vcmp.eq.s32.totalorder %v1425, %v1462
      %vm1499 = vcmp.eq.s32.totalorder %v1426, %v1462
      %vm1500 = vcmp.eq.s32.totalorder %v1427, %v1462
      %vm1501 = vcmp.eq.s32.totalorder %v1428, %v1462
      %vm1502 = vcmp.eq.s32.totalorder %v1429, %v1462
      %vm1503 = vcmp.eq.s32.totalorder %v1430, %v1462
      %vm1504 = vcmp.eq.s32.totalorder %v1431, %v1462
      %vm1505 = vcmp.eq.s32.totalorder %v1432, %v1462
      %vm1506 = vcmp.eq.s32.totalorder %v1433, %v1462
      %vm1507 = vcmp.eq.s32.totalorder %v1434, %v1462
      %vm1508 = vcmp.eq.s32.totalorder %v1435, %v1462
      %vm1509 = vcmp.eq.s32.totalorder %v1436, %v1462
      %vm1510 = vcmp.eq.s32.totalorder %v1437, %v1462
      %vm1511 = vcmp.eq.s32.totalorder %v1438, %v1462
      %vm1512 = vcmp.eq.s32.totalorder %v1439, %v1462
      %vm1513 = vcmp.eq.s32.totalorder %v1440, %v1462
      %vm1514 = vcmp.eq.s32.totalorder %v1441, %v1462
      %vm1515 = vcmp.eq.s32.totalorder %v1442, %v1462
      %vm1516 = vcmp.eq.s32.totalorder %v1443, %v1462
      %vm1517 = vcmp.eq.s32.totalorder %v1444, %v1462
      %vm1518 = vcmp.eq.s32.totalorder %v1445, %v1462
      %vm1519 = vcmp.eq.s32.totalorder %v1446, %v1462
      %vm1520 = vcmp.eq.s32.totalorder %v1447, %v1462
      %vm1521 = vcmp.eq.s32.totalorder %v1448, %v1462
      %vm1522 = vcmp.eq.s32.totalorder %v1449, %v1462
      %vm1523 = vcmp.eq.s32.totalorder %v1450, %v1462
      %vm1524 = vcmp.eq.s32.totalorder %v1451, %v1462
      %vm1525 = vcmp.eq.s32.totalorder %v1452, %v1462
      %vm1526 = vcmp.eq.s32.totalorder %v1453, %v1462
      %v1527 = vsel %vm1463, 1.0, 0.0
      %v1528 = vsel %vm1464, 1.0, 0.0
      %v1529 = vsel %vm1465, 1.0, 0.0
      %v1530 = vsel %vm1466, 1.0, 0.0
      %v1531 = vsel %vm1467, 1.0, 0.0
      %v1532 = vsel %vm1468, 1.0, 0.0
      %v1533 = vsel %vm1469, 1.0, 0.0
      %v1534 = vsel %vm1470, 1.0, 0.0
      %v1535 = vsel %vm1471, 1.0, 0.0
      %v1536 = vsel %vm1472, 1.0, 0.0
      %v1537 = vsel %vm1473, 1.0, 0.0
      %v1538 = vsel %vm1474, 1.0, 0.0
      %v1539 = vsel %vm1475, 1.0, 0.0
      %v1540 = vsel %vm1476, 1.0, 0.0
      %v1541 = vsel %vm1477, 1.0, 0.0
      %v1542 = vsel %vm1478, 1.0, 0.0
      %v1543 = vsel %vm1479, 1.0, 0.0
      %v1544 = vsel %vm1480, 1.0, 0.0
      %v1545 = vsel %vm1481, 1.0, 0.0
      %v1546 = vsel %vm1482, 1.0, 0.0
      %v1547 = vsel %vm1483, 1.0, 0.0
      %v1548 = vsel %vm1484, 1.0, 0.0
      %v1549 = vsel %vm1485, 1.0, 0.0
      %v1550 = vsel %vm1486, 1.0, 0.0
      %v1551 = vsel %vm1487, 1.0, 0.0
      %v1552 = vsel %vm1488, 1.0, 0.0
      %v1553 = vsel %vm1489, 1.0, 0.0
      %v1554 = vsel %vm1490, 1.0, 0.0
      %v1555 = vsel %vm1491, 1.0, 0.0
      %v1556 = vsel %vm1492, 1.0, 0.0
      %v1557 = vsel %vm1493, 1.0, 0.0
      %v1558 = vsel %vm1494, 1.0, 0.0
      %v1559 = vsel %vm1495, 1.0, 0.0
      %v1560 = vsel %vm1496, 1.0, 0.0
      %v1561 = vsel %vm1497, 1.0, 0.0
      %v1562 = vsel %vm1498, 1.0, 0.0
      %v1563 = vsel %vm1499, 1.0, 0.0
      %v1564 = vsel %vm1500, 1.0, 0.0
      %v1565 = vsel %vm1501, 1.0, 0.0
      %v1566 = vsel %vm1502, 1.0, 0.0
      %v1567 = vsel %vm1503, 1.0, 0.0
      %v1568 = vsel %vm1504, 1.0, 0.0
      %v1569 = vsel %vm1505, 1.0, 0.0
      %v1570 = vsel %vm1506, 1.0, 0.0
      %v1571 = vsel %vm1507, 1.0, 0.0
      %v1572 = vsel %vm1508, 1.0, 0.0
      %v1573 = vsel %vm1509, 1.0, 0.0
      %v1574 = vsel %vm1510, 1.0, 0.0
      %v1575 = vsel %vm1511, 1.0, 0.0
      %v1576 = vsel %vm1512, 1.0, 0.0
      %v1577 = vsel %vm1513, 1.0, 0.0
      %v1578 = vsel %vm1514, 1.0, 0.0
      %v1579 = vsel %vm1515, 1.0, 0.0
      %v1580 = vsel %vm1516, 1.0, 0.0
      %v1581 = vsel %vm1517, 1.0, 0.0
      %v1582 = vsel %vm1518, 1.0, 0.0
      %v1583 = vsel %vm1519, 1.0, 0.0
      %v1584 = vsel %vm1520, 1.0, 0.0
      %v1585 = vsel %vm1521, 1.0, 0.0
      %v1586 = vsel %vm1522, 1.0, 0.0
      %v1587 = vsel %vm1523, 1.0, 0.0
      %v1588 = vsel %vm1524, 1.0, 0.0
      %v1589 = vsel %vm1525, 1.0, 0.0
      %v1590 = vsel %vm1526, 1.0, 0.0
      %1591 = vmatprep.subr.mxu0 0.0
      %1592 = vmatpush1.msra.mxu0 %v1527
      %1593 = vmatprep.subr.mxu0 0.0
      %1594 = vmatpush1.msra.mxu0 %v1528
      %1595 = vmatprep.subr.mxu0 0.0
      %1596 = vmatpush1.msra.mxu0 %v1529
      %1597 = vmatprep.subr.mxu0 0.0
      %1598 = vmatpush1.msra.mxu0 %v1530
      %1599 = vmatprep.subr.mxu0 0.0
      %1600 = vmatpush1.msra.mxu0 %v1531
      %1601 = vmatprep.subr.mxu0 0.0
      %1602 = vmatpush1.msra.mxu0 %v1532
      %1603 = vmatprep.subr.mxu0 0.0
      %1604 = vmatpush1.msra.mxu0 %v1533
      %1605 = vmatprep.subr.mxu0 0.0
      %1606 = vmatpush1.msra.mxu0 %v1534
      %1607 = vmatprep.subr.mxu0 0.0
      %1608 = vmatpush1.msra.mxu0 %v1535
      %1609 = vmatprep.subr.mxu0 0.0
      %1610 = vmatpush1.msra.mxu0 %v1536
      %1611 = vmatprep.subr.mxu0 0.0
      %1612 = vmatpush1.msra.mxu0 %v1537
      %1613 = vmatprep.subr.mxu0 0.0
      %1614 = vmatpush1.msra.mxu0 %v1538
      %1615 = vmatprep.subr.mxu0 0.0
      %1616 = vmatpush1.msra.mxu0 %v1539
      %1617 = vmatprep.subr.mxu0 0.0
      %1618 = vmatpush1.msra.mxu0 %v1540
      %1619 = vmatprep.subr.mxu0 0.0
      %1620 = vmatpush1.msra.mxu0 %v1541
      %1621 = vmatprep.subr.mxu0 0.0
      %1622 = vmatpush1.msra.mxu0 %v1542
      %1623 = vmatprep.subr.mxu0 0.0
      %1624 = vmatpush1.msra.mxu0 %v1543
      %1625 = vmatprep.subr.mxu0 0.0
      %1626 = vmatpush1.msra.mxu0 %v1544
      %1627 = vmatprep.subr.mxu0 0.0
      %1628 = vmatpush1.msra.mxu0 %v1545
      %1629 = vmatprep.subr.mxu0 0.0
      %1630 = vmatpush1.msra.mxu0 %v1546
      %1631 = vmatprep.subr.mxu0 0.0
      %1632 = vmatpush1.msra.mxu0 %v1547
      %1633 = vmatprep.subr.mxu0 0.0
      %1634 = vmatpush1.msra.mxu0 %v1548
      %1635 = vmatprep.subr.mxu0 0.0
      %1636 = vmatpush1.msra.mxu0 %v1549
      %1637 = vmatprep.subr.mxu0 0.0
      %1638 = vmatpush1.msra.mxu0 %v1550
      %1639 = vmatprep.subr.mxu0 0.0
      %1640 = vmatpush1.msra.mxu0 %v1551
      %1641 = vmatprep.subr.mxu0 0.0
      %1642 = vmatpush1.msra.mxu0 %v1552
      %1643 = vmatprep.subr.mxu0 0.0
      %1644 = vmatpush1.msra.mxu0 %v1553
      %1645 = vmatprep.subr.mxu0 0.0
      %1646 = vmatpush1.msra.mxu0 %v1554
      %1647 = vmatprep.subr.mxu0 0.0
      %1648 = vmatpush1.msra.mxu0 %v1555
      %1649 = vmatprep.subr.mxu0 0.0
      %1650 = vmatpush1.msra.mxu0 %v1556
      %1651 = vmatprep.subr.mxu0 0.0
      %1652 = vmatpush1.msra.mxu0 %v1557
      %1653 = vmatprep.subr.mxu0 0.0
      %1654 = vmatpush1.msra.mxu0 %v1558
      %1655 = vmatprep.mubr.f32.mxu0 %v1386
      %1656 = vmatmul.mubr.f32.gmra.mrb[0].mxu0 %v1385
      %v1657 = vpop.f32.mrb[0].mxu0
      %v1658 = vadd.f32 0.0, %v1657
      %v1659 = vpop.f32.mrb[0].mxu0
      %1660 = vdwg.mxu0
      %1661 = vmatprep.subr.mxu0 0.0
      %1662 = vmatpush1.msra.mxu0 %v1559
      %1663 = vmatprep.subr.mxu0 0.0
      %1664 = vmatpush1.msra.mxu0 %v1560
      %1665 = vmatprep.subr.mxu0 0.0
      %1666 = vmatpush1.msra.mxu0 %v1561
      %1667 = vmatprep.subr.mxu0 0.0
      %1668 = vmatpush1.msra.mxu0 %v1562
      %1669 = vmatprep.subr.mxu0 0.0
      %1670 = vmatpush1.msra.mxu0 %v1563
      %1671 = vmatprep.subr.mxu0 0.0
      %1672 = vmatpush1.msra.mxu0 %v1564
      %1673 = vmatprep.subr.mxu0 0.0
      %1674 = vmatpush1.msra.mxu0 %v1565
      %1675 = vmatprep.subr.mxu0 0.0
      %1676 = vmatpush1.msra.mxu0 %v1566
      %1677 = vmatprep.subr.mxu0 0.0
      %1678 = vmatpush1.msra.mxu0 %v1567
      %1679 = vmatprep.subr.mxu0 0.0
      %1680 = vmatpush1.msra.mxu0 %v1568
      %1681 = vmatprep.subr.mxu0 0.0
      %1682 = vmatpush1.msra.mxu0 %v1569
      %1683 = vmatprep.subr.mxu0 0.0
      %1684 = vmatpush1.msra.mxu0 %v1570
      %1685 = vmatprep.subr.mxu0 0.0
      %1686 = vmatpush1.msra.mxu0 %v1571
      %1687 = vmatprep.subr.mxu0 0.0
      %1688 = vmatpush1.msra.mxu0 %v1572
      %1689 = vmatprep.subr.mxu0 0.0
      %1690 = vmatpush1.msra.mxu0 %v1573
      %1691 = vmatprep.subr.mxu0 0.0
      %1692 = vmatpush1.msra.mxu0 %v1574
      %1693 = vmatprep.subr.mxu0 0.0
      %1694 = vmatpush1.msra.mxu0 %v1575
      %1695 = vmatprep.subr.mxu0 0.0
      %1696 = vmatpush1.msra.mxu0 %v1576
      %1697 = vmatprep.subr.mxu0 0.0
      %1698 = vmatpush1.msra.mxu0 %v1577
      %1699 = vmatprep.subr.mxu0 0.0
      %1700 = vmatpush1.msra.mxu0 %v1578
      %1701 = vmatprep.subr.mxu0 0.0
      %1702 = vmatpush1.msra.mxu0 %v1579
      %1703 = vmatprep.subr.mxu0 0.0
      %1704 = vmatpush1.msra.mxu0 %v1580
      %1705 = vmatprep.subr.mxu0 0.0
      %1706 = vmatpush1.msra.mxu0 %v1581
      %1707 = vmatprep.subr.mxu0 0.0
      %1708 = vmatpush1.msra.mxu0 %v1582
      %1709 = vmatprep.subr.mxu0 0.0
      %1710 = vmatpush1.msra.mxu0 %v1583
      %1711 = vmatprep.subr.mxu0 0.0
      %1712 = vmatpush1.msra.mxu0 %v1584
      %1713 = vmatprep.subr.mxu0 0.0
      %1714 = vmatpush1.msra.mxu0 %v1585
      %1715 = vmatprep.subr.mxu0 0.0
      %1716 = vmatpush1.msra.mxu0 %v1586
      %1717 = vmatprep.subr.mxu0 0.0
      %1718 = vmatpush1.msra.mxu0 %v1587
      %1719 = vmatprep.subr.mxu0 0.0
      %1720 = vmatpush1.msra.mxu0 %v1588
      %1721 = vmatprep.subr.mxu0 0.0
      %1722 = vmatpush1.msra.mxu0 %v1589
      %1723 = vmatprep.subr.mxu0 0.0
      %1724 = vmatpush1.msra.mxu0 %v1590
      %1725 = vmatprep.mubr.f32.mxu0 %v1388
      %1726 = vmatmul.mubr.f32.gmra.mrb[0].mxu0 %v1387
      %v1727 = vpop.f32.mrb[0].mxu0
      %v1728 = vadd.f32 %v1658, %v1727
      %v1729 = vpop.f32.mrb[0].mxu0
      %1730 = vdwg.mxu0
      %v1731 = vld [vmem:[%s6] sm:$0xff]
      %v1732 = vld [vmem:[%s7] sm:$0xff]
      %v1733 = vand.u32 %v628, 7
      %1735 = vrot.lane.b32.xlu0 %v1728, 9
      %v1736 = vpop.permute.xlu0 %1735
      %vm1738 = vcmask 72704
      %vm1739 = vcmp.ge.s32.totalorder %v1457, 1
      %vm1740 = vcmp.ge.s32.totalorder %v1733, 1
      %vm1741 = vmand %vm1739, %vm1740
      %v1742 = vsel %vm1741, 1, 0
      %vm1743 = vcmp.eq.s32.totalorder %v1742, 1
      %v1744 = vsel %vm1743, %v1736, 0.0
      %1745 = vrot.lane.b32.xlu0 %v1728, 8
      %v1746 = vpop.permute.xlu0 %1745
      %vm1748 = vcmask 64512
      %v1749 = vsel %vm1739, 1, 0
      %vm1750 = vcmp.eq.s32.totalorder %v1749, 1
      %v1751 = vsel %vm1750, %v1746, 0.0
      %1752 = vrot.lane.b32.xlu0 %v1728, 7
      %v1753 = vpop.permute.xlu0 %1752
      %vm1755 = vcmask 56320
      %vm1756 = vcmp.le.s32.totalorder %v1733, 6
      %vm1757 = vmand %vm1739, %vm1756
      %v1758 = vsel %vm1757, 1, 0
      %vm1759 = vcmp.eq.s32.totalorder %v1758, 1
      %v1760 = vsel %vm1759, %v1753, 0.0
      %1761 = vrot.lane.b32.xlu0 %v1728, 1
      %v1762 = vpop.permute.xlu0 %1761
      %v1764 = vsel %vm1740, 1, 0
      %vm1765 = vcmp.eq.s32.totalorder %v1764, 1
      %v1766 = vsel %vm1765, %v1762, 0.0
      %1767 = vrot.lane.b32.xlu0 %v1728, 127
      %v1768 = vpop.permute.xlu0 %1767
      %v1770 = vsel %vm1756, 1, 0
      %vm1771 = vcmp.eq.s32.totalorder %v1770, 1
      %v1772 = vsel %vm1771, %v1768, 0.0
      %1773 = vrot.lane.b32.xlu0 %v1728, 121
      %v1774 = vpop.permute.xlu0 %1773
      %vm1776 = vcmp.le.s32.totalorder %v1457, 6
      %vm1777 = vmand %vm1776, %vm1740
      %v1778 = vsel %vm1777, 1, 0
      %vm1779 = vcmp.eq.s32.totalorder %v1778, 1
      %v1780 = vsel %vm1779, %v1774, 0.0
      %1781 = vrot.lane.b32.xlu0 %v1728, 120
      %v1782 = vpop.permute.xlu0 %1781
      %v1784 = vsel %vm1776, 1, 0
      %vm1785 = vcmp.eq.s32.totalorder %v1784, 1
      %v1786 = vsel %vm1785, %v1782, 0.0
      %1787 = vrot.lane.b32.xlu0 %v1728, 119
      %v1788 = vpop.permute.xlu0 %1787
      %vm1790 = vmand %vm1776, %vm1756
      %v1791 = vsel %vm1790, 1, 0
      %vm1792 = vcmp.eq.s32.totalorder %v1791, 1
      %v1793 = vsel %vm1792, %v1788, 0.0
      %1795 = vset.pattern.permute.xlu0 0
      %1796 = vperm.xlu0 %1795, %v1732
      %v1797 = vpop.permute.xlu0 %1796
      %v1800 = vsel %vm925, %v1731, 0
      %1802 = vmatprep.subr.mxu0 0.0
      %1803 = vmatpush1.msra.mxu0 %v1744
      %1804 = vmatprep.subr.mxu0 0.0
      %1805 = vmatpush1.msra.mxu0 %v1751
      %1806 = vmatprep.subr.mxu0 0.0
      %1807 = vmatpush1.msra.mxu0 %v1760
      %1808 = vmatprep.subr.mxu0 0.0
      %1809 = vmatpush1.msra.mxu0 %v1766
      %1810 = vmatprep.subr.mxu0 0.0
      %1811 = vmatpush1.msra.mxu0 %v1728
      %1812 = vmatprep.subr.mxu0 0.0
      %1813 = vmatpush1.msra.mxu0 %v1772
      %1814 = vmatprep.subr.mxu0 0.0
      %1815 = vmatpush1.msra.mxu0 %v1780
      %1816 = vmatprep.subr.mxu0 0.0
      %1817 = vmatpush1.msra.mxu0 %v1786
      %1818 = vmatprep.subr.mxu0 0.0
      %1819 = vmatpush1.msra.mxu0 %v1793
      %1820 = vmatprep.subr.mxu0 0.0
      %1821 = vmatpush1.msra.mxu0 0.0
      %1822 = vmatprep.subr.mxu0 0.0
      %1823 = vmatpush1.msra.mxu0 0.0
      %1824 = vmatprep.subr.mxu0 0.0
      %1825 = vmatpush1.msra.mxu0 0.0
      %1826 = vmatprep.subr.mxu0 0.0
      %1827 = vmatpush1.msra.mxu0 0.0
      %1828 = vmatprep.subr.mxu0 0.0
      %1829 = vmatpush1.msra.mxu0 0.0
      %1830 = vmatprep.subr.mxu0 0.0
      %1831 = vmatpush1.msra.mxu0 0.0
      %1832 = vmatprep.subr.mxu0 0.0
      %1833 = vmatpush1.msra.mxu0 0.0
      %1834 = vmatprep.subr.mxu0 0.0
      %1835 = vmatpush1.msra.mxu0 0.0
      %1836 = vmatprep.subr.mxu0 0.0
      %1837 = vmatpush1.msra.mxu0 0.0
      %1838 = vmatprep.subr.mxu0 0.0
      %1839 = vmatpush1.msra.mxu0 0.0
      %1840 = vmatprep.subr.mxu0 0.0
      %1841 = vmatpush1.msra.mxu0 0.0
      %1842 = vmatprep.subr.mxu0 0.0
      %1843 = vmatpush1.msra.mxu0 0.0
      %1844 = vmatprep.subr.mxu0 0.0
      %1845 = vmatpush1.msra.mxu0 0.0
      %1846 = vmatprep.subr.mxu0 0.0
      %1847 = vmatpush1.msra.mxu0 0.0
      %1848 = vmatprep.subr.mxu0 0.0
      %1849 = vmatpush1.msra.mxu0 0.0
      %1850 = vmatprep.subr.mxu0 0.0
      %1851 = vmatpush1.msra.mxu0 0.0
      %1852 = vmatprep.subr.mxu0 0.0
      %1853 = vmatpush1.msra.mxu0 0.0
      %1854 = vmatprep.subr.mxu0 0.0
      %1855 = vmatpush1.msra.mxu0 0.0
      %1856 = vmatprep.subr.mxu0 0.0
      %1857 = vmatpush1.msra.mxu0 0.0
      %1858 = vmatprep.subr.mxu0 0.0
      %1859 = vmatpush1.msra.mxu0 0.0
      %1860 = vmatprep.subr.mxu0 0.0
      %1861 = vmatpush1.msra.mxu0 0.0
      %1862 = vmatprep.subr.mxu0 0.0
      %1863 = vmatpush1.msra.mxu0 0.0
      %1864 = vmatprep.subr.mxu0 0.0
      %1865 = vmatpush1.msra.mxu0 0.0
      %1866 = vmatprep.mubr.f32.mxu0 0.0
      %1867 = vmatmul.mubr.f32.gmra.mrb[0].mxu0 %v1800
      %v1868 = vpop.f32.mrb[0].mxu0
      %v1869 = vadd.f32 %v1797, %v1868
      %v1870 = vpop.f32.mrb[0].mxu0
      %1871 = vdwg.mxu0
      %vm1872 = vcmp.ge.f32.partialorder %v1869, 0.0
      %v1873 = vmul.f32 %v1869, 0.2
      %v1874 = vsel %vm1872, %v1869, %v1873
      %1876 = vrot.lane.b32.xlu0 %v1874, 64
      %v1877 = vpop.permute.xlu0 %1876
      %v1879 = vld [vmem:[%s8] sm:$0xff]
      %v1880 = vld [vmem:[%s8 + $0x8] sm:$0xff]
      %v1881 = vld [vmem:[%s9] sm:$0xff]
      %1882 = vrot.lane.b32.xlu0 %v1874, 73
      %v1883 = vpop.permute.xlu0 %1882
      %1884 = vrot.lane.b32.xlu0 %v1877, 73
      %v1885 = vpop.permute.xlu0 %1884
      %1888 = vrot.lane.b32.xlu0 %v1874, 9
      %v1889 = vpop.permute.xlu0 %1888
      %1890 = vrot.lane.b32.xlu0 %v1877, 9
      %v1891 = vpop.permute.xlu0 %1890
      %v1894 = vsel %vm1738, %v1883, %v1889
      %v1895 = vsel %vm1738, %v1885, %v1891
      %v1896 = vsel %vm1743, %v1894, 0.0
      %v1897 = vsel %vm1743, %v1895, 0.0
      %1898 = vrot.lane.b32.xlu0 %v1874, 72
      %v1899 = vpop.permute.xlu0 %1898
      %1900 = vrot.lane.b32.xlu0 %v1877, 72
      %v1901 = vpop.permute.xlu0 %1900
      %1904 = vrot.lane.b32.xlu0 %v1874, 8
      %v1905 = vpop.permute.xlu0 %1904
      %1906 = vrot.lane.b32.xlu0 %v1877, 8
      %v1907 = vpop.permute.xlu0 %1906
      %v1910 = vsel %vm1748, %v1899, %v1905
      %v1911 = vsel %vm1748, %v1901, %v1907
      %v1912 = vsel %vm1750, %v1910, 0.0
      %v1913 = vsel %vm1750, %v1911, 0.0
      %1914 = vrot.lane.b32.xlu0 %v1874, 71
      %v1915 = vpop.permute.xlu0 %1914
      %1916 = vrot.lane.b32.xlu0 %v1877, 71
      %v1917 = vpop.permute.xlu0 %1916
      %1920 = vrot.lane.b32.xlu0 %v1874, 7
      %v1921 = vpop.permute.xlu0 %1920
      %1922 = vrot.lane.b32.xlu0 %v1877, 7
      %v1923 = vpop.permute.xlu0 %1922
      %v1926 = vsel %vm1755, %v1915, %v1921
      %v1927 = vsel %vm1755, %v1917, %v1923
      %v1928 = vsel %vm1759, %v1926, 0.0
      %v1929 = vsel %vm1759, %v1927, 0.0
      %1930 = vrot.lane.b32.xlu0 %v1874, 65
      %v1931 = vpop.permute.xlu0 %1930
      %1932 = vrot.lane.b32.xlu0 %v1877, 65
      %v1933 = vpop.permute.xlu0 %1932
      %1936 = vrot.lane.b32.xlu0 %v1874, 1
      %v1937 = vpop.permute.xlu0 %1936
      %1938 = vrot.lane.b32.xlu0 %v1877, 1
      %v1939 = vpop.permute.xlu0 %1938
      %v1942 = vsel %vm767, %v1931, %v1937
      %v1943 = vsel %vm767, %v1933, %v1939
      %v1944 = vsel %vm1765, %v1942, 0.0
      %v1945 = vsel %vm1765, %v1943, 0.0
      %1946 = vrot.lane.b32.xlu0 %v1874, 127
      %v1947 = vpop.permute.xlu0 %1946
      %1948 = vrot.lane.b32.xlu0 %v1877, 127
      %v1949 = vpop.permute.xlu0 %1948
      %1952 = vrot.lane.b32.xlu0 %v1874, 63
      %v1953 = vpop.permute.xlu0 %1952
      %1954 = vrot.lane.b32.xlu0 %v1877, 63
      %v1955 = vpop.permute.xlu0 %1954
      %vm1958 = vcmask 515072
      %v1959 = vsel %vm1958, %v1947, %v1953
      %v1960 = vsel %vm1958, %v1949, %v1955
      %v1961 = vsel %vm1771, %v1959, 0.0
      %v1962 = vsel %vm1771, %v1960, 0.0
      %1963 = vrot.lane.b32.xlu0 %v1874, 121
      %v1964 = vpop.permute.xlu0 %1963
      %1965 = vrot.lane.b32.xlu0 %v1877, 121
      %v1966 = vpop.permute.xlu0 %1965
      %1969 = vrot.lane.b32.xlu0 %v1874, 57
      %v1970 = vpop.permute.xlu0 %1969
      %1971 = vrot.lane.b32.xlu0 %v1877, 57
      %v1972 = vpop.permute.xlu0 %1971
      %vm1975 = vcmask 465920
      %v1976 = vsel %vm1975, %v1964, %v1970
      %v1977 = vsel %vm1975, %v1966, %v1972
      %v1978 = vsel %vm1779, %v1976, 0.0
      %v1979 = vsel %vm1779, %v1977, 0.0
      %1980 = vrot.lane.b32.xlu0 %v1874, 120
      %v1981 = vpop.permute.xlu0 %1980
      %1982 = vrot.lane.b32.xlu0 %v1877, 120
      %v1983 = vpop.permute.xlu0 %1982
      %1986 = vrot.lane.b32.xlu0 %v1874, 56
      %v1987 = vpop.permute.xlu0 %1986
      %1988 = vrot.lane.b32.xlu0 %v1877, 56
      %v1989 = vpop.permute.xlu0 %1988
      %vm1992 = vcmask 457728
      %v1993 = vsel %vm1992, %v1981, %v1987
      %v1994 = vsel %vm1992, %v1983, %v1989
      %v1995 = vsel %vm1785, %v1993, 0.0
      %v1996 = vsel %vm1785, %v1994, 0.0
      %1997 = vrot.lane.b32.xlu0 %v1874, 119
      %v1998 = vpop.permute.xlu0 %1997
      %1999 = vrot.lane.b32.xlu0 %v1877, 119
      %v2000 = vpop.permute.xlu0 %1999
      %2003 = vrot.lane.b32.xlu0 %v1874, 55
      %v2004 = vpop.permute.xlu0 %2003
      %2005 = vrot.lane.b32.xlu0 %v1877, 55
      %v2006 = vpop.permute.xlu0 %2005
      %vm2009 = vcmask 449536
      %v2010 = vsel %vm2009, %v1998, %v2004
      %v2011 = vsel %vm2009, %v2000, %v2006
      %v2012 = vsel %vm1792, %v2010, 0.0
      %v2013 = vsel %vm1792, %v2011, 0.0
      %2015 = vset.pattern.permute.xlu0 0
      %2016 = vperm.xlu0 %2015, %v1881
      %v2017 = vpop.permute.xlu0 %2016
      %v2020 = vsel %vm699, %v1880, 0
      %2022 = vmatprep.subr.mxu0 0.0
      %2023 = vmatpush1.msra.mxu0 %v1896
      %2024 = vmatprep.subr.mxu0 0.0
      %2025 = vmatpush1.msra.mxu0 %v1897
      %2026 = vmatprep.subr.mxu0 0.0
      %2027 = vmatpush1.msra.mxu0 %v1912
      %2028 = vmatprep.subr.mxu0 0.0
      %2029 = vmatpush1.msra.mxu0 %v1913
      %2030 = vmatprep.subr.mxu0 0.0
      %2031 = vmatpush1.msra.mxu0 %v1928
      %2032 = vmatprep.subr.mxu0 0.0
      %2033 = vmatpush1.msra.mxu0 %v1929
      %2034 = vmatprep.subr.mxu0 0.0
      %2035 = vmatpush1.msra.mxu0 %v1944
      %2036 = vmatprep.subr.mxu0 0.0
      %2037 = vmatpush1.msra.mxu0 %v1945
      %2038 = vmatprep.subr.mxu0 0.0
      %2039 = vmatpush1.msra.mxu0 %v1874
      %2040 = vmatprep.subr.mxu0 0.0
      %2041 = vmatpush1.msra.mxu0 %v1877
      %2042 = vmatprep.subr.mxu0 0.0
      %2043 = vmatpush1.msra.mxu0 %v1961
      %2044 = vmatprep.subr.mxu0 0.0
      %2045 = vmatpush1.msra.mxu0 %v1962
      %2046 = vmatprep.subr.mxu0 0.0
      %2047 = vmatpush1.msra.mxu0 %v1978
      %2048 = vmatprep.subr.mxu0 0.0
      %2049 = vmatpush1.msra.mxu0 %v1979
      %2050 = vmatprep.subr.mxu0 0.0
      %2051 = vmatpush1.msra.mxu0 %v1995
      %2052 = vmatprep.subr.mxu0 0.0
      %2053 = vmatpush1.msra.mxu0 %v1996
      %2054 = vmatprep.subr.mxu0 0.0
      %2055 = vmatpush1.msra.mxu0 %v2012
      %2056 = vmatprep.subr.mxu0 0.0
      %2057 = vmatpush1.msra.mxu0 %v2013
      %2058 = vmatprep.subr.mxu0 0.0
      %2059 = vmatpush1.msra.mxu0 0.0
      %2060 = vmatprep.subr.mxu0 0.0
      %2061 = vmatpush1.msra.mxu0 0.0
      %2062 = vmatprep.subr.mxu0 0.0
      %2063 = vmatpush1.msra.mxu0 0.0
      %2064 = vmatprep.subr.mxu0 0.0
      %2065 = vmatpush1.msra.mxu0 0.0
      %2066 = vmatprep.subr.mxu0 0.0
      %2067 = vmatpush1.msra.mxu0 0.0
      %2068 = vmatprep.subr.mxu0 0.0
      %2069 = vmatpush1.msra.mxu0 0.0
      %2070 = vmatprep.subr.mxu0 0.0
      %2071 = vmatpush1.msra.mxu0 0.0
      %2072 = vmatprep.subr.mxu0 0.0
      %2073 = vmatpush1.msra.mxu0 0.0
      %2074 = vmatprep.subr.mxu0 0.0
      %2075 = vmatpush1.msra.mxu0 0.0
      %2076 = vmatprep.subr.mxu0 0.0
      %2077 = vmatpush1.msra.mxu0 0.0
      %2078 = vmatprep.subr.mxu0 0.0
      %2079 = vmatpush1.msra.mxu0 0.0
      %2080 = vmatprep.subr.mxu0 0.0
      %2081 = vmatpush1.msra.mxu0 0.0
      %2082 = vmatprep.subr.mxu0 0.0
      %2083 = vmatpush1.msra.mxu0 0.0
      %2084 = vmatprep.subr.mxu0 0.0
      %2085 = vmatpush1.msra.mxu0 0.0
      %2086 = vmatprep.mubr.f32.mxu0 %v2020
      %2087 = vmatmul.mubr.f32.gmra.mrb[0].mxu0 %v1879
      %v2088 = vpop.f32.mrb[0].mxu0
      %v2089 = vadd.f32 %v2017, %v2088
      %v2090 = vpop.f32.mrb[0].mxu0
      %2091 = vdwg.mxu0
      %vm2092 = vcmp.ge.f32.partialorder %v2089, 0.0
      %v2093 = vmul.f32 %v2089, 0.2
      %v2094 = vsel %vm2092, %v2089, %v2093
      %2096 = vrot.lane.b32.xlu0 %v2094, 127
      %v2097 = vpop.permute.xlu0 %2096
      %2099 = vrot.lane.b32.xlu0 %v2094, 63
      %v2100 = vpop.permute.xlu0 %2099
      %v2102 = vsel %vm1958, %v2097, %v2100
      %v2103 = vmax.f32 %v2094, %v2102
      %2105 = vrot.lane.b32.xlu0 %v2103, 120
      %v2106 = vpop.permute.xlu0 %2105
      %2108 = vrot.lane.b32.xlu0 %v2103, 56
      %v2109 = vpop.permute.xlu0 %2108
      %v2111 = vsel %vm1992, %v2106, %v2109
      %v2112 = vmax.f32 %v2103, %v2111
      %v2113 = vshra.s32 %v628, 4
      %v2114 = vmul.u32 %v2113, 64
      %v2115 = vshra.s32 %v640, 2
      %v2116 = vmul.u32 %v2115, 8
      %v2117 = vand.u32 %v640, 3
      %v2118 = vadd.s32 %v2116, %v2117
      %v2119 = vmul.u32 %v2118, 2
      %v2120 = vadd.s32 %v2114, %v2119
      %vm2121 = vcmp.eq.s32.totalorder %v1390, %v2120
      %vm2122 = vcmp.eq.s32.totalorder %v1391, %v2120
      %vm2123 = vcmp.eq.s32.totalorder %v1392, %v2120
      %vm2124 = vcmp.eq.s32.totalorder %v1393, %v2120
      %vm2125 = vcmp.eq.s32.totalorder %v1394, %v2120
      %vm2126 = vcmp.eq.s32.totalorder %v1395, %v2120
      %vm2127 = vcmp.eq.s32.totalorder %v1396, %v2120
      %vm2128 = vcmp.eq.s32.totalorder %v1397, %v2120
      %v2129 = vsel %vm2121, 1.0, 0.0
      %v2130 = vsel %vm2122, 1.0, 0.0
      %v2131 = vsel %vm2123, 1.0, 0.0
      %v2132 = vsel %vm2124, 1.0, 0.0
      %v2133 = vsel %vm2125, 1.0, 0.0
      %v2134 = vsel %vm2126, 1.0, 0.0
      %v2135 = vsel %vm2127, 1.0, 0.0
      %v2136 = vsel %vm2128, 1.0, 0.0
      %vm2137 = vcmask 523264
      %v2139 = vsel %vm2137, %v2112, 0
      %2141 = vmatprep.subr.mxu0 0.0
      %2142 = vmatpush1.msra.mxu0 %v2129
      %2143 = vmatprep.subr.mxu0 0.0
      %2144 = vmatpush1.msra.mxu0 %v2130
      %2145 = vmatprep.subr.mxu0 0.0
      %2146 = vmatpush1.msra.mxu0 %v2131
      %2147 = vmatprep.subr.mxu0 0.0
      %2148 = vmatpush1.msra.mxu0 %v2132
      %2149 = vmatprep.subr.mxu0 0.0
      %2150 = vmatpush1.msra.mxu0 %v2133
      %2151 = vmatprep.subr.mxu0 0.0
      %2152 = vmatpush1.msra.mxu0 %v2134
      %2153 = vmatprep.subr.mxu0 0.0
      %2154 = vmatpush1.msra.mxu0 %v2135
      %2155 = vmatprep.subr.mxu0 0.0
      %2156 = vmatpush1.msra.mxu0 %v2136
      %2157 = vmatprep.subr.mxu0 0.0
      %2158 = vmatpush1.msra.mxu0 0.0
      %2159 = vmatprep.subr.mxu0 0.0
      %2160 = vmatpush1.msra.mxu0 0.0
      %2161 = vmatprep.subr.mxu0 0.0
      %2162 = vmatpush1.msra.mxu0 0.0
      %2163 = vmatprep.subr.mxu0 0.0
      %2164 = vmatpush1.msra.mxu0 0.0
      %2165 = vmatprep.subr.mxu0 0.0
      %2166 = vmatpush1.msra.mxu0 0.0
      %2167 = vmatprep.subr.mxu0 0.0
      %2168 = vmatpush1.msra.mxu0 0.0
      %2169 = vmatprep.subr.mxu0 0.0
      %2170 = vmatpush1.msra.mxu0 0.0
      %2171 = vmatprep.subr.mxu0 0.0
      %2172 = vmatpush1.msra.mxu0 0.0
      %2173 = vmatprep.subr.mxu0 0.0
      %2174 = vmatpush1.msra.mxu0 0.0
      %2175 = vmatprep.subr.mxu0 0.0
      %2176 = vmatpush1.msra.mxu0 0.0
      %2177 = vmatprep.subr.mxu0 0.0
      %2178 = vmatpush1.msra.mxu0 0.0
      %2179 = vmatprep.subr.mxu0 0.0
      %2180 = vmatpush1.msra.mxu0 0.0
      %2181 = vmatprep.subr.mxu0 0.0
      %2182 = vmatpush1.msra.mxu0 0.0
      %2183 = vmatprep.subr.mxu0 0.0
      %2184 = vmatpush1.msra.mxu0 0.0
      %2185 = vmatprep.subr.mxu0 0.0
      %2186 = vmatpush1.msra.mxu0 0.0
      %2187 = vmatprep.subr.mxu0 0.0
      %2188 = vmatpush1.msra.mxu0 0.0
      %2189 = vmatprep.subr.mxu0 0.0
      %2190 = vmatpush1.msra.mxu0 0.0
      %2191 = vmatprep.subr.mxu0 0.0
      %2192 = vmatpush1.msra.mxu0 0.0
      %2193 = vmatprep.subr.mxu0 0.0
      %2194 = vmatpush1.msra.mxu0 0.0
      %2195 = vmatprep.subr.mxu0 0.0
      %2196 = vmatpush1.msra.mxu0 0.0
      %2197 = vmatprep.subr.mxu0 0.0
      %2198 = vmatpush1.msra.mxu0 0.0
      %2199 = vmatprep.subr.mxu0 0.0
      %2200 = vmatpush1.msra.mxu0 0.0
      %2201 = vmatprep.subr.mxu0 0.0
      %2202 = vmatpush1.msra.mxu0 0.0
      %2203 = vmatprep.subr.mxu0 0.0
      %2204 = vmatpush1.msra.mxu0 0.0
      %2205 = vmatprep.mubr.f32.mxu0 0.0
      %2206 = vmatmul.mubr.f32.gmra.mrb[0].mxu0 %v2139
      %v2207 = vpop.f32.mrb[0].mxu0
      %v2208 = vadd.f32 0.0, %v2207
      %v2209 = vpop.f32.mrb[0].mxu0
      %2210 = vdwg.mxu0
      %v2211 = vld [vmem:[%s10] sm:$0xff]
      %v2212 = vld [vmem:[%s11] sm:$0xff]
      %v2213 = vand.u32 %v628, 3
      %2215 = vrot.lane.b32.xlu0 %v2208, 117
      %v2216 = vpop.permute.xlu0 %2215
      %2218 = vrot.lane.b32.xlu0 %v2208, 5
      %v2219 = vpop.permute.xlu0 %2218
      %vm2221 = vcmask 39936
      %v2222 = vsel %vm2221, %v2216, %v2219
      %vm2223 = vcmp.ge.s32.totalorder %v2115, 1
      %vm2224 = vcmp.ge.s32.totalorder %v2213, 1
      %vm2225 = vmand %vm2223, %vm2224
      %v2226 = vsel %vm2225, 1, 0
      %vm2227 = vcmp.eq.s32.totalorder %v2226, 1
      %v2228 = vsel %vm2227, %v2222, 0.0
      %2229 = vrot.lane.b32.xlu0 %v2208, 116
      %v2230 = vpop.permute.xlu0 %2229
      %2232 = vrot.lane.b32.xlu0 %v2208, 4
      %v2233 = vpop.permute.xlu0 %2232
      %vm2235 = vcmask 31744
      %v2236 = vsel %vm2235, %v2230, %v2233
      %v2237 = vsel %vm2223, 1, 0
      %vm2238 = vcmp.eq.s32.totalorder %v2237, 1
      %v2239 = vsel %vm2238, %v2236, 0.0
      %2240 = vrot.lane.b32.xlu0 %v2208, 115
      %v2241 = vpop.permute.xlu0 %2240
      %2243 = vrot.lane.b32.xlu0 %v2208, 3
      %v2244 = vpop.permute.xlu0 %2243
      %vm2246 = vcmask 23552
      %v2247 = vsel %vm2246, %v2241, %v2244
      %vm2248 = vcmp.le.s32.totalorder %v2213, 2
      %vm2249 = vmand %vm2223, %vm2248
      %v2250 = vsel %vm2249, 1, 0
      %vm2251 = vcmp.eq.s32.totalorder %v2250, 1
      %v2252 = vsel %vm2251, %v2247, 0.0
      %2253 = vrot.lane.b32.xlu0 %v2208, 113
      %v2254 = vpop.permute.xlu0 %2253
      %2256 = vrot.lane.b32.xlu0 %v2208, 1
      %v2257 = vpop.permute.xlu0 %2256
      %v2259 = vsel %vm767, %v2254, %v2257
      %v2260 = vsel %vm2224, 1, 0
      %vm2261 = vcmp.eq.s32.totalorder %v2260, 1
      %v2262 = vsel %vm2261, %v2259, 0.0
      %2263 = vrot.lane.b32.xlu0 %v2208, 127
      %v2264 = vpop.permute.xlu0 %2263
      %2266 = vrot.lane.b32.xlu0 %v2208, 15
      %v2267 = vpop.permute.xlu0 %2266
      %v2269 = vsel %vm729, %v2264, %v2267
      %v2270 = vsel %vm2248, 1, 0
      %vm2271 = vcmp.eq.s32.totalorder %v2270, 1
      %v2272 = vsel %vm2271, %v2269, 0.0
      %2273 = vrot.lane.b32.xlu0 %v2208, 125
      %v2274 = vpop.permute.xlu0 %2273
      %2276 = vrot.lane.b32.xlu0 %v2208, 13
      %v2277 = vpop.permute.xlu0 %2276
      %vm2279 = vcmask 105472
      %v2280 = vsel %vm2279, %v2274, %v2277
      %vm2281 = vcmp.le.s32.totalorder %v2115, 2
      %vm2282 = vmand %vm2281, %vm2224
      %v2283 = vsel %vm2282, 1, 0
      %vm2284 = vcmp.eq.s32.totalorder %v2283, 1
      %v2285 = vsel %vm2284, %v2280, 0.0
      %2286 = vrot.lane.b32.xlu0 %v2208, 124
      %v2287 = vpop.permute.xlu0 %2286
      %2289 = vrot.lane.b32.xlu0 %v2208, 12
      %v2290 = vpop.permute.xlu0 %2289
      %vm2292 = vcmask 97280
      %v2293 = vsel %vm2292, %v2287, %v2290
      %v2294 = vsel %vm2281, 1, 0
      %vm2295 = vcmp.eq.s32.totalorder %v2294, 1
      %v2296 = vsel %vm2295, %v2293, 0.0
      %2297 = vrot.lane.b32.xlu0 %v2208, 123
      %v2298 = vpop.permute.xlu0 %2297
      %2300 = vrot.lane.b32.xlu0 %v2208, 11
      %v2301 = vpop.permute.xlu0 %2300
      %vm2303 = vcmask 89088
      %v2304 = vsel %vm2303, %v2298, %v2301
      %vm2305 = vmand %vm2281, %vm2248
      %v2306 = vsel %vm2305, 1, 0
      %vm2307 = vcmp.eq.s32.totalorder %v2306, 1
      %v2308 = vsel %vm2307, %v2304, 0.0
      %2310 = vset.pattern.permute.xlu0 0
      %2311 = vperm.xlu0 %2310, %v2212
      %v2312 = vpop.permute.xlu0 %2311
      %v2315 = vsel %vm925, %v2211, 0
      %2317 = vmatprep.subr.mxu0 0.0
      %2318 = vmatpush1.msra.mxu0 %v2228
      %2319 = vmatprep.subr.mxu0 0.0
      %2320 = vmatpush1.msra.mxu0 %v2239
      %2321 = vmatprep.subr.mxu0 0.0
      %2322 = vmatpush1.msra.mxu0 %v2252
      %2323 = vmatprep.subr.mxu0 0.0
      %2324 = vmatpush1.msra.mxu0 %v2262
      %2325 = vmatprep.subr.mxu0 0.0
      %2326 = vmatpush1.msra.mxu0 %v2208
      %2327 = vmatprep.subr.mxu0 0.0
      %2328 = vmatpush1.msra.mxu0 %v2272
      %2329 = vmatprep.subr.mxu0 0.0
      %2330 = vmatpush1.msra.mxu0 %v2285
      %2331 = vmatprep.subr.mxu0 0.0
      %2332 = vmatpush1.msra.mxu0 %v2296
      %2333 = vmatprep.subr.mxu0 0.0
      %2334 = vmatpush1.msra.mxu0 %v2308
      %2335 = vmatprep.subr.mxu0 0.0
      %2336 = vmatpush1.msra.mxu0 0.0
      %2337 = vmatprep.subr.mxu0 0.0
      %2338 = vmatpush1.msra.mxu0 0.0
      %2339 = vmatprep.subr.mxu0 0.0
      %2340 = vmatpush1.msra.mxu0 0.0
      %2341 = vmatprep.subr.mxu0 0.0
      %2342 = vmatpush1.msra.mxu0 0.0
      %2343 = vmatprep.subr.mxu0 0.0
      %2344 = vmatpush1.msra.mxu0 0.0
      %2345 = vmatprep.subr.mxu0 0.0
      %2346 = vmatpush1.msra.mxu0 0.0
      %2347 = vmatprep.subr.mxu0 0.0
      %2348 = vmatpush1.msra.mxu0 0.0
      %2349 = vmatprep.subr.mxu0 0.0
      %2350 = vmatpush1.msra.mxu0 0.0
      %2351 = vmatprep.subr.mxu0 0.0
      %2352 = vmatpush1.msra.mxu0 0.0
      %2353 = vmatprep.subr.mxu0 0.0
      %2354 = vmatpush1.msra.mxu0 0.0
      %2355 = vmatprep.subr.mxu0 0.0
      %2356 = vmatpush1.msra.mxu0 0.0
      %2357 = vmatprep.subr.mxu0 0.0
      %2358 = vmatpush1.msra.mxu0 0.0
      %2359 = vmatprep.subr.mxu0 0.0
      %2360 = vmatpush1.msra.mxu0 0.0
      %2361 = vmatprep.subr.mxu0 0.0
      %2362 = vmatpush1.msra.mxu0 0.0
      %2363 = vmatprep.subr.mxu0 0.0
      %2364 = vmatpush1.msra.mxu0 0.0
      %2365 = vmatprep.subr.mxu0 0.0
      %2366 = vmatpush1.msra.mxu0 0.0
      %2367 = vmatprep.subr.mxu0 0.0
      %2368 = vmatpush1.msra.mxu0 0.0
      %2369 = vmatprep.subr.mxu0 0.0
      %2370 = vmatpush1.msra.mxu0 0.0
      %2371 = vmatprep.subr.mxu0 0.0
      %2372 = vmatpush1.msra.mxu0 0.0
      %2373 = vmatprep.subr.mxu0 0.0
      %2374 = vmatpush1.msra.mxu0 0.0
      %2375 = vmatprep.subr.mxu0 0.0
      %2376 = vmatpush1.msra.mxu0 0.0
      %2377 = vmatprep.subr.mxu0 0.0
      %2378 = vmatpush1.msra.mxu0 0.0
      %2379 = vmatprep.subr.mxu0 0.0
      %2380 = vmatpush1.msra.mxu0 0.0
      %2381 = vmatprep.mubr.f32.mxu0 0.0
      %2382 = vmatmul.mubr.f32.gmra.mrb[0].mxu0 %v2315
      %v2383 = vpop.f32.mrb[0].mxu0
      %v2384 = vadd.f32 %v2312, %v2383
      %v2385 = vpop.f32.mrb[0].mxu0
      %2386 = vdwg.mxu0
      %vm2387 = vcmp.ge.f32.partialorder %v2384, 0.0
      %v2388 = vmul.f32 %v2384, 0.2
      %v2389 = vsel %vm2387, %v2384, %v2388
      %v2390 = vmul.u32 %v1454, 16
      %v2391 = vshra.s32 %v1457, 1
      %v2392 = vmul.u32 %v2391, 4
      %v2393 = vadd.s32 %v2390, %v2392
      %v2394 = vshra.s32 %v1459, 1
      %v2395 = vadd.s32 %v2393, %v2394
      %vm2396 = vcmp.eq.s32.totalorder %v1390, %v2395
      %vm2397 = vcmp.eq.s32.totalorder %v1391, %v2395
      %v2398 = vsel %vm2396, 1.0, 0.0
      %v2399 = vsel %vm2397, 1.0, 0.0
      %v2401 = vsel %vm699, %v2389, 0
      %2403 = vmatprep.subr.mxu0 0.0
      %2404 = vmatpush1.msra.mxu0 %v2398
      %2405 = vmatprep.subr.mxu0 0.0
      %2406 = vmatpush1.msra.mxu0 %v2399
      %2407 = vmatprep.subr.mxu0 0.0
      %2408 = vmatpush1.msra.mxu0 0.0
      %2409 = vmatprep.subr.mxu0 0.0
      %2410 = vmatpush1.msra.mxu0 0.0
      %2411 = vmatprep.subr.mxu0 0.0
      %2412 = vmatpush1.msra.mxu0 0.0
      %2413 = vmatprep.subr.mxu0 0.0
      %2414 = vmatpush1.msra.mxu0 0.0
      %2415 = vmatprep.subr.mxu0 0.0
      %2416 = vmatpush1.msra.mxu0 0.0
      %2417 = vmatprep.subr.mxu0 0.0
      %2418 = vmatpush1.msra.mxu0 0.0
      %2419 = vmatprep.subr.mxu0 0.0
      %2420 = vmatpush1.msra.mxu0 0.0
      %2421 = vmatprep.subr.mxu0 0.0
      %2422 = vmatpush1.msra.mxu0 0.0
      %2423 = vmatprep.subr.mxu0 0.0
      %2424 = vmatpush1.msra.mxu0 0.0
      %2425 = vmatprep.subr.mxu0 0.0
      %2426 = vmatpush1.msra.mxu0 0.0
      %2427 = vmatprep.subr.mxu0 0.0
      %2428 = vmatpush1.msra.mxu0 0.0
      %2429 = vmatprep.subr.mxu0 0.0
      %2430 = vmatpush1.msra.mxu0 0.0
      %2431 = vmatprep.subr.mxu0 0.0
      %2432 = vmatpush1.msra.mxu0 0.0
      %2433 = vmatprep.subr.mxu0 0.0
      %2434 = vmatpush1.msra.mxu0 0.0
      %2435 = vmatprep.subr.mxu0 0.0
      %2436 = vmatpush1.msra.mxu0 0.0
      %2437 = vmatprep.subr.mxu0 0.0
      %2438 = vmatpush1.msra.mxu0 0.0
      %2439 = vmatprep.subr.mxu0 0.0
      %2440 = vmatpush1.msra.mxu0 0.0
      %2441 = vmatprep.subr.mxu0 0.0
      %2442 = vmatpush1.msra.mxu0 0.0
      %2443 = vmatprep.subr.mxu0 0.0
      %2444 = vmatpush1.msra.mxu0 0.0
      %2445 = vmatprep.subr.mxu0 0.0
      %2446 = vmatpush1.msra.mxu0 0.0
      %2447 = vmatprep.subr.mxu0 0.0
      %2448 = vmatpush1.msra.mxu0 0.0
      %2449 = vmatprep.subr.mxu0 0.0
      %2450 = vmatpush1.msra.mxu0 0.0
      %2451 = vmatprep.subr.mxu0 0.0
      %2452 = vmatpush1.msra.mxu0 0.0
      %2453 = vmatprep.subr.mxu0 0.0
      %2454 = vmatpush1.msra.mxu0 0.0
      %2455 = vmatprep.subr.mxu0 0.0
      %2456 = vmatpush1.msra.mxu0 0.0
      %2457 = vmatprep.subr.mxu0 0.0
      %2458 = vmatpush1.msra.mxu0 0.0
      %2459 = vmatprep.subr.mxu0 0.0
      %2460 = vmatpush1.msra.mxu0 0.0
      %2461 = vmatprep.subr.mxu0 0.0
      %2462 = vmatpush1.msra.mxu0 0.0
      %2463 = vmatprep.subr.mxu0 0.0
      %2464 = vmatpush1.msra.mxu0 0.0
      %2465 = vmatprep.subr.mxu0 0.0
      %2466 = vmatpush1.msra.mxu0 0.0
      %2467 = vmatprep.mubr.f32.mxu0 0.0
      %2468 = vmatmul.mubr.f32.gmra.mrb[0].mxu0 %v2401
      %v2469 = vpop.f32.mrb[0].mxu0
      %v2470 = vadd.f32 0.0, %v2469
      %v2471 = vpop.f32.mrb[0].mxu0
      %2472 = vdwg.mxu0
      %v2473 = vld [vmem:[%s12] sm:$0xff]
      %v2474 = vld [vmem:[%s12 + $0x8] sm:$0xff]
      %v2475 = vld [vmem:[%s13] sm:$0xff]
      %2477 = vrot.lane.b32.xlu0 %v2470, 73
      %v2478 = vpop.permute.xlu0 %2477
      %2479 = vrot.lane.b32.xlu0 %v2094, 73
      %v2480 = vpop.permute.xlu0 %2479
      %2483 = vrot.lane.b32.xlu0 %v2470, 9
      %v2484 = vpop.permute.xlu0 %2483
      %2485 = vrot.lane.b32.xlu0 %v2094, 9
      %v2486 = vpop.permute.xlu0 %2485
      %v2489 = vsel %vm1738, %v2478, %v2484
      %v2490 = vsel %vm1738, %v2480, %v2486
      %v2491 = vsel %vm1743, %v2489, 0.0
      %v2492 = vsel %vm1743, %v2490, 0.0
      %2493 = vrot.lane.b32.xlu0 %v2470, 72
      %v2494 = vpop.permute.xlu0 %2493
      %2495 = vrot.lane.b32.xlu0 %v2094, 72
      %v2496 = vpop.permute.xlu0 %2495
      %2499 = vrot.lane.b32.xlu0 %v2470, 8
      %v2500 = vpop.permute.xlu0 %2499
      %2501 = vrot.lane.b32.xlu0 %v2094, 8
      %v2502 = vpop.permute.xlu0 %2501
      %v2505 = vsel %vm1748, %v2494, %v2500
      %v2506 = vsel %vm1748, %v2496, %v2502
      %v2507 = vsel %vm1750, %v2505, 0.0
      %v2508 = vsel %vm1750, %v2506, 0.0
      %2509 = vrot.lane.b32.xlu0 %v2470, 71
      %v2510 = vpop.permute.xlu0 %2509
      %2511 = vrot.lane.b32.xlu0 %v2094, 71
      %v2512 = vpop.permute.xlu0 %2511
      %2515 = vrot.lane.b32.xlu0 %v2470, 7
      %v2516 = vpop.permute.xlu0 %2515
      %2517 = vrot.lane.b32.xlu0 %v2094, 7
      %v2518 = vpop.permute.xlu0 %2517
      %v2521 = vsel %vm1755, %v2510, %v2516
      %v2522 = vsel %vm1755, %v2512, %v2518
      %v2523 = vsel %vm1759, %v2521, 0.0
      %v2524 = vsel %vm1759, %v2522, 0.0
      %2525 = vrot.lane.b32.xlu0 %v2470, 65
      %v2526 = vpop.permute.xlu0 %2525
      %2527 = vrot.lane.b32.xlu0 %v2094, 65
      %v2528 = vpop.permute.xlu0 %2527
      %2531 = vrot.lane.b32.xlu0 %v2470, 1
      %v2532 = vpop.permute.xlu0 %2531
      %2533 = vrot.lane.b32.xlu0 %v2094, 1
      %v2534 = vpop.permute.xlu0 %2533
      %v2537 = vsel %vm767, %v2526, %v2532
      %v2538 = vsel %vm767, %v2528, %v2534
      %v2539 = vsel %vm1765, %v2537, 0.0
      %v2540 = vsel %vm1765, %v2538, 0.0
      %2541 = vrot.lane.b32.xlu0 %v2470, 127
      %v2542 = vpop.permute.xlu0 %2541
      %2544 = vrot.lane.b32.xlu0 %v2470, 63
      %v2545 = vpop.permute.xlu0 %2544
      %v2547 = vsel %vm1958, %v2542, %v2545
      %v2548 = vsel %vm1771, %v2547, 0.0
      %v2549 = vsel %vm1771, %v2102, 0.0
      %2550 = vrot.lane.b32.xlu0 %v2470, 121
      %v2551 = vpop.permute.xlu0 %2550
      %2552 = vrot.lane.b32.xlu0 %v2094, 121
      %v2553 = vpop.permute.xlu0 %2552
      %2556 = vrot.lane.b32.xlu0 %v2470, 57
      %v2557 = vpop.permute.xlu0 %2556
      %2558 = vrot.lane.b32.xlu0 %v2094, 57
      %v2559 = vpop.permute.xlu0 %2558
      %v2562 = vsel %vm1975, %v2551, %v2557
      %v2563 = vsel %vm1975, %v2553, %v2559
      %v2564 = vsel %vm1779, %v2562, 0.0
      %v2565 = vsel %vm1779, %v2563, 0.0
      %2566 = vrot.lane.b32.xlu0 %v2470, 120
      %v2567 = vpop.permute.xlu0 %2566
      %2568 = vrot.lane.b32.xlu0 %v2094, 120
      %v2569 = vpop.permute.xlu0 %2568
      %2572 = vrot.lane.b32.xlu0 %v2470, 56
      %v2573 = vpop.permute.xlu0 %2572
      %2574 = vrot.lane.b32.xlu0 %v2094, 56
      %v2575 = vpop.permute.xlu0 %2574
      %v2578 = vsel %vm1992, %v2567, %v2573
      %v2579 = vsel %vm1992, %v2569, %v2575
      %v2580 = vsel %vm1785, %v2578, 0.0
      %v2581 = vsel %vm1785, %v2579, 0.0
      %2582 = vrot.lane.b32.xlu0 %v2470, 119
      %v2583 = vpop.permute.xlu0 %2582
      %2584 = vrot.lane.b32.xlu0 %v2094, 119
      %v2585 = vpop.permute.xlu0 %2584
      %2588 = vrot.lane.b32.xlu0 %v2470, 55
      %v2589 = vpop.permute.xlu0 %2588
      %2590 = vrot.lane.b32.xlu0 %v2094, 55
      %v2591 = vpop.permute.xlu0 %2590
      %v2594 = vsel %vm2009, %v2583, %v2589
      %v2595 = vsel %vm2009, %v2585, %v2591
      %v2596 = vsel %vm1792, %v2594, 0.0
      %v2597 = vsel %vm1792, %v2595, 0.0
      %2599 = vset.pattern.permute.xlu0 0
      %2600 = vperm.xlu0 %2599, %v2475
      %v2601 = vpop.permute.xlu0 %2600
      %v2604 = vsel %vm699, %v2474, 0
      %2606 = vmatprep.subr.mxu0 0.0
      %2607 = vmatpush1.msra.mxu0 %v2491
      %2608 = vmatprep.subr.mxu0 0.0
      %2609 = vmatpush1.msra.mxu0 %v2492
      %2610 = vmatprep.subr.mxu0 0.0
      %2611 = vmatpush1.msra.mxu0 %v2507
      %2612 = vmatprep.subr.mxu0 0.0
      %2613 = vmatpush1.msra.mxu0 %v2508
      %2614 = vmatprep.subr.mxu0 0.0
      %2615 = vmatpush1.msra.mxu0 %v2523
      %2616 = vmatprep.subr.mxu0 0.0
      %2617 = vmatpush1.msra.mxu0 %v2524
      %2618 = vmatprep.subr.mxu0 0.0
      %2619 = vmatpush1.msra.mxu0 %v2539
      %2620 = vmatprep.subr.mxu0 0.0
      %2621 = vmatpush1.msra.mxu0 %v2540
      %2622 = vmatprep.subr.mxu0 0.0
      %2623 = vmatpush1.msra.mxu0 %v2470
      %2624 = vmatprep.subr.mxu0 0.0
      %2625 = vmatpush1.msra.mxu0 %v2094
      %2626 = vmatprep.subr.mxu0 0.0
      %2627 = vmatpush1.msra.mxu0 %v2548
      %2628 = vmatprep.subr.mxu0 0.0
      %2629 = vmatpush1.msra.mxu0 %v2549
      %2630 = vmatprep.subr.mxu0 0.0
      %2631 = vmatpush1.msra.mxu0 %v2564
      %2632 = vmatprep.subr.mxu0 0.0
      %2633 = vmatpush1.msra.mxu0 %v2565
      %2634 = vmatprep.subr.mxu0 0.0
      %2635 = vmatpush1.msra.mxu0 %v2580
      %2636 = vmatprep.subr.mxu0 0.0
      %2637 = vmatpush1.msra.mxu0 %v2581
      %2638 = vmatprep.subr.mxu0 0.0
      %2639 = vmatpush1.msra.mxu0 %v2596
      %2640 = vmatprep.subr.mxu0 0.0
      %2641 = vmatpush1.msra.mxu0 %v2597
      %2642 = vmatprep.subr.mxu0 0.0
      %2643 = vmatpush1.msra.mxu0 0.0
      %2644 = vmatprep.subr.mxu0 0.0
      %2645 = vmatpush1.msra.mxu0 0.0
      %2646 = vmatprep.subr.mxu0 0.0
      %2647 = vmatpush1.msra.mxu0 0.0
      %2648 = vmatprep.subr.mxu0 0.0
      %2649 = vmatpush1.msra.mxu0 0.0
      %2650 = vmatprep.subr.mxu0 0.0
      %2651 = vmatpush1.msra.mxu0 0.0
      %2652 = vmatprep.subr.mxu0 0.0
      %2653 = vmatpush1.msra.mxu0 0.0
      %2654 = vmatprep.subr.mxu0 0.0
      %2655 = vmatpush1.msra.mxu0 0.0
      %2656 = vmatprep.subr.mxu0 0.0
      %2657 = vmatpush1.msra.mxu0 0.0
      %2658 = vmatprep.subr.mxu0 0.0
      %2659 = vmatpush1.msra.mxu0 0.0
      %2660 = vmatprep.subr.mxu0 0.0
      %2661 = vmatpush1.msra.mxu0 0.0
      %2662 = vmatprep.subr.mxu0 0.0
      %2663 = vmatpush1.msra.mxu0 0.0
      %2664 = vmatprep.subr.mxu0 0.0
      %2665 = vmatpush1.msra.mxu0 0.0
      %2666 = vmatprep.subr.mxu0 0.0
      %2667 = vmatpush1.msra.mxu0 0.0
      %2668 = vmatprep.subr.mxu0 0.0
      %2669 = vmatpush1.msra.mxu0 0.0
      %2670 = vmatprep.mubr.f32.mxu0 %v2604
      %2671 = vmatmul.mubr.f32.gmra.mrb[0].mxu0 %v2473
      %v2672 = vpop.f32.mrb[0].mxu0
      %v2673 = vadd.f32 %v2601, %v2672
      %v2674 = vpop.f32.mrb[0].mxu0
      %2675 = vdwg.mxu0
      %vm2676 = vcmp.ge.f32.partialorder %v2673, 0.0
      %v2677 = vmul.f32 %v2673, 0.2
      %v2678 = vsel %vm2676, %v2673, %v2677
      %v2679 = vshra.s32 %v628, 8
      %v2680 = vshra.s32 %v629, 8
      %v2681 = vmul.u32 %v2679, 64
      %v2682 = vmul.u32 %v2680, 64
      %v2683 = vshra.s32 %v636, 1
      %v2684 = vshra.s32 %v637, 1
      %v2685 = vmul.u32 %v2683, 8
      %v2686 = vmul.u32 %v2684, 8
      %v2687 = vadd.s32 %v2681, %v2685
      %v2688 = vadd.s32 %v2682, %v2686
      %v2689 = vand.u32 %v632, 15
      %v2690 = vand.u32 %v633, 15
      %v2691 = vshra.s32 %v2689, 1
      %v2692 = vshra.s32 %v2690, 1
      %v2693 = vadd.s32 %v2687, %v2691
      %v2694 = vadd.s32 %v2688, %v2692
      %vm2695 = vcmp.eq.s32.totalorder %v1390, %v2693
      %vm2696 = vcmp.eq.s32.totalorder %v1390, %v2694
      %vm2697 = vcmp.eq.s32.totalorder %v1391, %v2693
      %vm2698 = vcmp.eq.s32.totalorder %v1391, %v2694
      %vm2699 = vcmp.eq.s32.totalorder %v1392, %v2693
      %vm2700 = vcmp.eq.s32.totalorder %v1392, %v2694
      %vm2701 = vcmp.eq.s32.totalorder %v1393, %v2693
      %vm2702 = vcmp.eq.s32.totalorder %v1393, %v2694
      %vm2703 = vcmp.eq.s32.totalorder %v1394, %v2693
      %vm2704 = vcmp.eq.s32.totalorder %v1394, %v2694
      %vm2705 = vcmp.eq.s32.totalorder %v1395, %v2693
      %vm2706 = vcmp.eq.s32.totalorder %v1395, %v2694
      %vm2707 = vcmp.eq.s32.totalorder %v1396, %v2693
      %vm2708 = vcmp.eq.s32.totalorder %v1396, %v2694
      %vm2709 = vcmp.eq.s32.totalorder %v1397, %v2693
      %vm2710 = vcmp.eq.s32.totalorder %v1397, %v2694
      %v2711 = vsel %vm2695, 1.0, 0.0
      %v2712 = vsel %vm2696, 1.0, 0.0
      %v2713 = vsel %vm2697, 1.0, 0.0
      %v2714 = vsel %vm2698, 1.0, 0.0
      %v2715 = vsel %vm2699, 1.0, 0.0
      %v2716 = vsel %vm2700, 1.0, 0.0
      %v2717 = vsel %vm2701, 1.0, 0.0
      %v2718 = vsel %vm2702, 1.0, 0.0
      %v2719 = vsel %vm2703, 1.0, 0.0
      %v2720 = vsel %vm2704, 1.0, 0.0
      %v2721 = vsel %vm2705, 1.0, 0.0
      %v2722 = vsel %vm2706, 1.0, 0.0
      %v2723 = vsel %vm2707, 1.0, 0.0
      %v2724 = vsel %vm2708, 1.0, 0.0
      %v2725 = vsel %vm2709, 1.0, 0.0
      %v2726 = vsel %vm2710, 1.0, 0.0
      %v2728 = vsel %vm2137, %v2678, 0
      %2730 = vmatprep.subr.mxu0 %v2712
      %2731 = vmatpush1.msra.mxu0 %v2711
      %2732 = vmatprep.subr.mxu0 %v2714
      %2733 = vmatpush1.msra.mxu0 %v2713
      %2734 = vmatprep.subr.mxu0 %v2716
      %2735 = vmatpush1.msra.mxu0 %v2715
      %2736 = vmatprep.subr.mxu0 %v2718
      %2737 = vmatpush1.msra.mxu0 %v2717
      %2738 = vmatprep.subr.mxu0 %v2720
      %2739 = vmatpush1.msra.mxu0 %v2719
      %2740 = vmatprep.subr.mxu0 %v2722
      %2741 = vmatpush1.msra.mxu0 %v2721
      %2742 = vmatprep.subr.mxu0 %v2724
      %2743 = vmatpush1.msra.mxu0 %v2723
      %2744 = vmatprep.subr.mxu0 %v2726
      %2745 = vmatpush1.msra.mxu0 %v2725
      %2746 = vmatprep.subr.mxu0 0.0
      %2747 = vmatpush1.msra.mxu0 0.0
      %2748 = vmatprep.subr.mxu0 0.0
      %2749 = vmatpush1.msra.mxu0 0.0
      %2750 = vmatprep.subr.mxu0 0.0
      %2751 = vmatpush1.msra.mxu0 0.0
      %2752 = vmatprep.subr.mxu0 0.0
      %2753 = vmatpush1.msra.mxu0 0.0
      %2754 = vmatprep.subr.mxu0 0.0
      %2755 = vmatpush1.msra.mxu0 0.0
      %2756 = vmatprep.subr.mxu0 0.0
      %2757 = vmatpush1.msra.mxu0 0.0
      %2758 = vmatprep.subr.mxu0 0.0
      %2759 = vmatpush1.msra.mxu0 0.0
      %2760 = vmatprep.subr.mxu0 0.0
      %2761 = vmatpush1.msra.mxu0 0.0
      %2762 = vmatprep.subr.mxu0 0.0
      %2763 = vmatpush1.msra.mxu0 0.0
      %2764 = vmatprep.subr.mxu0 0.0
      %2765 = vmatpush1.msra.mxu0 0.0
      %2766 = vmatprep.subr.mxu0 0.0
      %2767 = vmatpush1.msra.mxu0 0.0
      %2768 = vmatprep.subr.mxu0 0.0
      %2769 = vmatpush1.msra.mxu0 0.0
      %2770 = vmatprep.subr.mxu0 0.0
      %2771 = vmatpush1.msra.mxu0 0.0
      %2772 = vmatprep.subr.mxu0 0.0
      %2773 = vmatpush1.msra.mxu0 0.0
      %2774 = vmatprep.subr.mxu0 0.0
      %2775 = vmatpush1.msra.mxu0 0.0
      %2776 = vmatprep.subr.mxu0 0.0
      %2777 = vmatpush1.msra.mxu0 0.0
      %2778 = vmatprep.subr.mxu0 0.0
      %2779 = vmatpush1.msra.mxu0 0.0
      %2780 = vmatprep.subr.mxu0 0.0
      %2781 = vmatpush1.msra.mxu0 0.0
      %2782 = vmatprep.subr.mxu0 0.0
      %2783 = vmatpush1.msra.mxu0 0.0
      %2784 = vmatprep.subr.mxu0 0.0
      %2785 = vmatpush1.msra.mxu0 0.0
      %2786 = vmatprep.subr.mxu0 0.0
      %2787 = vmatpush1.msra.mxu0 0.0
      %2788 = vmatprep.subr.mxu0 0.0
      %2789 = vmatpush1.msra.mxu0 0.0
      %2790 = vmatprep.subr.mxu0 0.0
      %2791 = vmatpush1.msra.mxu0 0.0
      %2792 = vmatprep.subr.mxu0 0.0
      %2793 = vmatpush1.msra.mxu0 0.0
      %2794 = vmatprep.mubr.f32.mxu0 0.0
      %2795 = vmatmul.mubr.f32.gmra.mrb[0].mxu0 %v2728
      %v2796 = vpop.f32.mrb[0].mxu0
      %v2797 = vadd.f32 0.0, %v2796
      %v2798 = vpop.f32.mrb[0].mxu0
      %v2799 = vadd.f32 0.0, %v2798
      %2800 = vdwg.mxu0
      %v2801 = vld [vmem:[%s14] sm:$0xff]
      %v2802 = vld [vmem:[%s14 + $0x8] sm:$0xff]
      %v2803 = vld [vmem:[%s15] sm:$0xff]
      %2806 = vrot.lane.b32.xlu0 %v2799, 17
      %v2807 = vpop.permute.xlu0 %2806
      %2808 = vrot.lane.b32.xlu0 %v1356, 17
      %v2809 = vpop.permute.xlu0 %2808
      %2814 = vrot.lane.b32.xlu0 %v2797, 17
      %v2815 = vpop.permute.xlu0 %2814
      %2816 = vrot.lane.b32.xlu0 %v1355, 17
      %v2817 = vpop.permute.xlu0 %2816
      %v2818 = vsel %vm657, %v2815, %v2807
      %v2819 = vsel %vm657, %v2817, %v2809
      %v2824 = vsel %vm657, %v2807, %v2815
      %v2825 = vsel %vm657, %v2809, %v2817
      %v2826 = vsel %vm682, %v2824, 0.0
      %v2827 = vsel %vm683, %v2818, 0.0
      %v2828 = vsel %vm682, %v2825, 0.0
      %v2829 = vsel %vm683, %v2819, 0.0
      %2830 = vrot.lane.b32.xlu0 %v2799, 16
      %v2831 = vpop.permute.xlu0 %2830
      %2832 = vrot.lane.b32.xlu0 %v1356, 16
      %v2833 = vpop.permute.xlu0 %2832
      %2836 = vrot.lane.b32.xlu0 %v2797, 16
      %v2837 = vpop.permute.xlu0 %2836
      %2838 = vrot.lane.b32.xlu0 %v1355, 16
      %v2839 = vpop.permute.xlu0 %2838
      %v2840 = vsel %vm699, %v2837, %v2831
      %v2841 = vsel %vm699, %v2839, %v2833
      %v2846 = vsel %vm699, %v2831, %v2837
      %v2847 = vsel %vm699, %v2833, %v2839
      %v2848 = vsel %vm712, %v2846, 0.0
      %v2849 = vsel %vm713, %v2840, 0.0
      %v2850 = vsel %vm712, %v2847, 0.0
      %v2851 = vsel %vm713, %v2841, 0.0
      %2852 = vrot.lane.b32.xlu0 %v2799, 15
      %v2853 = vpop.permute.xlu0 %2852
      %2854 = vrot.lane.b32.xlu0 %v1356, 15
      %v2855 = vpop.permute.xlu0 %2854
      %2858 = vrot.lane.b32.xlu0 %v2797, 15
      %v2859 = vpop.permute.xlu0 %2858
      %2860 = vrot.lane.b32.xlu0 %v1355, 15
      %v2861 = vpop.permute.xlu0 %2860
      %v2862 = vsel %vm729, %v2859, %v2853
      %v2863 = vsel %vm729, %v2861, %v2855
      %v2868 = vsel %vm729, %v2853, %v2859
      %v2869 = vsel %vm729, %v2855, %v2861
      %v2870 = vsel %vm750, %v2868, 0.0
      %v2871 = vsel %vm751, %v2862, 0.0
      %v2872 = vsel %vm750, %v2869, 0.0
      %v2873 = vsel %vm751, %v2863, 0.0
      %2874 = vrot.lane.b32.xlu0 %v2799, 1
      %v2875 = vpop.permute.xlu0 %2874
      %2876 = vrot.lane.b32.xlu0 %v1356, 1
      %v2877 = vpop.permute.xlu0 %2876
      %2880 = vrot.lane.b32.xlu0 %v2797, 1
      %v2881 = vpop.permute.xlu0 %2880
      %2882 = vrot.lane.b32.xlu0 %v1355, 1
      %v2883 = vpop.permute.xlu0 %2882
      %v2884 = vsel %vm767, %v2881, %v2875
      %v2885 = vsel %vm767, %v2883, %v2877
      %v2890 = vsel %vm767, %v2875, %v2881
      %v2891 = vsel %vm767, %v2877, %v2883
      %v2892 = vsel %vm780, %v2890, 0.0
      %v2893 = vsel %vm781, %v2884, 0.0
      %v2894 = vsel %vm780, %v2891, 0.0
      %v2895 = vsel %vm781, %v2885, 0.0
      %2896 = vrot.lane.b32.xlu0 %v2797, 127
      %v2897 = vpop.permute.xlu0 %2896
      %2898 = vrot.lane.b32.xlu0 %v2799, 127
      %v2899 = vpop.permute.xlu0 %2898
      %2900 = vrot.lane.b32.xlu0 %v1355, 127
      %v2901 = vpop.permute.xlu0 %2900
      %2902 = vrot.lane.b32.xlu0 %v1356, 127
      %v2903 = vpop.permute.xlu0 %2902
      %v2904 = vsel %vm796, %v2897, %v2899
      %v2905 = vsel %vm796, %v2901, %v2903
      %v2912 = vsel %vm796, %v2899, %v2897
      %v2913 = vsel %vm796, %v2903, %v2901
      %v2914 = vsel %vm810, %v2904, 0.0
      %v2915 = vsel %vm811, %v2912, 0.0
      %v2916 = vsel %vm810, %v2905, 0.0
      %v2917 = vsel %vm811, %v2913, 0.0
      %2918 = vrot.lane.b32.xlu0 %v2797, 113
      %v2919 = vpop.permute.xlu0 %2918
      %2920 = vrot.lane.b32.xlu0 %v2799, 113
      %v2921 = vpop.permute.xlu0 %2920
      %2922 = vrot.lane.b32.xlu0 %v1355, 113
      %v2923 = vpop.permute.xlu0 %2922
      %2924 = vrot.lane.b32.xlu0 %v1356, 113
      %v2925 = vpop.permute.xlu0 %2924
      %v2926 = vsel %vm826, %v2919, %v2921
      %v2927 = vsel %vm826, %v2923, %v2925
      %v2934 = vsel %vm826, %v2921, %v2919
      %v2935 = vsel %vm826, %v2925, %v2923
      %v2936 = vsel %vm848, %v2926, 0.0
      %v2937 = vsel %vm849, %v2934, 0.0
      %v2938 = vsel %vm848, %v2927, 0.0
      %v2939 = vsel %vm849, %v2935, 0.0
      %2940 = vrot.lane.b32.xlu0 %v2797, 112
      %v2941 = vpop.permute.xlu0 %2940
      %2942 = vrot.lane.b32.xlu0 %v2799, 112
      %v2943 = vpop.permute.xlu0 %2942
      %2944 = vrot.lane.b32.xlu0 %v1355, 112
      %v2945 = vpop.permute.xlu0 %2944
      %2946 = vrot.lane.b32.xlu0 %v1356, 112
      %v2947 = vpop.permute.xlu0 %2946
      %v2948 = vsel %vm864, %v2941, %v2943
      %v2949 = vsel %vm864, %v2945, %v2947
      %v2956 = vsel %vm864, %v2943, %v2941
      %v2957 = vsel %vm864, %v2947, %v2945
      %v2958 = vsel %vm878, %v2948, 0.0
      %v2959 = vsel %vm879, %v2956, 0.0
      %v2960 = vsel %vm878, %v2949, 0.0
      %v2961 = vsel %vm879, %v2957, 0.0
      %2962 = vrot.lane.b32.xlu0 %v2797, 111
      %v2963 = vpop.permute.xlu0 %2962
      %2964 = vrot.lane.b32.xlu0 %v2799, 111
      %v2965 = vpop.permute.xlu0 %2964
      %2966 = vrot.lane.b32.xlu0 %v1355, 111
      %v2967 = vpop.permute.xlu0 %2966
      %2968 = vrot.lane.b32.xlu0 %v1356, 111
      %v2969 = vpop.permute.xlu0 %2968
      %v2970 = vsel %vm894, %v2963, %v2965
      %v2971 = vsel %vm894, %v2967, %v2969
      %v2978 = vsel %vm894, %v2965, %v2963
      %v2979 = vsel %vm894, %v2969, %v2967
      %v2980 = vsel %vm912, %v2970, 0.0
      %v2981 = vsel %vm913, %v2978, 0.0
      %v2982 = vsel %vm912, %v2971, 0.0
      %v2983 = vsel %vm913, %v2979, 0.0
      %2985 = vset.pattern.permute.xlu0 0
      %2986 = vperm.xlu0 %2985, %v2803
      %v2987 = vpop.permute.xlu0 %2986
      %v2990 = vsel %vm699, %v2802, 0
      %2992 = vmatprep.subr.mxu0 %v2827
      %2993 = vmatpush1.msra.mxu0 %v2826
      %2994 = vmatprep.subr.mxu0 %v2829
      %2995 = vmatpush1.msra.mxu0 %v2828
      %2996 = vmatprep.subr.mxu0 %v2849
      %2997 = vmatpush1.msra.mxu0 %v2848
      %2998 = vmatprep.subr.mxu0 %v2851
      %2999 = vmatpush1.msra.mxu0 %v2850
      %3000 = vmatprep.subr.mxu0 %v2871
      %3001 = vmatpush1.msra.mxu0 %v2870
      %3002 = vmatprep.subr.mxu0 %v2873
      %3003 = vmatpush1.msra.mxu0 %v2872
      %3004 = vmatprep.subr.mxu0 %v2893
      %3005 = vmatpush1.msra.mxu0 %v2892
      %3006 = vmatprep.subr.mxu0 %v2895
      %3007 = vmatpush1.msra.mxu0 %v2894
      %3008 = vmatprep.subr.mxu0 %v2799
      %3009 = vmatpush1.msra.mxu0 %v2797
      %3010 = vmatprep.subr.mxu0 %v1356
      %3011 = vmatpush1.msra.mxu0 %v1355
      %3012 = vmatprep.subr.mxu0 %v2915
      %3013 = vmatpush1.msra.mxu0 %v2914
      %3014 = vmatprep.subr.mxu0 %v2917
      %3015 = vmatpush1.msra.mxu0 %v2916
      %3016 = vmatprep.subr.mxu0 %v2937
      %3017 = vmatpush1.msra.mxu0 %v2936
      %3018 = vmatprep.subr.mxu0 %v2939
      %3019 = vmatpush1.msra.mxu0 %v2938
      %3020 = vmatprep.subr.mxu0 %v2959
      %3021 = vmatpush1.msra.mxu0 %v2958
      %3022 = vmatprep.subr.mxu0 %v2961
      %3023 = vmatpush1.msra.mxu0 %v2960
      %3024 = vmatprep.subr.mxu0 %v2981
      %3025 = vmatpush1.msra.mxu0 %v2980
      %3026 = vmatprep.subr.mxu0 %v2983
      %3027 = vmatpush1.msra.mxu0 %v2982
      %3028 = vmatprep.subr.mxu0 0.0
      %3029 = vmatpush1.msra.mxu0 0.0
      %3030 = vmatprep.subr.mxu0 0.0
      %3031 = vmatpush1.msra.mxu0 0.0
      %3032 = vmatprep.subr.mxu0 0.0
      %3033 = vmatpush1.msra.mxu0 0.0
      %3034 = vmatprep.subr.mxu0 0.0
      %3035 = vmatpush1.msra.mxu0 0.0
      %3036 = vmatprep.subr.mxu0 0.0
      %3037 = vmatpush1.msra.mxu0 0.0
      %3038 = vmatprep.subr.mxu0 0.0
      %3039 = vmatpush1.msra.mxu0 0.0
      %3040 = vmatprep.subr.mxu0 0.0
      %3041 = vmatpush1.msra.mxu0 0.0
      %3042 = vmatprep.subr.mxu0 0.0
      %3043 = vmatpush1.msra.mxu0 0.0
      %3044 = vmatprep.subr.mxu0 0.0
      %3045 = vmatpush1.msra.mxu0 0.0
      %3046 = vmatprep.subr.mxu0 0.0
      %3047 = vmatpush1.msra.mxu0 0.0
      %3048 = vmatprep.subr.mxu0 0.0
      %3049 = vmatpush1.msra.mxu0 0.0
      %3050 = vmatprep.subr.mxu0 0.0
      %3051 = vmatpush1.msra.mxu0 0.0
      %3052 = vmatprep.subr.mxu0 0.0
      %3053 = vmatpush1.msra.mxu0 0.0
      %3054 = vmatprep.subr.mxu0 0.0
      %3055 = vmatpush1.msra.mxu0 0.0
      %3056 = vmatprep.mubr.f32.mxu0 %v2990
      %3057 = vmatmul.mubr.f32.gmra.mrb[0].mxu0 %v2801
      %v3058 = vpop.f32.mrb[0].mxu0
      %v3059 = vadd.f32 %v2987, %v3058
      %v3060 = vpop.f32.mrb[0].mxu0
      %v3061 = vadd.f32 %v2987, %v3060
      %3062 = vdwg.mxu0
      %vm3063 = vcmp.ge.f32.partialorder %v3059, 0.0
      %vm3064 = vcmp.ge.f32.partialorder %v3061, 0.0
      %v3065 = vmul.f32 %v3059, 0.2
      %v3066 = vmul.f32 %v3061, 0.2
      %v3067 = vsel %vm3063, %v3059, %v3065
      %v3068 = vsel %vm3064, %v3061, %v3066
      %v3071 = vcombine.low %v3067, %v3068
      %3073 = vst [vmem:[%s610] sm:$0xff] %v3071
      %p3074 = scmp.lt.s32.totalorder %s30, 1
      %s3075 = scalar_select %p3074, %s30, 1
      %s3076 = smul.addr %s3075, 2
      %s3077 = smul.addr %s3076, 4
      %s3078 = scalar_lea.vmem %s16, %s3077
      %p3079 = scmp.lt.s32.totalorder %s30, 1
      %s3080 = scalar_select %p3079, %s30, 1
      %s3081 = smul.addr %s3080, 2
      %s3082 = smul.addr %s3081, 4
      %s3083 = scalar_lea.vmem %s17, %s3082
      %p3084 = scmp.lt.s32.totalorder %s30, 1
      %s3085 = scalar_select %p3084, %s30, 1
      %s3086 = smul.addr %s3085, 2
      %s3087 = smul.addr %s3086, 4
      %s3088 = scalar_lea.vmem %s18, %s3087
      // Predicated region
      $region85: #{unet_joint_level0_forward.1} parent=83 // pred_check
        %p3089 = pneg %p394
      $region86: #{unet_joint_level0_forward.1} parent=83 // pred_check_branch
        %3091 = sbr.rel (%p3089) target = $region88
      $region87: #{unet_joint_level0_forward.1} parent=83 // pred_region
        _
      $region88: #{unet_joint_level0_forward.1} parent=83 // pred_fallthru
        _
      // Predicated region
      $region89: #{unet_joint_level0_forward.1} parent=83 // pred_check
        %p3092 = pneg %p420
      $region90: #{unet_joint_level0_forward.1} parent=83 // pred_check_branch
        %3094 = sbr.rel (%p3092) target = $region92
      $region91: #{unet_joint_level0_forward.1} parent=83 // pred_region
        _
      $region92: #{unet_joint_level0_forward.1} parent=83 // pred_fallthru
        _
      // Predicated region
      $region93: #{unet_joint_level0_forward.1} parent=83 // pred_check
        %p3095 = pneg %p446
      $region94: #{unet_joint_level0_forward.1} parent=83 // pred_check_branch
        %3097 = sbr.rel (%p3095) target = $region96
      $region95: #{unet_joint_level0_forward.1} parent=83 // pred_region
        _
      $region96: #{unet_joint_level0_forward.1} parent=83 // pred_fallthru
        _
    $region84: #{unet_joint_level0_forward.1} parent=5 // pred_fallthru
      _
    %p3098 = scmp.le.s32.totalorder 2, %s25
    // Predicated region
    $region97: #{unet_joint_level0_forward.1} parent=5 // pred_check
      %p3099 = pneg %p3098
    $region98: #{unet_joint_level0_forward.1} parent=5 // pred_check_branch
      %3101 = sbr.rel (%p3099) target = $region100
    $region99: #{unet_joint_level0_forward.1} parent=5 // pred_region
      %s3102 = ssub.s32 %s25, 2
      // Predicated region
      $region101: #{unet_joint_level0_forward.1} parent=99 // pred_check
        %p3103 = pneg %p400
      $region102: #{unet_joint_level0_forward.1} parent=99 // pred_check_branch
        %3105 = sbr.rel (%p3103) target = $region104
      $region103: #{unet_joint_level0_forward.1} parent=99 // pred_region
        %p3106 = scmp.lt.s32.totalorder %s31, 1
        %s3107 = scalar_select %p3106, %s31, 1
        %s3108 = smul.addr %s3107, 2
        %s3109 = smul.addr %s3108, 4
        %s3110 = scalar_lea.vmem %s16, %s3109
      $region104: #{unet_joint_level0_forward.1} parent=99 // pred_fallthru
        _
      // Predicated region
      $region105: #{unet_joint_level0_forward.1} parent=99 // pred_check
        %p3111 = pneg %p426
      $region106: #{unet_joint_level0_forward.1} parent=99 // pred_check_branch
        %3113 = sbr.rel (%p3111) target = $region108
      $region107: #{unet_joint_level0_forward.1} parent=99 // pred_region
        %p3114 = scmp.lt.s32.totalorder %s31, 1
        %s3115 = scalar_select %p3114, %s31, 1
        %s3116 = smul.addr %s3115, 2
        %s3117 = smul.addr %s3116, 4
        %s3118 = scalar_lea.vmem %s17, %s3117
      $region108: #{unet_joint_level0_forward.1} parent=99 // pred_fallthru
        _
      // Predicated region
      $region109: #{unet_joint_level0_forward.1} parent=99 // pred_check
        %p3119 = pneg %p452
      $region110: #{unet_joint_level0_forward.1} parent=99 // pred_check_branch
        %3121 = sbr.rel (%p3119) target = $region112
      $region111: #{unet_joint_level0_forward.1} parent=99 // pred_region
        %p3122 = scmp.lt.s32.totalorder %s31, 1
        %s3123 = scalar_select %p3122, %s31, 1
        %s3124 = smul.addr %s3123, 2
        %s3125 = smul.addr %s3124, 4
        %s3126 = scalar_lea.vmem %s18, %s3125
      $region112: #{unet_joint_level0_forward.1} parent=99 // pred_fallthru
        _
    $region100: #{unet_joint_level0_forward.1} parent=5 // pred_fallthru
      _
  $region6: #{unet_joint_level0_forward.1} parent=0 // loop_footer
    %s29 = sadd.s32 1, %s25
  $region7: #{unet_joint_level0_forward.1} parent=0 // loop_footer_branch
    %24 = sbr.rel target = $region3
  $region8: #{unet_joint_level0_forward.1} parent=0 // loop_exit
    _

</llo_original>
